<compile_context>
chip_gen: v7x
topology: tpu7x:2x2x1
jax: 0.10.0
libtpu: 0.0.40
codegen_flags: <defaults>
</compile_context>

<pallas_src>
import math

import jax
import jax.numpy as jnp
from jax.experimental import pallas as pl
from jax.experimental.pallas import tpu as pltpu

# ----- module constants (small-shape version, same structure as the PyTorch module) ----
C_FILTER = 8
INPUT_CHANNELS = 4
INPUT_SIZE = 16
KERNEL_SIZE = 3
NUM_CONV = 4
STRIDE = 1
Z_FILTER = 8

AFTER_CONV = INPUT_SIZE + NUM_CONV * (1 - KERNEL_SIZE)        # 8
COMPACT = AFTER_CONV * AFTER_CONV                             # 64 valid spatial positions
C_LENGTH = C_FILTER * COMPACT                                 # 512
Z_LENGTH = Z_FILTER * COMPACT                                 # 512
BN_EPS = 1e-5
_HALF_LOG_2PI = 0.5 * math.log(2.0 * math.pi)

SPATIAL = INPUT_SIZE * INPUT_SIZE                             # 256 padded spatial cols/img
PAD = 64                                                      # >= max im2col shift (34)
SHIFTS = [ky * INPUT_SIZE + kx for ky in range(KERNEL_SIZE) for kx in range(KERNEL_SIZE)]
CIN_PAD = 8                                                   # layer-1 Cin padded to 8
HW_SHIFT = INPUT_SIZE.bit_length() - 1
NUM_FC_W = 5                                                  # wz, wc, wf, wmu, ws
assert (1 << HW_SHIFT) == INPUT_SIZE
assert PAD >= SHIFTS[-1]


def _full_spec(shape):
    """Full-array BlockSpec for grid=(1,)."""
    n = len(shape)
    return pl.BlockSpec(shape, lambda i, _n=n: (0,) * _n)


# ----------------------------------- fused kernel --------------------------------------
def _qz_fused_kernel(*refs):
    n_small = 4 + 4 * NUM_CONV + 6
    x_ref, c_ref, eps_ref, sel_ref = refs[0:4]
    conv_refs = refs[4:4 + 4 * NUM_CONV]
    bt_ref, g1_ref, be1_ref, bf_ref, bmu_ref, bs_ref = refs[4 + 4 * NUM_CONV:n_small]
    w_hbm = refs[n_small:n_small + NUM_FC_W]                 # pl.ANY (HBM) FC weights
    z_ref = refs[n_small + NUM_FC_W]
    score_ref = refs[n_small + NUM_FC_W + 1]
    wbuf = refs[n_small + NUM_FC_W + 2]                      # VMEM (5, 512, 512) bf16
    wsem = refs[n_small + NUM_FC_W + 3]                      # DMA sems (5,)

    bsz = c_ref.shape[0]
    L = bsz * SPATIAL                                        # batch interleaved on lanes

    # ---- kick off FC-head weight DMAs so they overlap the whole conv chain ------------
    copies = []
    for i in range(NUM_FC_W):
        cp = pltpu.make_async_copy(w_hbm[i], wbuf.at[i], wsem.at[i])
        cp.start()
        copies.append(cp)

    # ---- coordinate grids of the padded per-batch 16x16 spatial layout ----------------
    col = jax.lax.broadcasted_iota(jnp.int32, (1, L), 1)
    xg = jnp.bitwise_and(col, INPUT_SIZE - 1)
    yg = jnp.bitwise_and(jnp.right_shift(col, HW_SHIFT), INPUT_SIZE - 1)

    # ---- Conv2d(3x3, stride 1, valid) + training-mode BatchNorm2d chain ----------------
    # Layout: rows = channel, lanes = (batch, y*16 + x).  One matmul per layer; im2col is
    # 9 uniform lane shifts; invalid border positions are masked out of the BN stats and
    # zeroed (valid outputs never read across a batch's 256-lane block).
    a = x_ref[...]                                           # (CIN_PAD, L) f32
    for li in range(NUM_CONV):
        w_r, b_r, g_r, be_r = conv_refs[4 * li:4 * li + 4]
        ho = INPUT_SIZE - (li + 1) * (KERNEL_SIZE - 1)       # valid output extent
        ap = jnp.concatenate(
            [a.astype(jnp.bfloat16), jnp.zeros((a.shape[0], PAD), jnp.bfloat16)], axis=1)
        pt = jnp.concatenate([ap[:, sh:sh + L] for sh in SHIFTS], axis=0)  # (9*cin, L)
        y = jnp.dot(w_r[...], pt, preferred_element_type=jnp.float32) + b_r[...]
        msk = ((xg < ho) & (yg < ho)).astype(jnp.float32)    # (1, L), same for all batches
        inv_cnt = 1.0 / float(bsz * ho * ho)
        mean = jnp.sum(y * msk, axis=1, keepdims=True) * inv_cnt          # (cout, 1)
        d = (y - mean) * msk
        var = jnp.sum(d * d, axis=1, keepdims=True) * inv_cnt
        a = (g_r[...] * (y - mean) * jax.lax.rsqrt(var + BN_EPS) + be_r[...]) * msk

    # ---- compact the valid 8x8 window and lay out (bsz, Z_FILTER*64) lane-dense -------
    cf = a.shape[0]
    a_bf = a.astype(jnp.bfloat16)
    sel = sel_ref[...]                                       # (256, 64) 0/1 selection
    feat_rows = []
    for bi in range(bsz):
        acomp = jnp.dot(a_bf[:, bi * SPATIAL:(bi + 1) * SPATIAL], sel,
                        preferred_element_type=jnp.float32)  # (cf, 64)
        feat_rows.append(jnp.concatenate(
            [acomp[ch:ch + 1, :] for ch in range(cf)], axis=1))           # (1, cf*64)
    feat = jnp.concatenate(feat_rows, axis=0).astype(jnp.bfloat16)        # (bsz, Z_LENGTH)

    # ---- FC head: to_zlen -> BatchNorm1d -> fc (+ residual) -> mu/sigma -> rsample ----
    copies[0].wait()
    copies[1].wait()
    h = (jnp.dot(feat, wbuf[0], preferred_element_type=jnp.float32)
         + jnp.dot(c_ref[...].astype(jnp.bfloat16), wbuf[1],
                   preferred_element_type=jnp.float32)
         + bt_ref[...])                                      # (bsz, Z_LENGTH) f32
    mean1 = jnp.mean(h, axis=0, keepdims=True)               # training-mode BN1d
    var1 = jnp.mean((h - mean1) ** 2, axis=0, keepdims=True)
    hn = g1_ref[...] * (h - mean1) * jax.lax.rsqrt(var1 + BN_EPS) + be1_ref[...]
    copies[2].wait()
    fc_out = jnp.dot(hn.astype(jnp.bfloat16), wbuf[2],
                     preferred_element_type=jnp.float32) + bf_ref[...]
    chw = fc_out + h                                         # residual
    chw_bf = chw.astype(jnp.bfloat16)
    copies[3].wait()
    copies[4].wait()
    mu = jnp.dot(chw_bf, wbuf[3], preferred_element_type=jnp.float32) + bmu_ref[...]
    log_sigma = jnp.dot(chw_bf, wbuf[4], preferred_element_type=jnp.float32) + bs_ref[...]
    sigma = jnp.exp(log_sigma)
    eps = eps_ref[...]
    z = mu + sigma * eps                                     # Normal.rsample
    z_ref[...] = z
    # Normal(mu, sigma).log_prob(z).sum(dim=1); (z - mu)/sigma == eps by construction.
    # TODO(synk): forward(z=...) path (externally supplied z) not wired; it would need
    # (z - mu)/sigma instead of eps here.
    logp = -0.5 * (eps * eps) - log_sigma - _HALF_LOG_2PI
    score_ref[...] = jnp.sum(logp, axis=1, keepdims=True)


# ------------------------------------- forward -----------------------------------------
def qz_forward(params, inputs, c, eps):
    """inputs: (B, INPUT_CHANNELS, INPUT_SIZE, INPUT_SIZE) NCHW; c: (B, C_LENGTH);
    eps: (B, Z_LENGTH) standard-normal noise for the reparameterized sample."""
    b = inputs.shape[0]
    x = inputs.reshape(b, INPUT_CHANNELS, SPATIAL).astype(jnp.float32)
    x = jnp.transpose(x, (1, 0, 2)).reshape(INPUT_CHANNELS, b * SPATIAL)
    x = jnp.pad(x, ((0, CIN_PAD - INPUT_CHANNELS), (0, 0)))  # (CIN_PAD, b*256)

    small_args = [x, c.astype(jnp.float32), eps.astype(jnp.float32), params["sel"]]
    for (w, bb, gamma, beta) in params["conv"]:
        small_args += [w, bb, gamma, beta]
    small_args += [params["bt"], params["g1"], params["be1"],
                   params["bf"], params["bmu"], params["bs"]]
    big_args = [params["wz"], params["wc"], params["wf"], params["wmu"], params["ws"]]

    in_specs = ([_full_spec(a.shape) for a in small_args]
                + [pl.BlockSpec(memory_space=pl.ANY)] * NUM_FC_W)

    flops = (2 * NUM_CONV * Z_FILTER * (b * SPATIAL) * (9 * CIN_PAD)     # conv chain
             + 2 * b * Z_FILTER * SPATIAL * COMPACT                      # compaction
             + 2 * b * Z_LENGTH * Z_LENGTH * NUM_FC_W)                   # FC head
    bytes_accessed = (sum(int(a.size) * a.dtype.itemsize for a in small_args + big_args)
                      + b * Z_LENGTH * 4 + b * 4)
    cost = pl.CostEstimate(flops=flops, transcendentals=2 * b * Z_LENGTH,
                           bytes_accessed=bytes_accessed)

    z, score = pl.pallas_call(
        _qz_fused_kernel,
        grid=(1,),
        in_specs=in_specs,
        out_specs=(_full_spec((b, Z_LENGTH)), _full_spec((b, 1))),
        out_shape=(jax.ShapeDtypeStruct((b, Z_LENGTH), jnp.float32),
                   jax.ShapeDtypeStruct((b, 1), jnp.float32)),
        scratch_shapes=[pltpu.VMEM((NUM_FC_W, Z_LENGTH, Z_LENGTH), jnp.bfloat16),
                        pltpu.SemaphoreType.DMA((NUM_FC_W,))],
        compiler_params=pltpu.CompilerParams(
            dimension_semantics=("arbitrary",),
            vmem_limit_bytes=32 * 1024 * 1024),
        cost_estimate=cost,
    )(*small_args, *big_args)
    return z, score[:, 0]


# ----------------------------------- parameter init ------------------------------------
def init_params(key):
    keys = iter(jax.random.split(key, 32))
    params = {}

    # Conv weights in kernel layout (Cout, (ky, kx, ci_pad)) with ci fastest, stored bf16.
    # torch port: (Cout, Cin, kh, kw) -> permute (Cout, kh, kw, Cin) -> zero-pad Cin
    # -> reshape (Cout, kh*kw*Cin_pad).
    conv = []
    cin_true = INPUT_CHANNELS
    for li in range(NUM_CONV):
        cin_pad = CIN_PAD if li == 0 else Z_FILTER
        fan_in = KERNEL_SIZE * KERNEL_SIZE * cin_true
        w_true = jax.random.normal(
            next(keys), (Z_FILTER, KERNEL_SIZE, KERNEL_SIZE, cin_true),
            jnp.float32) / math.sqrt(fan_in)
        w = jnp.zeros((Z_FILTER, KERNEL_SIZE, KERNEL_SIZE, cin_pad), jnp.float32)
        w = w.at[:, :, :, :cin_true].set(w_true)
        w = w.reshape(Z_FILTER, KERNEL_SIZE * KERNEL_SIZE * cin_pad).astype(jnp.bfloat16)
        bias = jax.random.normal(next(keys), (Z_FILTER, 1), jnp.float32) * 0.01
        gamma = jnp.ones((Z_FILTER, 1), jnp.float32)   # BN defaults: weight=1, bias=0
        beta = jnp.zeros((Z_FILTER, 1), jnp.float32)
        conv.append((w, bias, gamma, beta))
        cin_true = Z_FILTER
    params["conv"] = conv

    # Fixed 0/1 spatial compaction: padded 16x16 column (y*16+x) -> compact column (y*8+x).
    yy, xx = jnp.meshgrid(jnp.arange(AFTER_CONV), jnp.arange(AFTER_CONV), indexing="ij")
    rows = (yy * INPUT_SIZE + xx).reshape(-1)
    cols = (yy * AFTER_CONV + xx).reshape(-1)
    sel = jnp.zeros((SPATIAL, COMPACT), jnp.float32).at[rows, cols].set(1.0)
    params["sel"] = sel.astype(jnp.bfloat16)

    din = Z_LENGTH + C_LENGTH
    # to_zlen split (dense, no spatial zero-padding): wz = weight[:, :Z_LENGTH].T with
    # rows ordered ch*64 + y*8 + x (NCHW flatten of the conved features);
    # wc = weight[:, Z_LENGTH:].T; bt = bias.
    params["wz"] = (jax.random.normal(next(keys), (Z_LENGTH, Z_LENGTH), jnp.float32)
                    / math.sqrt(din)).astype(jnp.bfloat16)
    params["wc"] = (jax.random.normal(next(keys), (C_LENGTH, Z_LENGTH), jnp.float32)
                    / math.sqrt(din)).astype(jnp.bfloat16)
    params["bt"] = jax.random.normal(next(keys), (1, Z_LENGTH), jnp.float32) * 0.01
    params["g1"] = jnp.ones((1, Z_LENGTH), jnp.float32)
    params["be1"] = jnp.zeros((1, Z_LENGTH), jnp.float32)

    def linear(k, d_in, d_out):
        k1, k2 = jax.random.split(k)
        w = (jax.random.normal(k1, (d_in, d_out), jnp.float32) / math.sqrt(d_in))
        bias = jax.random.normal(k2, (1, d_out), jnp.float32) * 0.01
        return w.astype(jnp.bfloat16), bias

    params["wf"], params["bf"] = linear(next(keys), Z_LENGTH, Z_LENGTH)
    params["wmu"], params["bmu"] = linear(next(keys), Z_LENGTH, Z_LENGTH)
    params["ws"], params["bs"] = linear(next(keys), Z_LENGTH, Z_LENGTH)
    return params


if __name__ == "__main__":
    key = jax.random.PRNGKey(0)
    k_param, k_in, k_c, k_eps = jax.random.split(key, 4)
    params = init_params(k_param)

    B = 2
    inputs = jax.random.normal(k_in, (B, INPUT_CHANNELS, INPUT_SIZE, INPUT_SIZE), jnp.float32)
    c = jax.random.normal(k_c, (B, C_LENGTH), jnp.float32)
    eps = jax.random.normal(k_eps, (B, Z_LENGTH), jnp.float32)

    z, score = jax.jit(qz_forward)(params, inputs, c, eps)
    jax.block_until_ready((z, score))
    assert z.shape == (B, Z_LENGTH) and score.shape == (B,)
    assert bool(jnp.all(jnp.isfinite(z))) and bool(jnp.all(jnp.isfinite(score)))
    print("KERNEL_OK")
</pallas_src>

<mosaic_0001>
module attributes {stable_mosaic.version = 11 : i64} {
  func.func @_qz_fused_kernel(%arg0: i32, %arg1: memref<8x512xf32, #tpu.memory_space<vmem>>, %arg2: memref<2x512xf32, #tpu.memory_space<vmem>>, %arg3: memref<2x512xf32, #tpu.memory_space<vmem>>, %arg4: memref<256x64xbf16, #tpu.memory_space<vmem>>, %arg5: memref<8x72xbf16, #tpu.memory_space<vmem>>, %arg6: memref<8x1xf32, #tpu.memory_space<vmem>>, %arg7: memref<8x1xf32, #tpu.memory_space<vmem>>, %arg8: memref<8x1xf32, #tpu.memory_space<vmem>>, %arg9: memref<8x72xbf16, #tpu.memory_space<vmem>>, %arg10: memref<8x1xf32, #tpu.memory_space<vmem>>, %arg11: memref<8x1xf32, #tpu.memory_space<vmem>>, %arg12: memref<8x1xf32, #tpu.memory_space<vmem>>, %arg13: memref<8x72xbf16, #tpu.memory_space<vmem>>, %arg14: memref<8x1xf32, #tpu.memory_space<vmem>>, %arg15: memref<8x1xf32, #tpu.memory_space<vmem>>, %arg16: memref<8x1xf32, #tpu.memory_space<vmem>>, %arg17: memref<8x72xbf16, #tpu.memory_space<vmem>>, %arg18: memref<8x1xf32, #tpu.memory_space<vmem>>, %arg19: memref<8x1xf32, #tpu.memory_space<vmem>>, %arg20: memref<8x1xf32, #tpu.memory_space<vmem>>, %arg21: memref<1x512xf32, #tpu.memory_space<vmem>>, %arg22: memref<1x512xf32, #tpu.memory_space<vmem>>, %arg23: memref<1x512xf32, #tpu.memory_space<vmem>>, %arg24: memref<1x512xf32, #tpu.memory_space<vmem>>, %arg25: memref<1x512xf32, #tpu.memory_space<vmem>>, %arg26: memref<1x512xf32, #tpu.memory_space<vmem>>, %arg27: memref<512x512xbf16, #tpu.memory_space<any>>, %arg28: memref<512x512xbf16, #tpu.memory_space<any>>, %arg29: memref<512x512xbf16, #tpu.memory_space<any>>, %arg30: memref<512x512xbf16, #tpu.memory_space<any>>, %arg31: memref<512x512xbf16, #tpu.memory_space<any>>, %arg32: memref<2x512xf32, #tpu.memory_space<vmem>>, %arg33: memref<2x1xf32, #tpu.memory_space<vmem>>, %arg34: memref<5x512x512xbf16, #tpu.memory_space<vmem>>, %arg35: memref<5x!tpu.dma_semaphore, #tpu.memory_space<semaphore_mem>>) attributes {dimension_semantics = [#tpu.dimension_semantics<arbitrary>], iteration_bounds = array<i64: 1>, scalar_prefetch = 0 : i64, scratch_operands = 2 : i64, tpu.core_type = #tpu.core_type<tc>, window_params = [{pipeline_mode = #tpu.pipeline_mode<synchronous>, transform_indices = @transform_0, window_bounds = array<i64: 8, 512>}, {pipeline_mode = #tpu.pipeline_mode<synchronous>, transform_indices = @transform_1, window_bounds = array<i64: 2, 512>}, {pipeline_mode = #tpu.pipeline_mode<synchronous>, transform_indices = @transform_2, window_bounds = array<i64: 2, 512>}, {pipeline_mode = #tpu.pipeline_mode<synchronous>, transform_indices = @transform_3, window_bounds = array<i64: 256, 64>}, {pipeline_mode = #tpu.pipeline_mode<synchronous>, transform_indices = @transform_4, window_bounds = array<i64: 8, 72>}, {pipeline_mode = #tpu.pipeline_mode<synchronous>, transform_indices = @transform_5, window_bounds = array<i64: 8, 1>}, {pipeline_mode = #tpu.pipeline_mode<synchronous>, transform_indices = @transform_6, window_bounds = array<i64: 8, 1>}, {pipeline_mode = #tpu.pipeline_mode<synchronous>, transform_indices = @transform_7, window_bounds = array<i64: 8, 1>}, {pipeline_mode = #tpu.pipeline_mode<synchronous>, transform_indices = @transform_8, window_bounds = array<i64: 8, 72>}, {pipeline_mode = #tpu.pipeline_mode<synchronous>, transform_indices = @transform_9, window_bounds = array<i64: 8, 1>}, {pipeline_mode = #tpu.pipeline_mode<synchronous>, transform_indices = @transform_10, window_bounds = array<i64: 8, 1>}, {pipeline_mode = #tpu.pipeline_mode<synchronous>, transform_indices = @transform_11, window_bounds = array<i64: 8, 1>}, {pipeline_mode = #tpu.pipeline_mode<synchronous>, transform_indices = @transform_12, window_bounds = array<i64: 8, 72>}, {pipeline_mode = #tpu.pipeline_mode<synchronous>, transform_indices = @transform_13, window_bounds = array<i64: 8, 1>}, {pipeline_mode = #tpu.pipeline_mode<synchronous>, transform_indices = @transform_14, window_bounds = array<i64: 8, 1>}, {pipeline_mode = #tpu.pipeline_mode<synchronous>, transform_indices = @transform_15, window_bounds = array<i64: 8, 1>}, {pipeline_mode = #tpu.pipeline_mode<synchronous>, transform_indices = @transform_16, window_bounds = array<i64: 8, 72>}, {pipeline_mode = #tpu.pipeline_mode<synchronous>, transform_indices = @transform_17, window_bounds = array<i64: 8, 1>}, {pipeline_mode = #tpu.pipeline_mode<synchronous>, transform_indices = @transform_18, window_bounds = array<i64: 8, 1>}, {pipeline_mode = #tpu.pipeline_mode<synchronous>, transform_indices = @transform_19, window_bounds = array<i64: 8, 1>}, {pipeline_mode = #tpu.pipeline_mode<synchronous>, transform_indices = @transform_20, window_bounds = array<i64: 1, 512>}, {pipeline_mode = #tpu.pipeline_mode<synchronous>, transform_indices = @transform_21, window_bounds = array<i64: 1, 512>}, {pipeline_mode = #tpu.pipeline_mode<synchronous>, transform_indices = @transform_22, window_bounds = array<i64: 1, 512>}, {pipeline_mode = #tpu.pipeline_mode<synchronous>, transform_indices = @transform_23, window_bounds = array<i64: 1, 512>}, {pipeline_mode = #tpu.pipeline_mode<synchronous>, transform_indices = @transform_24, window_bounds = array<i64: 1, 512>}, {pipeline_mode = #tpu.pipeline_mode<synchronous>, transform_indices = @transform_25, window_bounds = array<i64: 1, 512>}, {}, {}, {}, {}, {}, {pipeline_mode = #tpu.pipeline_mode<synchronous>, transform_indices = @transform_31, window_bounds = array<i64: 2, 512>}, {pipeline_mode = #tpu.pipeline_mode<synchronous>, transform_indices = @transform_32, window_bounds = array<i64: 2, 1>}]} {
    %c0_i32 = arith.constant 0 : i32
    %c0_i32_0 = arith.constant 0 : i32
    %c0_i32_1 = arith.constant 0 : i32
    %c0_i32_2 = arith.constant 0 : i32
    %0 = tpu.memref_slice %arg34[%c0_i32, %c0_i32_1, %c0_i32_2] : memref<5x512x512xbf16, #tpu.memory_space<vmem>> -> memref<1x512x512xbf16, #tpu.memory_space<vmem>>
    %1 = tpu.memref_squeeze %0 : memref<1x512x512xbf16, #tpu.memory_space<vmem>> -> memref<512x512xbf16, #tpu.memory_space<vmem>>
    %2 = tpu.memref_slice %arg35[%c0_i32_0] : memref<5x!tpu.dma_semaphore, #tpu.memory_space<semaphore_mem>> -> memref<1x!tpu.dma_semaphore, #tpu.memory_space<semaphore_mem>>
    %3 = tpu.memref_squeeze %2 : memref<1x!tpu.dma_semaphore, #tpu.memory_space<semaphore_mem>> -> memref<!tpu.dma_semaphore, #tpu.memory_space<semaphore_mem>>
    tpu.enqueue_dma source(%arg27 : memref<512x512xbf16, #tpu.memory_space<any>>) target(%1 : memref<512x512xbf16, #tpu.memory_space<vmem>>) target_semaphore(%3 : memref<!tpu.dma_semaphore, #tpu.memory_space<semaphore_mem>>)
    %c1_i32 = arith.constant 1 : i32
    %c1_i32_3 = arith.constant 1 : i32
    %c0_i32_4 = arith.constant 0 : i32
    %c0_i32_5 = arith.constant 0 : i32
    %4 = tpu.memref_slice %arg34[%c1_i32, %c0_i32_4, %c0_i32_5] : memref<5x512x512xbf16, #tpu.memory_space<vmem>> -> memref<1x512x512xbf16, #tpu.memory_space<vmem>>
    %5 = tpu.memref_squeeze %4 : memref<1x512x512xbf16, #tpu.memory_space<vmem>> -> memref<512x512xbf16, #tpu.memory_space<vmem>>
    %6 = tpu.memref_slice %arg35[%c1_i32_3] : memref<5x!tpu.dma_semaphore, #tpu.memory_space<semaphore_mem>> -> memref<1x!tpu.dma_semaphore, #tpu.memory_space<semaphore_mem>>
    %7 = tpu.memref_squeeze %6 : memref<1x!tpu.dma_semaphore, #tpu.memory_space<semaphore_mem>> -> memref<!tpu.dma_semaphore, #tpu.memory_space<semaphore_mem>>
    tpu.enqueue_dma source(%arg28 : memref<512x512xbf16, #tpu.memory_space<any>>) target(%5 : memref<512x512xbf16, #tpu.memory_space<vmem>>) target_semaphore(%7 : memref<!tpu.dma_semaphore, #tpu.memory_space<semaphore_mem>>)
    %c2_i32 = arith.constant 2 : i32
    %c2_i32_6 = arith.constant 2 : i32
    %c0_i32_7 = arith.constant 0 : i32
    %c0_i32_8 = arith.constant 0 : i32
    %8 = tpu.memref_slice %arg34[%c2_i32, %c0_i32_7, %c0_i32_8] : memref<5x512x512xbf16, #tpu.memory_space<vmem>> -> memref<1x512x512xbf16, #tpu.memory_space<vmem>>
    %9 = tpu.memref_squeeze %8 : memref<1x512x512xbf16, #tpu.memory_space<vmem>> -> memref<512x512xbf16, #tpu.memory_space<vmem>>
    %10 = tpu.memref_slice %arg35[%c2_i32_6] : memref<5x!tpu.dma_semaphore, #tpu.memory_space<semaphore_mem>> -> memref<1x!tpu.dma_semaphore, #tpu.memory_space<semaphore_mem>>
    %11 = tpu.memref_squeeze %10 : memref<1x!tpu.dma_semaphore, #tpu.memory_space<semaphore_mem>> -> memref<!tpu.dma_semaphore, #tpu.memory_space<semaphore_mem>>
    tpu.enqueue_dma source(%arg29 : memref<512x512xbf16, #tpu.memory_space<any>>) target(%9 : memref<512x512xbf16, #tpu.memory_space<vmem>>) target_semaphore(%11 : memref<!tpu.dma_semaphore, #tpu.memory_space<semaphore_mem>>)
    %c3_i32 = arith.constant 3 : i32
    %c3_i32_9 = arith.constant 3 : i32
    %c0_i32_10 = arith.constant 0 : i32
    %c0_i32_11 = arith.constant 0 : i32
    %12 = tpu.memref_slice %arg34[%c3_i32, %c0_i32_10, %c0_i32_11] : memref<5x512x512xbf16, #tpu.memory_space<vmem>> -> memref<1x512x512xbf16, #tpu.memory_space<vmem>>
    %13 = tpu.memref_squeeze %12 : memref<1x512x512xbf16, #tpu.memory_space<vmem>> -> memref<512x512xbf16, #tpu.memory_space<vmem>>
    %14 = tpu.memref_slice %arg35[%c3_i32_9] : memref<5x!tpu.dma_semaphore, #tpu.memory_space<semaphore_mem>> -> memref<1x!tpu.dma_semaphore, #tpu.memory_space<semaphore_mem>>
    %15 = tpu.memref_squeeze %14 : memref<1x!tpu.dma_semaphore, #tpu.memory_space<semaphore_mem>> -> memref<!tpu.dma_semaphore, #tpu.memory_space<semaphore_mem>>
    tpu.enqueue_dma source(%arg30 : memref<512x512xbf16, #tpu.memory_space<any>>) target(%13 : memref<512x512xbf16, #tpu.memory_space<vmem>>) target_semaphore(%15 : memref<!tpu.dma_semaphore, #tpu.memory_space<semaphore_mem>>)
    %c4_i32 = arith.constant 4 : i32
    %c4_i32_12 = arith.constant 4 : i32
    %c0_i32_13 = arith.constant 0 : i32
    %c0_i32_14 = arith.constant 0 : i32
    %16 = tpu.memref_slice %arg34[%c4_i32, %c0_i32_13, %c0_i32_14] : memref<5x512x512xbf16, #tpu.memory_space<vmem>> -> memref<1x512x512xbf16, #tpu.memory_space<vmem>>
    %17 = tpu.memref_squeeze %16 : memref<1x512x512xbf16, #tpu.memory_space<vmem>> -> memref<512x512xbf16, #tpu.memory_space<vmem>>
    %18 = tpu.memref_slice %arg35[%c4_i32_12] : memref<5x!tpu.dma_semaphore, #tpu.memory_space<semaphore_mem>> -> memref<1x!tpu.dma_semaphore, #tpu.memory_space<semaphore_mem>>
    %19 = tpu.memref_squeeze %18 : memref<1x!tpu.dma_semaphore, #tpu.memory_space<semaphore_mem>> -> memref<!tpu.dma_semaphore, #tpu.memory_space<semaphore_mem>>
    tpu.enqueue_dma source(%arg31 : memref<512x512xbf16, #tpu.memory_space<any>>) target(%17 : memref<512x512xbf16, #tpu.memory_space<vmem>>) target_semaphore(%19 : memref<!tpu.dma_semaphore, #tpu.memory_space<semaphore_mem>>)
    %20 = tpu.iota {dimensions = array<i32: 1>} : vector<1x512xi32>
    %c15_i32 = arith.constant 15 : i32
    %21 = vector.broadcast %c15_i32 : i32 to vector<1x512xi32>
    %22 = arith.andi %20, %21 : vector<1x512xi32>
    %c4_i32_15 = arith.constant 4 : i32
    %23 = vector.broadcast %c4_i32_15 : i32 to vector<1x512xi32>
    %24 = arith.shrsi %20, %23 : vector<1x512xi32>
    %c15_i32_16 = arith.constant 15 : i32
    %25 = vector.broadcast %c15_i32_16 : i32 to vector<1x512xi32>
    %26 = arith.andi %24, %25 : vector<1x512xi32>
    %c0 = arith.constant 0 : index
    %c0_17 = arith.constant 0 : index
    %27 = vector.load %arg1[%c0, %c0_17] : memref<8x512xf32, #tpu.memory_space<vmem>>, vector<8x512xf32>
    %28 = arith.truncf %27 : vector<8x512xf32> to vector<8x512xbf16>
    %cst = arith.constant 0.000000e+00 : bf16
    %29 = vector.broadcast %cst : bf16 to vector<8x64xbf16>
    %30 = tpu.concatenate %28, %29 in 1 : vector<8x512xbf16>, vector<8x64xbf16> -> vector<8x576xbf16>
    %31 = vector.extract_strided_slice %30 {offsets = [0, 0], sizes = [8, 512], strides = [1, 1]} : vector<8x576xbf16> to vector<8x512xbf16>
    %32 = vector.extract_strided_slice %30 {offsets = [0, 1], sizes = [8, 512], strides = [1, 1]} : vector<8x576xbf16> to vector<8x512xbf16>
    %33 = vector.extract_strided_slice %30 {offsets = [0, 2], sizes = [8, 512], strides = [1, 1]} : vector<8x576xbf16> to vector<8x512xbf16>
    %34 = vector.extract_strided_slice %30 {offsets = [0, 16], sizes = [8, 512], strides = [1, 1]} : vector<8x576xbf16> to vector<8x512xbf16>
    %35 = vector.extract_strided_slice %30 {offsets = [0, 17], sizes = [8, 512], strides = [1, 1]} : vector<8x576xbf16> to vector<8x512xbf16>
    %36 = vector.extract_strided_slice %30 {offsets = [0, 18], sizes = [8, 512], strides = [1, 1]} : vector<8x576xbf16> to vector<8x512xbf16>
    %37 = vector.extract_strided_slice %30 {offsets = [0, 32], sizes = [8, 512], strides = [1, 1]} : vector<8x576xbf16> to vector<8x512xbf16>
    %38 = vector.extract_strided_slice %30 {offsets = [0, 33], sizes = [8, 512], strides = [1, 1]} : vector<8x576xbf16> to vector<8x512xbf16>
    %39 = vector.extract_strided_slice %30 {offsets = [0, 34], sizes = [8, 512], strides = [1, 1]} : vector<8x576xbf16> to vector<8x512xbf16>
    %40 = tpu.concatenate %31, %32, %33, %34, %35, %36, %37, %38, %39 in 0 : vector<8x512xbf16>, vector<8x512xbf16>, vector<8x512xbf16>, vector<8x512xbf16>, vector<8x512xbf16>, vector<8x512xbf16>, vector<8x512xbf16>, vector<8x512xbf16>, vector<8x512xbf16> -> vector<72x512xbf16>
    %c0_18 = arith.constant 0 : index
    %c0_19 = arith.constant 0 : index
    %41 = vector.load %arg5[%c0_18, %c0_19] : memref<8x72xbf16, #tpu.memory_space<vmem>>, vector<8x72xbf16>
    %cst_20 = arith.constant dense<0.000000e+00> : vector<8x512xf32>
    %42 = tpu.matmul %41, %40, %cst_20 {dimension_numbers = #tpu.dot_dimension_numbers<[1], [0], [0], [1], [0, 0, 1, 1], [], []>} : vector<8x72xbf16>, vector<72x512xbf16>, vector<8x512xf32> -> vector<8x512xf32>
    %c0_21 = arith.constant 0 : index
    %c0_22 = arith.constant 0 : index
    %43 = vector.load %arg6[%c0_21, %c0_22] : memref<8x1xf32, #tpu.memory_space<vmem>>, vector<8x1xf32>
    %44 = vector.broadcast %43 : vector<8x1xf32> to vector<8x512xf32>
    %45 = arith.addf %42, %44 : vector<8x512xf32>
    %c14_i32 = arith.constant 14 : i32
    %46 = vector.broadcast %c14_i32 : i32 to vector<1x512xi32>
    %47 = arith.cmpi slt, %22, %46 : vector<1x512xi32>
    %c14_i32_23 = arith.constant 14 : i32
    %48 = vector.broadcast %c14_i32_23 : i32 to vector<1x512xi32>
    %49 = arith.cmpi slt, %26, %48 : vector<1x512xi32>
    %50 = arith.andi %47, %49 : vector<1x512xi1>
    %51 = arith.extui %50 : vector<1x512xi1> to vector<1x512xi32>
    %52 = arith.sitofp %51 : vector<1x512xi32> to vector<1x512xf32>
    %53 = vector.broadcast %52 : vector<1x512xf32> to vector<8x512xf32>
    %54 = arith.mulf %45, %53 : vector<8x512xf32>
    %cst_24 = arith.constant dense<0.000000e+00> : vector<8xf32>
    %55 = vector.multi_reduction <add>, %54, %cst_24 [1] : vector<8x512xf32> to vector<8xf32>
    %56 = vector.shape_cast %55 : vector<8xf32> to vector<8x1xf32>
    %cst_25 = arith.constant 0.00255102036 : f32
    %57 = vector.broadcast %cst_25 : f32 to vector<8x1xf32>
    %58 = arith.mulf %56, %57 : vector<8x1xf32>
    %59 = vector.broadcast %58 : vector<8x1xf32> to vector<8x512xf32>
    %60 = arith.subf %45, %59 : vector<8x512xf32>
    %61 = vector.broadcast %52 : vector<1x512xf32> to vector<8x512xf32>
    %62 = arith.mulf %60, %61 : vector<8x512xf32>
    %63 = arith.mulf %62, %62 : vector<8x512xf32>
    %cst_26 = arith.constant dense<0.000000e+00> : vector<8xf32>
    %64 = vector.multi_reduction <add>, %63, %cst_26 [1] : vector<8x512xf32> to vector<8xf32>
    %65 = vector.shape_cast %64 : vector<8xf32> to vector<8x1xf32>
    %cst_27 = arith.constant 0.00255102036 : f32
    %66 = vector.broadcast %cst_27 : f32 to vector<8x1xf32>
    %67 = arith.mulf %65, %66 : vector<8x1xf32>
    %c0_28 = arith.constant 0 : index
    %c0_29 = arith.constant 0 : index
    %68 = vector.load %arg7[%c0_28, %c0_29] : memref<8x1xf32, #tpu.memory_space<vmem>>, vector<8x1xf32>
    %69 = vector.broadcast %58 : vector<8x1xf32> to vector<8x512xf32>
    %70 = arith.subf %45, %69 : vector<8x512xf32>
    %71 = vector.broadcast %68 : vector<8x1xf32> to vector<8x512xf32>
    %72 = arith.mulf %71, %70 : vector<8x512xf32>
    %cst_30 = arith.constant 9.99999974E-6 : f32
    %73 = vector.broadcast %cst_30 : f32 to vector<8x1xf32>
    %74 = arith.addf %67, %73 : vector<8x1xf32>
    %75 = math.rsqrt %74 : vector<8x1xf32>
    %76 = vector.broadcast %75 : vector<8x1xf32> to vector<8x512xf32>
    %77 = arith.mulf %72, %76 : vector<8x512xf32>
    %c0_31 = arith.constant 0 : index
    %c0_32 = arith.constant 0 : index
    %78 = vector.load %arg8[%c0_31, %c0_32] : memref<8x1xf32, #tpu.memory_space<vmem>>, vector<8x1xf32>
    %79 = vector.broadcast %78 : vector<8x1xf32> to vector<8x512xf32>
    %80 = arith.addf %77, %79 : vector<8x512xf32>
    %81 = vector.broadcast %52 : vector<1x512xf32> to vector<8x512xf32>
    %82 = arith.mulf %80, %81 : vector<8x512xf32>
    %83 = arith.truncf %82 : vector<8x512xf32> to vector<8x512xbf16>
    %cst_33 = arith.constant 0.000000e+00 : bf16
    %84 = vector.broadcast %cst_33 : bf16 to vector<8x64xbf16>
    %85 = tpu.concatenate %83, %84 in 1 : vector<8x512xbf16>, vector<8x64xbf16> -> vector<8x576xbf16>
    %86 = vector.extract_strided_slice %85 {offsets = [0, 0], sizes = [8, 512], strides = [1, 1]} : vector<8x576xbf16> to vector<8x512xbf16>
    %87 = vector.extract_strided_slice %85 {offsets = [0, 1], sizes = [8, 512], strides = [1, 1]} : vector<8x576xbf16> to vector<8x512xbf16>
    %88 = vector.extract_strided_slice %85 {offsets = [0, 2], sizes = [8, 512], strides = [1, 1]} : vector<8x576xbf16> to vector<8x512xbf16>
    %89 = vector.extract_strided_slice %85 {offsets = [0, 16], sizes = [8, 512], strides = [1, 1]} : vector<8x576xbf16> to vector<8x512xbf16>
    %90 = vector.extract_strided_slice %85 {offsets = [0, 17], sizes = [8, 512], strides = [1, 1]} : vector<8x576xbf16> to vector<8x512xbf16>
    %91 = vector.extract_strided_slice %85 {offsets = [0, 18], sizes = [8, 512], strides = [1, 1]} : vector<8x576xbf16> to vector<8x512xbf16>
    %92 = vector.extract_strided_slice %85 {offsets = [0, 32], sizes = [8, 512], strides = [1, 1]} : vector<8x576xbf16> to vector<8x512xbf16>
    %93 = vector.extract_strided_slice %85 {offsets = [0, 33], sizes = [8, 512], strides = [1, 1]} : vector<8x576xbf16> to vector<8x512xbf16>
    %94 = vector.extract_strided_slice %85 {offsets = [0, 34], sizes = [8, 512], strides = [1, 1]} : vector<8x576xbf16> to vector<8x512xbf16>
    %95 = tpu.concatenate %86, %87, %88, %89, %90, %91, %92, %93, %94 in 0 : vector<8x512xbf16>, vector<8x512xbf16>, vector<8x512xbf16>, vector<8x512xbf16>, vector<8x512xbf16>, vector<8x512xbf16>, vector<8x512xbf16>, vector<8x512xbf16>, vector<8x512xbf16> -> vector<72x512xbf16>
    %c0_34 = arith.constant 0 : index
    %c0_35 = arith.constant 0 : index
    %96 = vector.load %arg9[%c0_34, %c0_35] : memref<8x72xbf16, #tpu.memory_space<vmem>>, vector<8x72xbf16>
    %cst_36 = arith.constant dense<0.000000e+00> : vector<8x512xf32>
    %97 = tpu.matmul %96, %95, %cst_36 {dimension_numbers = #tpu.dot_dimension_numbers<[1], [0], [0], [1], [0, 0, 1, 1], [], []>} : vector<8x72xbf16>, vector<72x512xbf16>, vector<8x512xf32> -> vector<8x512xf32>
    %c0_37 = arith.constant 0 : index
    %c0_38 = arith.constant 0 : index
    %98 = vector.load %arg10[%c0_37, %c0_38] : memref<8x1xf32, #tpu.memory_space<vmem>>, vector<8x1xf32>
    %99 = vector.broadcast %98 : vector<8x1xf32> to vector<8x512xf32>
    %100 = arith.addf %97, %99 : vector<8x512xf32>
    %c12_i32 = arith.constant 12 : i32
    %101 = vector.broadcast %c12_i32 : i32 to vector<1x512xi32>
    %102 = arith.cmpi slt, %22, %101 : vector<1x512xi32>
    %c12_i32_39 = arith.constant 12 : i32
    %103 = vector.broadcast %c12_i32_39 : i32 to vector<1x512xi32>
    %104 = arith.cmpi slt, %26, %103 : vector<1x512xi32>
    %105 = arith.andi %102, %104 : vector<1x512xi1>
    %106 = arith.extui %105 : vector<1x512xi1> to vector<1x512xi32>
    %107 = arith.sitofp %106 : vector<1x512xi32> to vector<1x512xf32>
    %108 = vector.broadcast %107 : vector<1x512xf32> to vector<8x512xf32>
    %109 = arith.mulf %100, %108 : vector<8x512xf32>
    %cst_40 = arith.constant dense<0.000000e+00> : vector<8xf32>
    %110 = vector.multi_reduction <add>, %109, %cst_40 [1] : vector<8x512xf32> to vector<8xf32>
    %111 = vector.shape_cast %110 : vector<8xf32> to vector<8x1xf32>
    %cst_41 = arith.constant 0.00347222225 : f32
    %112 = vector.broadcast %cst_41 : f32 to vector<8x1xf32>
    %113 = arith.mulf %111, %112 : vector<8x1xf32>
    %114 = vector.broadcast %113 : vector<8x1xf32> to vector<8x512xf32>
    %115 = arith.subf %100, %114 : vector<8x512xf32>
    %116 = vector.broadcast %107 : vector<1x512xf32> to vector<8x512xf32>
    %117 = arith.mulf %115, %116 : vector<8x512xf32>
    %118 = arith.mulf %117, %117 : vector<8x512xf32>
    %cst_42 = arith.constant dense<0.000000e+00> : vector<8xf32>
    %119 = vector.multi_reduction <add>, %118, %cst_42 [1] : vector<8x512xf32> to vector<8xf32>
    %120 = vector.shape_cast %119 : vector<8xf32> to vector<8x1xf32>
    %cst_43 = arith.constant 0.00347222225 : f32
    %121 = vector.broadcast %cst_43 : f32 to vector<8x1xf32>
    %122 = arith.mulf %120, %121 : vector<8x1xf32>
    %c0_44 = arith.constant 0 : index
    %c0_45 = arith.constant 0 : index
    %123 = vector.load %arg11[%c0_44, %c0_45] : memref<8x1xf32, #tpu.memory_space<vmem>>, vector<8x1xf32>
    %124 = vector.broadcast %113 : vector<8x1xf32> to vector<8x512xf32>
    %125 = arith.subf %100, %124 : vector<8x512xf32>
    %126 = vector.broadcast %123 : vector<8x1xf32> to vector<8x512xf32>
    %127 = arith.mulf %126, %125 : vector<8x512xf32>
    %cst_46 = arith.constant 9.99999974E-6 : f32
    %128 = vector.broadcast %cst_46 : f32 to vector<8x1xf32>
    %129 = arith.addf %122, %128 : vector<8x1xf32>
    %130 = math.rsqrt %129 : vector<8x1xf32>
    %131 = vector.broadcast %130 : vector<8x1xf32> to vector<8x512xf32>
    %132 = arith.mulf %127, %131 : vector<8x512xf32>
    %c0_47 = arith.constant 0 : index
    %c0_48 = arith.constant 0 : index
    %133 = vector.load %arg12[%c0_47, %c0_48] : memref<8x1xf32, #tpu.memory_space<vmem>>, vector<8x1xf32>
    %134 = vector.broadcast %133 : vector<8x1xf32> to vector<8x512xf32>
    %135 = arith.addf %132, %134 : vector<8x512xf32>
    %136 = vector.broadcast %107 : vector<1x512xf32> to vector<8x512xf32>
    %137 = arith.mulf %135, %136 : vector<8x512xf32>
    %138 = arith.truncf %137 : vector<8x512xf32> to vector<8x512xbf16>
    %cst_49 = arith.constant 0.000000e+00 : bf16
    %139 = vector.broadcast %cst_49 : bf16 to vector<8x64xbf16>
    %140 = tpu.concatenate %138, %139 in 1 : vector<8x512xbf16>, vector<8x64xbf16> -> vector<8x576xbf16>
    %141 = vector.extract_strided_slice %140 {offsets = [0, 0], sizes = [8, 512], strides = [1, 1]} : vector<8x576xbf16> to vector<8x512xbf16>
    %142 = vector.extract_strided_slice %140 {offsets = [0, 1], sizes = [8, 512], strides = [1, 1]} : vector<8x576xbf16> to vector<8x512xbf16>
    %143 = vector.extract_strided_slice %140 {offsets = [0, 2], sizes = [8, 512], strides = [1, 1]} : vector<8x576xbf16> to vector<8x512xbf16>
    %144 = vector.extract_strided_slice %140 {offsets = [0, 16], sizes = [8, 512], strides = [1, 1]} : vector<8x576xbf16> to vector<8x512xbf16>
    %145 = vector.extract_strided_slice %140 {offsets = [0, 17], sizes = [8, 512], strides = [1, 1]} : vector<8x576xbf16> to vector<8x512xbf16>
    %146 = vector.extract_strided_slice %140 {offsets = [0, 18], sizes = [8, 512], strides = [1, 1]} : vector<8x576xbf16> to vector<8x512xbf16>
    %147 = vector.extract_strided_slice %140 {offsets = [0, 32], sizes = [8, 512], strides = [1, 1]} : vector<8x576xbf16> to vector<8x512xbf16>
    %148 = vector.extract_strided_slice %140 {offsets = [0, 33], sizes = [8, 512], strides = [1, 1]} : vector<8x576xbf16> to vector<8x512xbf16>
    %149 = vector.extract_strided_slice %140 {offsets = [0, 34], sizes = [8, 512], strides = [1, 1]} : vector<8x576xbf16> to vector<8x512xbf16>
    %150 = tpu.concatenate %141, %142, %143, %144, %145, %146, %147, %148, %149 in 0 : vector<8x512xbf16>, vector<8x512xbf16>, vector<8x512xbf16>, vector<8x512xbf16>, vector<8x512xbf16>, vector<8x512xbf16>, vector<8x512xbf16>, vector<8x512xbf16>, vector<8x512xbf16> -> vector<72x512xbf16>
    %c0_50 = arith.constant 0 : index
    %c0_51 = arith.constant 0 : index
    %151 = vector.load %arg13[%c0_50, %c0_51] : memref<8x72xbf16, #tpu.memory_space<vmem>>, vector<8x72xbf16>
    %cst_52 = arith.constant dense<0.000000e+00> : vector<8x512xf32>
    %152 = tpu.matmul %151, %150, %cst_52 {dimension_numbers = #tpu.dot_dimension_numbers<[1], [0], [0], [1], [0, 0, 1, 1], [], []>} : vector<8x72xbf16>, vector<72x512xbf16>, vector<8x512xf32> -> vector<8x512xf32>
    %c0_53 = arith.constant 0 : index
    %c0_54 = arith.constant 0 : index
    %153 = vector.load %arg14[%c0_53, %c0_54] : memref<8x1xf32, #tpu.memory_space<vmem>>, vector<8x1xf32>
    %154 = vector.broadcast %153 : vector<8x1xf32> to vector<8x512xf32>
    %155 = arith.addf %152, %154 : vector<8x512xf32>
    %c10_i32 = arith.constant 10 : i32
    %156 = vector.broadcast %c10_i32 : i32 to vector<1x512xi32>
    %157 = arith.cmpi slt, %22, %156 : vector<1x512xi32>
    %c10_i32_55 = arith.constant 10 : i32
    %158 = vector.broadcast %c10_i32_55 : i32 to vector<1x512xi32>
    %159 = arith.cmpi slt, %26, %158 : vector<1x512xi32>
    %160 = arith.andi %157, %159 : vector<1x512xi1>
    %161 = arith.extui %160 : vector<1x512xi1> to vector<1x512xi32>
    %162 = arith.sitofp %161 : vector<1x512xi32> to vector<1x512xf32>
    %163 = vector.broadcast %162 : vector<1x512xf32> to vector<8x512xf32>
    %164 = arith.mulf %155, %163 : vector<8x512xf32>
    %cst_56 = arith.constant dense<0.000000e+00> : vector<8xf32>
    %165 = vector.multi_reduction <add>, %164, %cst_56 [1] : vector<8x512xf32> to vector<8xf32>
    %166 = vector.shape_cast %165 : vector<8xf32> to vector<8x1xf32>
    %cst_57 = arith.constant 5.000000e-03 : f32
    %167 = vector.broadcast %cst_57 : f32 to vector<8x1xf32>
    %168 = arith.mulf %166, %167 : vector<8x1xf32>
    %169 = vector.broadcast %168 : vector<8x1xf32> to vector<8x512xf32>
    %170 = arith.subf %155, %169 : vector<8x512xf32>
    %171 = vector.broadcast %162 : vector<1x512xf32> to vector<8x512xf32>
    %172 = arith.mulf %170, %171 : vector<8x512xf32>
    %173 = arith.mulf %172, %172 : vector<8x512xf32>
    %cst_58 = arith.constant dense<0.000000e+00> : vector<8xf32>
    %174 = vector.multi_reduction <add>, %173, %cst_58 [1] : vector<8x512xf32> to vector<8xf32>
    %175 = vector.shape_cast %174 : vector<8xf32> to vector<8x1xf32>
    %cst_59 = arith.constant 5.000000e-03 : f32
    %176 = vector.broadcast %cst_59 : f32 to vector<8x1xf32>
    %177 = arith.mulf %175, %176 : vector<8x1xf32>
    %c0_60 = arith.constant 0 : index
    %c0_61 = arith.constant 0 : index
    %178 = vector.load %arg15[%c0_60, %c0_61] : memref<8x1xf32, #tpu.memory_space<vmem>>, vector<8x1xf32>
    %179 = vector.broadcast %168 : vector<8x1xf32> to vector<8x512xf32>
    %180 = arith.subf %155, %179 : vector<8x512xf32>
    %181 = vector.broadcast %178 : vector<8x1xf32> to vector<8x512xf32>
    %182 = arith.mulf %181, %180 : vector<8x512xf32>
    %cst_62 = arith.constant 9.99999974E-6 : f32
    %183 = vector.broadcast %cst_62 : f32 to vector<8x1xf32>
    %184 = arith.addf %177, %183 : vector<8x1xf32>
    %185 = math.rsqrt %184 : vector<8x1xf32>
    %186 = vector.broadcast %185 : vector<8x1xf32> to vector<8x512xf32>
    %187 = arith.mulf %182, %186 : vector<8x512xf32>
    %c0_63 = arith.constant 0 : index
    %c0_64 = arith.constant 0 : index
    %188 = vector.load %arg16[%c0_63, %c0_64] : memref<8x1xf32, #tpu.memory_space<vmem>>, vector<8x1xf32>
    %189 = vector.broadcast %188 : vector<8x1xf32> to vector<8x512xf32>
    %190 = arith.addf %187, %189 : vector<8x512xf32>
    %191 = vector.broadcast %162 : vector<1x512xf32> to vector<8x512xf32>
    %192 = arith.mulf %190, %191 : vector<8x512xf32>
    %193 = arith.truncf %192 : vector<8x512xf32> to vector<8x512xbf16>
    %cst_65 = arith.constant 0.000000e+00 : bf16
    %194 = vector.broadcast %cst_65 : bf16 to vector<8x64xbf16>
    %195 = tpu.concatenate %193, %194 in 1 : vector<8x512xbf16>, vector<8x64xbf16> -> vector<8x576xbf16>
    %196 = vector.extract_strided_slice %195 {offsets = [0, 0], sizes = [8, 512], strides = [1, 1]} : vector<8x576xbf16> to vector<8x512xbf16>
    %197 = vector.extract_strided_slice %195 {offsets = [0, 1], sizes = [8, 512], strides = [1, 1]} : vector<8x576xbf16> to vector<8x512xbf16>
    %198 = vector.extract_strided_slice %195 {offsets = [0, 2], sizes = [8, 512], strides = [1, 1]} : vector<8x576xbf16> to vector<8x512xbf16>
    %199 = vector.extract_strided_slice %195 {offsets = [0, 16], sizes = [8, 512], strides = [1, 1]} : vector<8x576xbf16> to vector<8x512xbf16>
    %200 = vector.extract_strided_slice %195 {offsets = [0, 17], sizes = [8, 512], strides = [1, 1]} : vector<8x576xbf16> to vector<8x512xbf16>
    %201 = vector.extract_strided_slice %195 {offsets = [0, 18], sizes = [8, 512], strides = [1, 1]} : vector<8x576xbf16> to vector<8x512xbf16>
    %202 = vector.extract_strided_slice %195 {offsets = [0, 32], sizes = [8, 512], strides = [1, 1]} : vector<8x576xbf16> to vector<8x512xbf16>
    %203 = vector.extract_strided_slice %195 {offsets = [0, 33], sizes = [8, 512], strides = [1, 1]} : vector<8x576xbf16> to vector<8x512xbf16>
    %204 = vector.extract_strided_slice %195 {offsets = [0, 34], sizes = [8, 512], strides = [1, 1]} : vector<8x576xbf16> to vector<8x512xbf16>
    %205 = tpu.concatenate %196, %197, %198, %199, %200, %201, %202, %203, %204 in 0 : vector<8x512xbf16>, vector<8x512xbf16>, vector<8x512xbf16>, vector<8x512xbf16>, vector<8x512xbf16>, vector<8x512xbf16>, vector<8x512xbf16>, vector<8x512xbf16>, vector<8x512xbf16> -> vector<72x512xbf16>
    %c0_66 = arith.constant 0 : index
    %c0_67 = arith.constant 0 : index
    %206 = vector.load %arg17[%c0_66, %c0_67] : memref<8x72xbf16, #tpu.memory_space<vmem>>, vector<8x72xbf16>
    %cst_68 = arith.constant dense<0.000000e+00> : vector<8x512xf32>
    %207 = tpu.matmul %206, %205, %cst_68 {dimension_numbers = #tpu.dot_dimension_numbers<[1], [0], [0], [1], [0, 0, 1, 1], [], []>} : vector<8x72xbf16>, vector<72x512xbf16>, vector<8x512xf32> -> vector<8x512xf32>
    %c0_69 = arith.constant 0 : index
    %c0_70 = arith.constant 0 : index
    %208 = vector.load %arg18[%c0_69, %c0_70] : memref<8x1xf32, #tpu.memory_space<vmem>>, vector<8x1xf32>
    %209 = vector.broadcast %208 : vector<8x1xf32> to vector<8x512xf32>
    %210 = arith.addf %207, %209 : vector<8x512xf32>
    %c8_i32 = arith.constant 8 : i32
    %211 = vector.broadcast %c8_i32 : i32 to vector<1x512xi32>
    %212 = arith.cmpi slt, %22, %211 : vector<1x512xi32>
    %c8_i32_71 = arith.constant 8 : i32
    %213 = vector.broadcast %c8_i32_71 : i32 to vector<1x512xi32>
    %214 = arith.cmpi slt, %26, %213 : vector<1x512xi32>
    %215 = arith.andi %212, %214 : vector<1x512xi1>
    %216 = arith.extui %215 : vector<1x512xi1> to vector<1x512xi32>
    %217 = arith.sitofp %216 : vector<1x512xi32> to vector<1x512xf32>
    %218 = vector.broadcast %217 : vector<1x512xf32> to vector<8x512xf32>
    %219 = arith.mulf %210, %218 : vector<8x512xf32>
    %cst_72 = arith.constant dense<0.000000e+00> : vector<8xf32>
    %220 = vector.multi_reduction <add>, %219, %cst_72 [1] : vector<8x512xf32> to vector<8xf32>
    %221 = vector.shape_cast %220 : vector<8xf32> to vector<8x1xf32>
    %cst_73 = arith.constant 7.812500e-03 : f32
    %222 = vector.broadcast %cst_73 : f32 to vector<8x1xf32>
    %223 = arith.mulf %221, %222 : vector<8x1xf32>
    %224 = vector.broadcast %223 : vector<8x1xf32> to vector<8x512xf32>
    %225 = arith.subf %210, %224 : vector<8x512xf32>
    %226 = vector.broadcast %217 : vector<1x512xf32> to vector<8x512xf32>
    %227 = arith.mulf %225, %226 : vector<8x512xf32>
    %228 = arith.mulf %227, %227 : vector<8x512xf32>
    %cst_74 = arith.constant dense<0.000000e+00> : vector<8xf32>
    %229 = vector.multi_reduction <add>, %228, %cst_74 [1] : vector<8x512xf32> to vector<8xf32>
    %230 = vector.shape_cast %229 : vector<8xf32> to vector<8x1xf32>
    %cst_75 = arith.constant 7.812500e-03 : f32
    %231 = vector.broadcast %cst_75 : f32 to vector<8x1xf32>
    %232 = arith.mulf %230, %231 : vector<8x1xf32>
    %c0_76 = arith.constant 0 : index
    %c0_77 = arith.constant 0 : index
    %233 = vector.load %arg19[%c0_76, %c0_77] : memref<8x1xf32, #tpu.memory_space<vmem>>, vector<8x1xf32>
    %234 = vector.broadcast %223 : vector<8x1xf32> to vector<8x512xf32>
    %235 = arith.subf %210, %234 : vector<8x512xf32>
    %236 = vector.broadcast %233 : vector<8x1xf32> to vector<8x512xf32>
    %237 = arith.mulf %236, %235 : vector<8x512xf32>
    %cst_78 = arith.constant 9.99999974E-6 : f32
    %238 = vector.broadcast %cst_78 : f32 to vector<8x1xf32>
    %239 = arith.addf %232, %238 : vector<8x1xf32>
    %240 = math.rsqrt %239 : vector<8x1xf32>
    %241 = vector.broadcast %240 : vector<8x1xf32> to vector<8x512xf32>
    %242 = arith.mulf %237, %241 : vector<8x512xf32>
    %c0_79 = arith.constant 0 : index
    %c0_80 = arith.constant 0 : index
    %243 = vector.load %arg20[%c0_79, %c0_80] : memref<8x1xf32, #tpu.memory_space<vmem>>, vector<8x1xf32>
    %244 = vector.broadcast %243 : vector<8x1xf32> to vector<8x512xf32>
    %245 = arith.addf %242, %244 : vector<8x512xf32>
    %246 = vector.broadcast %217 : vector<1x512xf32> to vector<8x512xf32>
    %247 = arith.mulf %245, %246 : vector<8x512xf32>
    %248 = arith.truncf %247 : vector<8x512xf32> to vector<8x512xbf16>
    %c0_81 = arith.constant 0 : index
    %c0_82 = arith.constant 0 : index
    %249 = vector.load %arg4[%c0_81, %c0_82] : memref<256x64xbf16, #tpu.memory_space<vmem>>, vector<256x64xbf16>
    %250 = vector.extract_strided_slice %248 {offsets = [0, 0], sizes = [8, 256], strides = [1, 1]} : vector<8x512xbf16> to vector<8x256xbf16>
    %cst_83 = arith.constant dense<0.000000e+00> : vector<8x64xf32>
    %251 = tpu.matmul %250, %249, %cst_83 {dimension_numbers = #tpu.dot_dimension_numbers<[1], [0], [0], [1], [0, 0, 1, 1], [], []>} : vector<8x256xbf16>, vector<256x64xbf16>, vector<8x64xf32> -> vector<8x64xf32>
    %252 = vector.extract_strided_slice %251 {offsets = [0, 0], sizes = [1, 64], strides = [1, 1]} : vector<8x64xf32> to vector<1x64xf32>
    %253 = vector.extract_strided_slice %251 {offsets = [1, 0], sizes = [1, 64], strides = [1, 1]} : vector<8x64xf32> to vector<1x64xf32>
    %254 = vector.extract_strided_slice %251 {offsets = [2, 0], sizes = [1, 64], strides = [1, 1]} : vector<8x64xf32> to vector<1x64xf32>
    %255 = vector.extract_strided_slice %251 {offsets = [3, 0], sizes = [1, 64], strides = [1, 1]} : vector<8x64xf32> to vector<1x64xf32>
    %256 = vector.extract_strided_slice %251 {offsets = [4, 0], sizes = [1, 64], strides = [1, 1]} : vector<8x64xf32> to vector<1x64xf32>
    %257 = vector.extract_strided_slice %251 {offsets = [5, 0], sizes = [1, 64], strides = [1, 1]} : vector<8x64xf32> to vector<1x64xf32>
    %258 = vector.extract_strided_slice %251 {offsets = [6, 0], sizes = [1, 64], strides = [1, 1]} : vector<8x64xf32> to vector<1x64xf32>
    %259 = vector.extract_strided_slice %251 {offsets = [7, 0], sizes = [1, 64], strides = [1, 1]} : vector<8x64xf32> to vector<1x64xf32>
    %260 = tpu.concatenate %252, %253, %254, %255, %256, %257, %258, %259 in 1 : vector<1x64xf32>, vector<1x64xf32>, vector<1x64xf32>, vector<1x64xf32>, vector<1x64xf32>, vector<1x64xf32>, vector<1x64xf32>, vector<1x64xf32> -> vector<1x512xf32>
    %261 = vector.extract_strided_slice %248 {offsets = [0, 256], sizes = [8, 256], strides = [1, 1]} : vector<8x512xbf16> to vector<8x256xbf16>
    %cst_84 = arith.constant dense<0.000000e+00> : vector<8x64xf32>
    %262 = tpu.matmul %261, %249, %cst_84 {dimension_numbers = #tpu.dot_dimension_numbers<[1], [0], [0], [1], [0, 0, 1, 1], [], []>} : vector<8x256xbf16>, vector<256x64xbf16>, vector<8x64xf32> -> vector<8x64xf32>
    %263 = vector.extract_strided_slice %262 {offsets = [0, 0], sizes = [1, 64], strides = [1, 1]} : vector<8x64xf32> to vector<1x64xf32>
    %264 = vector.extract_strided_slice %262 {offsets = [1, 0], sizes = [1, 64], strides = [1, 1]} : vector<8x64xf32> to vector<1x64xf32>
    %265 = vector.extract_strided_slice %262 {offsets = [2, 0], sizes = [1, 64], strides = [1, 1]} : vector<8x64xf32> to vector<1x64xf32>
    %266 = vector.extract_strided_slice %262 {offsets = [3, 0], sizes = [1, 64], strides = [1, 1]} : vector<8x64xf32> to vector<1x64xf32>
    %267 = vector.extract_strided_slice %262 {offsets = [4, 0], sizes = [1, 64], strides = [1, 1]} : vector<8x64xf32> to vector<1x64xf32>
    %268 = vector.extract_strided_slice %262 {offsets = [5, 0], sizes = [1, 64], strides = [1, 1]} : vector<8x64xf32> to vector<1x64xf32>
    %269 = vector.extract_strided_slice %262 {offsets = [6, 0], sizes = [1, 64], strides = [1, 1]} : vector<8x64xf32> to vector<1x64xf32>
    %270 = vector.extract_strided_slice %262 {offsets = [7, 0], sizes = [1, 64], strides = [1, 1]} : vector<8x64xf32> to vector<1x64xf32>
    %271 = tpu.concatenate %263, %264, %265, %266, %267, %268, %269, %270 in 1 : vector<1x64xf32>, vector<1x64xf32>, vector<1x64xf32>, vector<1x64xf32>, vector<1x64xf32>, vector<1x64xf32>, vector<1x64xf32>, vector<1x64xf32> -> vector<1x512xf32>
    %272 = tpu.concatenate %260, %271 in 0 : vector<1x512xf32>, vector<1x512xf32> -> vector<2x512xf32>
    %273 = arith.truncf %272 : vector<2x512xf32> to vector<2x512xbf16>
    %c0_i32_85 = arith.constant 0 : i32
    %c0_i32_86 = arith.constant 0 : i32
    %c0_i32_87 = arith.constant 0 : i32
    %c0_i32_88 = arith.constant 0 : i32
    %274 = tpu.memref_slice %arg34[%c0_i32_85, %c0_i32_87, %c0_i32_88] : memref<5x512x512xbf16, #tpu.memory_space<vmem>> -> memref<1x512x512xbf16, #tpu.memory_space<vmem>>
    %275 = tpu.memref_squeeze %274 : memref<1x512x512xbf16, #tpu.memory_space<vmem>> -> memref<512x512xbf16, #tpu.memory_space<vmem>>
    %276 = tpu.memref_slice %arg35[%c0_i32_86] : memref<5x!tpu.dma_semaphore, #tpu.memory_space<semaphore_mem>> -> memref<1x!tpu.dma_semaphore, #tpu.memory_space<semaphore_mem>>
    %277 = tpu.memref_squeeze %276 : memref<1x!tpu.dma_semaphore, #tpu.memory_space<semaphore_mem>> -> memref<!tpu.dma_semaphore, #tpu.memory_space<semaphore_mem>>
    tpu.wait_dma2 semaphore(%277 : memref<!tpu.dma_semaphore, #tpu.memory_space<semaphore_mem>>) src(%arg27 : memref<512x512xbf16, #tpu.memory_space<any>>) dst(%275 : memref<512x512xbf16, #tpu.memory_space<vmem>>)
    %c1_i32_89 = arith.constant 1 : i32
    %c1_i32_90 = arith.constant 1 : i32
    %c0_i32_91 = arith.constant 0 : i32
    %c0_i32_92 = arith.constant 0 : i32
    %278 = tpu.memref_slice %arg34[%c1_i32_89, %c0_i32_91, %c0_i32_92] : memref<5x512x512xbf16, #tpu.memory_space<vmem>> -> memref<1x512x512xbf16, #tpu.memory_space<vmem>>
    %279 = tpu.memref_squeeze %278 : memref<1x512x512xbf16, #tpu.memory_space<vmem>> -> memref<512x512xbf16, #tpu.memory_space<vmem>>
    %280 = tpu.memref_slice %arg35[%c1_i32_90] : memref<5x!tpu.dma_semaphore, #tpu.memory_space<semaphore_mem>> -> memref<1x!tpu.dma_semaphore, #tpu.memory_space<semaphore_mem>>
    %281 = tpu.memref_squeeze %280 : memref<1x!tpu.dma_semaphore, #tpu.memory_space<semaphore_mem>> -> memref<!tpu.dma_semaphore, #tpu.memory_space<semaphore_mem>>
    tpu.wait_dma2 semaphore(%281 : memref<!tpu.dma_semaphore, #tpu.memory_space<semaphore_mem>>) src(%arg28 : memref<512x512xbf16, #tpu.memory_space<any>>) dst(%279 : memref<512x512xbf16, #tpu.memory_space<vmem>>)
    %c0_93 = arith.constant 0 : index
    %c0_94 = arith.constant 0 : index
    %c0_95 = arith.constant 0 : index
    %282 = vector.load %arg34[%c0_93, %c0_94, %c0_95] : memref<5x512x512xbf16, #tpu.memory_space<vmem>>, vector<1x512x512xbf16>
    %283 = vector.shape_cast %282 : vector<1x512x512xbf16> to vector<512x512xbf16>
    %cst_96 = arith.constant dense<0.000000e+00> : vector<2x512xf32>
    %284 = tpu.matmul %273, %283, %cst_96 {dimension_numbers = #tpu.dot_dimension_numbers<[1], [0], [0], [1], [0, 0, 1, 1], [], []>} : vector<2x512xbf16>, vector<512x512xbf16>, vector<2x512xf32> -> vector<2x512xf32>
    %c0_97 = arith.constant 0 : index
    %c0_98 = arith.constant 0 : index
    %285 = vector.load %arg2[%c0_97, %c0_98] : memref<2x512xf32, #tpu.memory_space<vmem>>, vector<2x512xf32>
    %286 = arith.truncf %285 : vector<2x512xf32> to vector<2x512xbf16>
    %c1 = arith.constant 1 : index
    %c0_99 = arith.constant 0 : index
    %c0_100 = arith.constant 0 : index
    %287 = vector.load %arg34[%c1, %c0_99, %c0_100] : memref<5x512x512xbf16, #tpu.memory_space<vmem>>, vector<1x512x512xbf16>
    %288 = vector.shape_cast %287 : vector<1x512x512xbf16> to vector<512x512xbf16>
    %cst_101 = arith.constant dense<0.000000e+00> : vector<2x512xf32>
    %289 = tpu.matmul %286, %288, %cst_101 {dimension_numbers = #tpu.dot_dimension_numbers<[1], [0], [0], [1], [0, 0, 1, 1], [], []>} : vector<2x512xbf16>, vector<512x512xbf16>, vector<2x512xf32> -> vector<2x512xf32>
    %290 = arith.addf %284, %289 : vector<2x512xf32>
    %c0_102 = arith.constant 0 : index
    %c0_103 = arith.constant 0 : index
    %291 = vector.load %arg21[%c0_102, %c0_103] : memref<1x512xf32, #tpu.memory_space<vmem>>, vector<1x512xf32>
    %292 = vector.broadcast %291 : vector<1x512xf32> to vector<2x512xf32>
    %293 = arith.addf %290, %292 : vector<2x512xf32>
    %cst_104 = arith.constant dense<0.000000e+00> : vector<512xf32>
    %294 = vector.multi_reduction <add>, %293, %cst_104 [0] : vector<2x512xf32> to vector<512xf32>
    %295 = vector.shape_cast %294 : vector<512xf32> to vector<1x512xf32>
    %cst_105 = arith.constant 2.000000e+00 : f32
    %296 = vector.broadcast %cst_105 : f32 to vector<1x512xf32>
    %297 = arith.divf %295, %296 : vector<1x512xf32>
    %298 = vector.broadcast %297 : vector<1x512xf32> to vector<2x512xf32>
    %299 = arith.subf %293, %298 : vector<2x512xf32>
    %300 = arith.mulf %299, %299 : vector<2x512xf32>
    %cst_106 = arith.constant dense<0.000000e+00> : vector<512xf32>
    %301 = vector.multi_reduction <add>, %300, %cst_106 [0] : vector<2x512xf32> to vector<512xf32>
    %302 = vector.shape_cast %301 : vector<512xf32> to vector<1x512xf32>
    %cst_107 = arith.constant 2.000000e+00 : f32
    %303 = vector.broadcast %cst_107 : f32 to vector<1x512xf32>
    %304 = arith.divf %302, %303 : vector<1x512xf32>
    %c0_108 = arith.constant 0 : index
    %c0_109 = arith.constant 0 : index
    %305 = vector.load %arg22[%c0_108, %c0_109] : memref<1x512xf32, #tpu.memory_space<vmem>>, vector<1x512xf32>
    %306 = vector.broadcast %297 : vector<1x512xf32> to vector<2x512xf32>
    %307 = arith.subf %293, %306 : vector<2x512xf32>
    %308 = vector.broadcast %305 : vector<1x512xf32> to vector<2x512xf32>
    %309 = arith.mulf %308, %307 : vector<2x512xf32>
    %cst_110 = arith.constant 9.99999974E-6 : f32
    %310 = vector.broadcast %cst_110 : f32 to vector<1x512xf32>
    %311 = arith.addf %304, %310 : vector<1x512xf32>
    %312 = math.rsqrt %311 : vector<1x512xf32>
    %313 = vector.broadcast %312 : vector<1x512xf32> to vector<2x512xf32>
    %314 = arith.mulf %309, %313 : vector<2x512xf32>
    %c0_111 = arith.constant 0 : index
    %c0_112 = arith.constant 0 : index
    %315 = vector.load %arg23[%c0_111, %c0_112] : memref<1x512xf32, #tpu.memory_space<vmem>>, vector<1x512xf32>
    %316 = vector.broadcast %315 : vector<1x512xf32> to vector<2x512xf32>
    %317 = arith.addf %314, %316 : vector<2x512xf32>
    %c2_i32_113 = arith.constant 2 : i32
    %c2_i32_114 = arith.constant 2 : i32
    %c0_i32_115 = arith.constant 0 : i32
    %c0_i32_116 = arith.constant 0 : i32
    %318 = tpu.memref_slice %arg34[%c2_i32_113, %c0_i32_115, %c0_i32_116] : memref<5x512x512xbf16, #tpu.memory_space<vmem>> -> memref<1x512x512xbf16, #tpu.memory_space<vmem>>
    %319 = tpu.memref_squeeze %318 : memref<1x512x512xbf16, #tpu.memory_space<vmem>> -> memref<512x512xbf16, #tpu.memory_space<vmem>>
    %320 = tpu.memref_slice %arg35[%c2_i32_114] : memref<5x!tpu.dma_semaphore, #tpu.memory_space<semaphore_mem>> -> memref<1x!tpu.dma_semaphore, #tpu.memory_space<semaphore_mem>>
    %321 = tpu.memref_squeeze %320 : memref<1x!tpu.dma_semaphore, #tpu.memory_space<semaphore_mem>> -> memref<!tpu.dma_semaphore, #tpu.memory_space<semaphore_mem>>
    tpu.wait_dma2 semaphore(%321 : memref<!tpu.dma_semaphore, #tpu.memory_space<semaphore_mem>>) src(%arg29 : memref<512x512xbf16, #tpu.memory_space<any>>) dst(%319 : memref<512x512xbf16, #tpu.memory_space<vmem>>)
    %322 = arith.truncf %317 : vector<2x512xf32> to vector<2x512xbf16>
    %c2 = arith.constant 2 : index
    %c0_117 = arith.constant 0 : index
    %c0_118 = arith.constant 0 : index
    %323 = vector.load %arg34[%c2, %c0_117, %c0_118] : memref<5x512x512xbf16, #tpu.memory_space<vmem>>, vector<1x512x512xbf16>
    %324 = vector.shape_cast %323 : vector<1x512x512xbf16> to vector<512x512xbf16>
    %cst_119 = arith.constant dense<0.000000e+00> : vector<2x512xf32>
    %325 = tpu.matmul %322, %324, %cst_119 {dimension_numbers = #tpu.dot_dimension_numbers<[1], [0], [0], [1], [0, 0, 1, 1], [], []>} : vector<2x512xbf16>, vector<512x512xbf16>, vector<2x512xf32> -> vector<2x512xf32>
    %c0_120 = arith.constant 0 : index
    %c0_121 = arith.constant 0 : index
    %326 = vector.load %arg24[%c0_120, %c0_121] : memref<1x512xf32, #tpu.memory_space<vmem>>, vector<1x512xf32>
    %327 = vector.broadcast %326 : vector<1x512xf32> to vector<2x512xf32>
    %328 = arith.addf %325, %327 : vector<2x512xf32>
    %329 = arith.addf %328, %293 : vector<2x512xf32>
    %330 = arith.truncf %329 : vector<2x512xf32> to vector<2x512xbf16>
    %c3_i32_122 = arith.constant 3 : i32
    %c3_i32_123 = arith.constant 3 : i32
    %c0_i32_124 = arith.constant 0 : i32
    %c0_i32_125 = arith.constant 0 : i32
    %331 = tpu.memref_slice %arg34[%c3_i32_122, %c0_i32_124, %c0_i32_125] : memref<5x512x512xbf16, #tpu.memory_space<vmem>> -> memref<1x512x512xbf16, #tpu.memory_space<vmem>>
    %332 = tpu.memref_squeeze %331 : memref<1x512x512xbf16, #tpu.memory_space<vmem>> -> memref<512x512xbf16, #tpu.memory_space<vmem>>
    %333 = tpu.memref_slice %arg35[%c3_i32_123] : memref<5x!tpu.dma_semaphore, #tpu.memory_space<semaphore_mem>> -> memref<1x!tpu.dma_semaphore, #tpu.memory_space<semaphore_mem>>
    %334 = tpu.memref_squeeze %333 : memref<1x!tpu.dma_semaphore, #tpu.memory_space<semaphore_mem>> -> memref<!tpu.dma_semaphore, #tpu.memory_space<semaphore_mem>>
    tpu.wait_dma2 semaphore(%334 : memref<!tpu.dma_semaphore, #tpu.memory_space<semaphore_mem>>) src(%arg30 : memref<512x512xbf16, #tpu.memory_space<any>>) dst(%332 : memref<512x512xbf16, #tpu.memory_space<vmem>>)
    %c4_i32_126 = arith.constant 4 : i32
    %c4_i32_127 = arith.constant 4 : i32
    %c0_i32_128 = arith.constant 0 : i32
    %c0_i32_129 = arith.constant 0 : i32
    %335 = tpu.memref_slice %arg34[%c4_i32_126, %c0_i32_128, %c0_i32_129] : memref<5x512x512xbf16, #tpu.memory_space<vmem>> -> memref<1x512x512xbf16, #tpu.memory_space<vmem>>
    %336 = tpu.memref_squeeze %335 : memref<1x512x512xbf16, #tpu.memory_space<vmem>> -> memref<512x512xbf16, #tpu.memory_space<vmem>>
    %337 = tpu.memref_slice %arg35[%c4_i32_127] : memref<5x!tpu.dma_semaphore, #tpu.memory_space<semaphore_mem>> -> memref<1x!tpu.dma_semaphore, #tpu.memory_space<semaphore_mem>>
    %338 = tpu.memref_squeeze %337 : memref<1x!tpu.dma_semaphore, #tpu.memory_space<semaphore_mem>> -> memref<!tpu.dma_semaphore, #tpu.memory_space<semaphore_mem>>
    tpu.wait_dma2 semaphore(%338 : memref<!tpu.dma_semaphore, #tpu.memory_space<semaphore_mem>>) src(%arg31 : memref<512x512xbf16, #tpu.memory_space<any>>) dst(%336 : memref<512x512xbf16, #tpu.memory_space<vmem>>)
    %c3 = arith.constant 3 : index
    %c0_130 = arith.constant 0 : index
    %c0_131 = arith.constant 0 : index
    %339 = vector.load %arg34[%c3, %c0_130, %c0_131] : memref<5x512x512xbf16, #tpu.memory_space<vmem>>, vector<1x512x512xbf16>
    %340 = vector.shape_cast %339 : vector<1x512x512xbf16> to vector<512x512xbf16>
    %cst_132 = arith.constant dense<0.000000e+00> : vector<2x512xf32>
    %341 = tpu.matmul %330, %340, %cst_132 {dimension_numbers = #tpu.dot_dimension_numbers<[1], [0], [0], [1], [0, 0, 1, 1], [], []>} : vector<2x512xbf16>, vector<512x512xbf16>, vector<2x512xf32> -> vector<2x512xf32>
    %c0_133 = arith.constant 0 : index
    %c0_134 = arith.constant 0 : index
    %342 = vector.load %arg25[%c0_133, %c0_134] : memref<1x512xf32, #tpu.memory_space<vmem>>, vector<1x512xf32>
    %343 = vector.broadcast %342 : vector<1x512xf32> to vector<2x512xf32>
    %344 = arith.addf %341, %343 : vector<2x512xf32>
    %c4 = arith.constant 4 : index
    %c0_135 = arith.constant 0 : index
    %c0_136 = arith.constant 0 : index
    %345 = vector.load %arg34[%c4, %c0_135, %c0_136] : memref<5x512x512xbf16, #tpu.memory_space<vmem>>, vector<1x512x512xbf16>
    %346 = vector.shape_cast %345 : vector<1x512x512xbf16> to vector<512x512xbf16>
    %cst_137 = arith.constant dense<0.000000e+00> : vector<2x512xf32>
    %347 = tpu.matmul %330, %346, %cst_137 {dimension_numbers = #tpu.dot_dimension_numbers<[1], [0], [0], [1], [0, 0, 1, 1], [], []>} : vector<2x512xbf16>, vector<512x512xbf16>, vector<2x512xf32> -> vector<2x512xf32>
    %c0_138 = arith.constant 0 : index
    %c0_139 = arith.constant 0 : index
    %348 = vector.load %arg26[%c0_138, %c0_139] : memref<1x512xf32, #tpu.memory_space<vmem>>, vector<1x512xf32>
    %349 = vector.broadcast %348 : vector<1x512xf32> to vector<2x512xf32>
    %350 = arith.addf %347, %349 : vector<2x512xf32>
    %351 = math.exp %350 : vector<2x512xf32>
    %c0_140 = arith.constant 0 : index
    %c0_141 = arith.constant 0 : index
    %352 = vector.load %arg3[%c0_140, %c0_141] : memref<2x512xf32, #tpu.memory_space<vmem>>, vector<2x512xf32>
    %353 = arith.mulf %351, %352 : vector<2x512xf32>
    %354 = arith.addf %344, %353 : vector<2x512xf32>
    %c0_142 = arith.constant 0 : index
    %c0_143 = arith.constant 0 : index
    %355 = vector.load %arg32[%c0_142, %c0_143] : memref<2x512xf32, #tpu.memory_space<vmem>>, vector<2x512xf32>
    tpu.vector_store %arg32[%c0_142, %c0_143], %354 {strides = array<i32>} : memref<2x512xf32, #tpu.memory_space<vmem>>, vector<2x512xf32>,
    %356 = arith.mulf %352, %352 : vector<2x512xf32>
    %cst_144 = arith.constant -5.000000e-01 : f32
    %357 = vector.broadcast %cst_144 : f32 to vector<2x512xf32>
    %358 = arith.mulf %357, %356 : vector<2x512xf32>
    %359 = arith.subf %358, %350 : vector<2x512xf32>
    %cst_145 = arith.constant 0.918938517 : f32
    %360 = vector.broadcast %cst_145 : f32 to vector<2x512xf32>
    %361 = arith.subf %359, %360 : vector<2x512xf32>
    %cst_146 = arith.constant dense<0.000000e+00> : vector<2xf32>
    %362 = vector.multi_reduction <add>, %361, %cst_146 [1] : vector<2x512xf32> to vector<2xf32>
    %363 = vector.shape_cast %362 : vector<2xf32> to vector<2x1xf32>
    %c0_147 = arith.constant 0 : index
    %c0_148 = arith.constant 0 : index
    %364 = vector.load %arg33[%c0_147, %c0_148] : memref<2x1xf32, #tpu.memory_space<vmem>>, vector<2x1xf32>
    tpu.vector_store %arg33[%c0_147, %c0_148], %363 {strides = array<i32>} : memref<2x1xf32, #tpu.memory_space<vmem>>, vector<2x1xf32>,
    return
  }
  func.func @transform_0(%arg0: i32) -> (i32, i32) {
    %c0_i32 = arith.constant 0 : i32
    %c0_i32_0 = arith.constant 0 : i32
    %c0_i32_1 = arith.constant 0 : i32
    return %c0_i32, %c0_i32_0 : i32, i32
  }
  func.func @transform_1(%arg0: i32) -> (i32, i32) {
    %c0_i32 = arith.constant 0 : i32
    %c0_i32_0 = arith.constant 0 : i32
    %c0_i32_1 = arith.constant 0 : i32
    return %c0_i32, %c0_i32_0 : i32, i32
  }
  func.func @transform_2(%arg0: i32) -> (i32, i32) {
    %c0_i32 = arith.constant 0 : i32
    %c0_i32_0 = arith.constant 0 : i32
    %c0_i32_1 = arith.constant 0 : i32
    return %c0_i32, %c0_i32_0 : i32, i32
  }
  func.func @transform_3(%arg0: i32) -> (i32, i32) {
    %c0_i32 = arith.constant 0 : i32
    %c0_i32_0 = arith.constant 0 : i32
    %c0_i32_1 = arith.constant 0 : i32
    return %c0_i32, %c0_i32_0 : i32, i32
  }
  func.func @transform_4(%arg0: i32) -> (i32, i32) {
    %c0_i32 = arith.constant 0 : i32
    %c0_i32_0 = arith.constant 0 : i32
    %c0_i32_1 = arith.constant 0 : i32
    return %c0_i32, %c0_i32_0 : i32, i32
  }
  func.func @transform_5(%arg0: i32) -> (i32, i32) {
    %c0_i32 = arith.constant 0 : i32
    %c0_i32_0 = arith.constant 0 : i32
    %c0_i32_1 = arith.constant 0 : i32
    return %c0_i32, %c0_i32_0 : i32, i32
  }
  func.func @transform_6(%arg0: i32) -> (i32, i32) {
    %c0_i32 = arith.constant 0 : i32
    %c0_i32_0 = arith.constant 0 : i32
    %c0_i32_1 = arith.constant 0 : i32
    return %c0_i32, %c0_i32_0 : i32, i32
  }
  func.func @transform_7(%arg0: i32) -> (i32, i32) {
    %c0_i32 = arith.constant 0 : i32
    %c0_i32_0 = arith.constant 0 : i32
    %c0_i32_1 = arith.constant 0 : i32
    return %c0_i32, %c0_i32_0 : i32, i32
  }
  func.func @transform_8(%arg0: i32) -> (i32, i32) {
    %c0_i32 = arith.constant 0 : i32
    %c0_i32_0 = arith.constant 0 : i32
    %c0_i32_1 = arith.constant 0 : i32
    return %c0_i32, %c0_i32_0 : i32, i32
  }
  func.func @transform_9(%arg0: i32) -> (i32, i32) {
    %c0_i32 = arith.constant 0 : i32
    %c0_i32_0 = arith.constant 0 : i32
    %c0_i32_1 = arith.constant 0 : i32
    return %c0_i32, %c0_i32_0 : i32, i32
  }
  func.func @transform_10(%arg0: i32) -> (i32, i32) {
    %c0_i32 = arith.constant 0 : i32
    %c0_i32_0 = arith.constant 0 : i32
    %c0_i32_1 = arith.constant 0 : i32
    return %c0_i32, %c0_i32_0 : i32, i32
  }
  func.func @transform_11(%arg0: i32) -> (i32, i32) {
    %c0_i32 = arith.constant 0 : i32
    %c0_i32_0 = arith.constant 0 : i32
    %c0_i32_1 = arith.constant 0 : i32
    return %c0_i32, %c0_i32_0 : i32, i32
  }
  func.func @transform_12(%arg0: i32) -> (i32, i32) {
    %c0_i32 = arith.constant 0 : i32
    %c0_i32_0 = arith.constant 0 : i32
    %c0_i32_1 = arith.constant 0 : i32
    return %c0_i32, %c0_i32_0 : i32, i32
  }
  func.func @transform_13(%arg0: i32) -> (i32, i32) {
    %c0_i32 = arith.constant 0 : i32
    %c0_i32_0 = arith.constant 0 : i32
    %c0_i32_1 = arith.constant 0 : i32
    return %c0_i32, %c0_i32_0 : i32, i32
  }
  func.func @transform_14(%arg0: i32) -> (i32, i32) {
    %c0_i32 = arith.constant 0 : i32
    %c0_i32_0 = arith.constant 0 : i32
    %c0_i32_1 = arith.constant 0 : i32
    return %c0_i32, %c0_i32_0 : i32, i32
  }
  func.func @transform_15(%arg0: i32) -> (i32, i32) {
    %c0_i32 = arith.constant 0 : i32
    %c0_i32_0 = arith.constant 0 : i32
    %c0_i32_1 = arith.constant 0 : i32
    return %c0_i32, %c0_i32_0 : i32, i32
  }
  func.func @transform_16(%arg0: i32) -> (i32, i32) {
    %c0_i32 = arith.constant 0 : i32
    %c0_i32_0 = arith.constant 0 : i32
    %c0_i32_1 = arith.constant 0 : i32
    return %c0_i32, %c0_i32_0 : i32, i32
  }
  func.func @transform_17(%arg0: i32) -> (i32, i32) {
    %c0_i32 = arith.constant 0 : i32
    %c0_i32_0 = arith.constant 0 : i32
    %c0_i32_1 = arith.constant 0 : i32
    return %c0_i32, %c0_i32_0 : i32, i32
  }
  func.func @transform_18(%arg0: i32) -> (i32, i32) {
    %c0_i32 = arith.constant 0 : i32
    %c0_i32_0 = arith.constant 0 : i32
    %c0_i32_1 = arith.constant 0 : i32
    return %c0_i32, %c0_i32_0 : i32, i32
  }
  func.func @transform_19(%arg0: i32) -> (i32, i32) {
    %c0_i32 = arith.constant 0 : i32
    %c0_i32_0 = arith.constant 0 : i32
    %c0_i32_1 = arith.constant 0 : i32
    return %c0_i32, %c0_i32_0 : i32, i32
  }
  func.func @transform_20(%arg0: i32) -> (i32, i32) {
    %c0_i32 = arith.constant 0 : i32
    %c0_i32_0 = arith.constant 0 : i32
    %c0_i32_1 = arith.constant 0 : i32
    return %c0_i32, %c0_i32_0 : i32, i32
  }
  func.func @transform_21(%arg0: i32) -> (i32, i32) {
    %c0_i32 = arith.constant 0 : i32
    %c0_i32_0 = arith.constant 0 : i32
    %c0_i32_1 = arith.constant 0 : i32
    return %c0_i32, %c0_i32_0 : i32, i32
  }
  func.func @transform_22(%arg0: i32) -> (i32, i32) {
    %c0_i32 = arith.constant 0 : i32
    %c0_i32_0 = arith.constant 0 : i32
    %c0_i32_1 = arith.constant 0 : i32
    return %c0_i32, %c0_i32_0 : i32, i32
  }
  func.func @transform_23(%arg0: i32) -> (i32, i32) {
    %c0_i32 = arith.constant 0 : i32
    %c0_i32_0 = arith.constant 0 : i32
    %c0_i32_1 = arith.constant 0 : i32
    return %c0_i32, %c0_i32_0 : i32, i32
  }
  func.func @transform_24(%arg0: i32) -> (i32, i32) {
    %c0_i32 = arith.constant 0 : i32
    %c0_i32_0 = arith.constant 0 : i32
    %c0_i32_1 = arith.constant 0 : i32
    return %c0_i32, %c0_i32_0 : i32, i32
  }
  func.func @transform_25(%arg0: i32) -> (i32, i32) {
    %c0_i32 = arith.constant 0 : i32
    %c0_i32_0 = arith.constant 0 : i32
    %c0_i32_1 = arith.constant 0 : i32
    return %c0_i32, %c0_i32_0 : i32, i32
  }
  func.func @transform_31(%arg0: i32) -> (i32, i32) {
    %c0_i32 = arith.constant 0 : i32
    %c0_i32_0 = arith.constant 0 : i32
    %c0_i32_1 = arith.constant 0 : i32
    return %c0_i32, %c0_i32_0 : i32, i32
  }
  func.func @transform_32(%arg0: i32) -> (i32, i32) {
    %c0_i32 = arith.constant 0 : i32
    %c0_i32_0 = arith.constant 0 : i32
    %c0_i32_1 = arith.constant 0 : i32
    return %c0_i32, %c0_i32_0 : i32, i32
  }
}

</mosaic_0001>

<llo_original>
// kernel: qz_forward.1
$region0: #{qz_forward.1}
  #allocation0 [shape = 'u32[]', space=smem, size = 0x4, offset = 0x4, fixed_abs, tag = 'smem constant byte address 0x4 - core index']
  #allocation1 [shape = 'u32[144,128]{1,0:T(1,128)}', space=vmem, size = 0x12000, scoped, tag = 'internal scratch']
  #allocation2 [shape = 'bf16[5,512,512]{2,1,0:T(16,128)(2,1)}', space=vmem, size = 0x280000, scoped, tag = 'scratch operand']
  #allocation3 [shape = 's32[5]{0}', space=sflag, size = 0x14, scoped, tag = 'scratch operand']
  #allocation6 [shape = 's32[]', space=sflag, size = 0x4, offset = 0, fixed_abs, tag = 'sflag constant byte address 0x0 - dummy sync flag']
  #allocation8 [shape = 's32[]', space=sflag, size = 0x4, offset = 0, fixed_abs, tag = 'sflag constant byte address 0x0 - dummy sync flag']
  #allocation10 [shape = 's32[]', space=sflag, size = 0x4, offset = 0, fixed_abs, tag = 'sflag constant byte address 0x0 - dummy sync flag']
  #allocation12 [shape = 's32[]', space=sflag, size = 0x4, offset = 0, fixed_abs, tag = 'sflag constant byte address 0x0 - dummy sync flag']
  #allocation14 [shape = 's32[]', space=sflag, size = 0x4, offset = 0, fixed_abs, tag = 'sflag constant byte address 0x0 - dummy sync flag']
  %s0 = inlined_call_operand.smem [shape: u32[33], index: -1, kind: input, shape index: {}]
  %s1 = sld [smem:[%s0]]
  %s2 = scalar_lea.smem %s0, 1
  %s3 = sld [smem:[%s2]]
  %s4 = scalar_lea.smem %s0, 2
  %s5 = sld [smem:[%s4]]
  %s6 = scalar_lea.smem %s0, 3
  %s7 = sld [smem:[%s6]]
  %s8 = scalar_lea.smem %s0, 4
  %s9 = sld [smem:[%s8]]
  %s10 = scalar_lea.smem %s0, 5
  %s11 = sld [smem:[%s10]]
  %s12 = scalar_lea.smem %s0, 6
  %s13 = sld [smem:[%s12]]
  %s14 = scalar_lea.smem %s0, 7
  %s15 = sld [smem:[%s14]]
  %s16 = scalar_lea.smem %s0, 8
  %s17 = sld [smem:[%s16]]
  %s18 = scalar_lea.smem %s0, 9
  %s19 = sld [smem:[%s18]]
  %s20 = scalar_lea.smem %s0, 10
  %s21 = sld [smem:[%s20]]
  %s22 = scalar_lea.smem %s0, 11
  %s23 = sld [smem:[%s22]]
  %s24 = scalar_lea.smem %s0, 12
  %s25 = sld [smem:[%s24]]
  %s26 = scalar_lea.smem %s0, 13
  %s27 = sld [smem:[%s26]]
  %s28 = scalar_lea.smem %s0, 14
  %s29 = sld [smem:[%s28]]
  %s30 = scalar_lea.smem %s0, 15
  %s31 = sld [smem:[%s30]]
  %s32 = scalar_lea.smem %s0, 16
  %s33 = sld [smem:[%s32]]
  %s34 = scalar_lea.smem %s0, 17
  %s35 = sld [smem:[%s34]]
  %s36 = scalar_lea.smem %s0, 18
  %s37 = sld [smem:[%s36]]
  %s38 = scalar_lea.smem %s0, 19
  %s39 = sld [smem:[%s38]]
  %s40 = scalar_lea.smem %s0, 20
  %s41 = sld [smem:[%s40]]
  %s42 = scalar_lea.smem %s0, 21
  %s43 = sld [smem:[%s42]]
  %s44 = scalar_lea.smem %s0, 22
  %s45 = sld [smem:[%s44]]
  %s46 = scalar_lea.smem %s0, 23
  %s47 = sld [smem:[%s46]]
  %s48 = scalar_lea.smem %s0, 24
  %s49 = sld [smem:[%s48]]
  %s50 = scalar_lea.smem %s0, 25
  %s51 = sld [smem:[%s50]]
  %s52 = scalar_lea.smem %s0, 26
  %s53 = sld [smem:[%s52]]
  %s54 = scalar_lea.smem %s0, 27
  %s55 = sld [smem:[%s54]]
  %s56 = scalar_lea.smem %s0, 28
  %s57 = sld [smem:[%s56]]
  %s58 = scalar_lea.smem %s0, 29
  %s59 = sld [smem:[%s58]]
  %s60 = scalar_lea.smem %s0, 30
  %s61 = sld [smem:[%s60]]
  %s62 = scalar_lea.smem %s0, 31
  %s63 = sld [smem:[%s62]]
  %s64 = scalar_lea.smem %s0, 32
  %s65 = sld [smem:[%s64]]
  %66 = xla_tuple %s63, %s65
  %s67 = sld [smem:[#allocation0]]
  $region122: #{qz_forward.1} parent=0
    _
  %s69 = ssub.s32 1, %s67
  %s70 = scalar_select 0, %s69, %s67
  $region1: #{qz_forward.1} parent=0
    #allocation4 [shape = 'u8[4096]{0}', space=vmem, size = 0x1000, scoped, tag = 'output window, operand 0, single buffered']
    #allocation5 [shape = 's32[1]{0}', space=sflag, size = 0x4, scoped, tag = 'scoped memory for qz_forward.1']
    #allocation7 [shape = 'u32[9]{0}', space=smem, size = 0x24, scoped, tag = 'DMA stride descriptor']
    #allocation9 [shape = 'u32[9]{0}', space=smem, size = 0x24, scoped, tag = 'DMA stride descriptor']
    #allocation11 [shape = 'u32[9]{0}', space=smem, size = 0x24, scoped, tag = 'DMA stride descriptor']
    #allocation13 [shape = 'u32[9]{0}', space=smem, size = 0x24, scoped, tag = 'DMA stride descriptor']
    #allocation15 [shape = 'u32[9]{0}', space=smem, size = 0x24, scoped, tag = 'DMA stride descriptor']
    %71 = vsyncpa [#allocation5], 0
    // Predicated region
    $region2: #{qz_forward.1} parent=1 // pred_check
      _
    $region3: #{qz_forward.1} parent=1 // pred_check_branch
      %73 = sbr.rel (0) target = $region5
    $region4: #{qz_forward.1} parent=1 // pred_region
      _
    $region5: #{qz_forward.1} parent=1 // pred_fallthru
      _
    // Predicated region
    $region6: #{qz_forward.1} parent=1 // pred_check
      _
    $region7: #{qz_forward.1} parent=1 // pred_check_branch
      %75 = sbr.rel (0) target = $region9
    $region8: #{qz_forward.1} parent=1 // pred_region
      _
    $region9: #{qz_forward.1} parent=1 // pred_fallthru
      _
    // Predicated region
    $region10: #{qz_forward.1} parent=1 // pred_check
      _
    $region11: #{qz_forward.1} parent=1 // pred_check_branch
      %77 = sbr.rel (0) target = $region13
    $region12: #{qz_forward.1} parent=1 // pred_region
      _
    $region13: #{qz_forward.1} parent=1 // pred_fallthru
      _
    // Predicated region
    $region14: #{qz_forward.1} parent=1 // pred_check
      _
    $region15: #{qz_forward.1} parent=1 // pred_check_branch
      %79 = sbr.rel (0) target = $region17
    $region16: #{qz_forward.1} parent=1 // pred_region
      _
    $region17: #{qz_forward.1} parent=1 // pred_fallthru
      _
    // Predicated region
    $region18: #{qz_forward.1} parent=1 // pred_check
      _
    $region19: #{qz_forward.1} parent=1 // pred_check_branch
      %81 = sbr.rel (0) target = $region21
    $region20: #{qz_forward.1} parent=1 // pred_region
      _
    $region21: #{qz_forward.1} parent=1 // pred_fallthru
      _
    // Predicated region
    $region22: #{qz_forward.1} parent=1 // pred_check
      _
    $region23: #{qz_forward.1} parent=1 // pred_check_branch
      %83 = sbr.rel (0) target = $region25
    $region24: #{qz_forward.1} parent=1 // pred_region
      _
    $region25: #{qz_forward.1} parent=1 // pred_fallthru
      _
    // Predicated region
    $region26: #{qz_forward.1} parent=1 // pred_check
      _
    $region27: #{qz_forward.1} parent=1 // pred_check_branch
      %85 = sbr.rel (0) target = $region29
    $region28: #{qz_forward.1} parent=1 // pred_region
      _
    $region29: #{qz_forward.1} parent=1 // pred_fallthru
      _
    // Predicated region
    $region30: #{qz_forward.1} parent=1 // pred_check
      _
    $region31: #{qz_forward.1} parent=1 // pred_check_branch
      %87 = sbr.rel (0) target = $region33
    $region32: #{qz_forward.1} parent=1 // pred_region
      _
    $region33: #{qz_forward.1} parent=1 // pred_fallthru
      _
    // Predicated region
    $region34: #{qz_forward.1} parent=1 // pred_check
      _
    $region35: #{qz_forward.1} parent=1 // pred_check_branch
      %89 = sbr.rel (0) target = $region37
    $region36: #{qz_forward.1} parent=1 // pred_region
      _
    $region37: #{qz_forward.1} parent=1 // pred_fallthru
      _
    // Predicated region
    $region38: #{qz_forward.1} parent=1 // pred_check
      _
    $region39: #{qz_forward.1} parent=1 // pred_check_branch
      %91 = sbr.rel (0) target = $region41
    $region40: #{qz_forward.1} parent=1 // pred_region
      _
    $region41: #{qz_forward.1} parent=1 // pred_fallthru
      _
    // Predicated region
    $region42: #{qz_forward.1} parent=1 // pred_check
      _
    $region43: #{qz_forward.1} parent=1 // pred_check_branch
      %93 = sbr.rel (0) target = $region45
    $region44: #{qz_forward.1} parent=1 // pred_region
      _
    $region45: #{qz_forward.1} parent=1 // pred_fallthru
      _
    // Predicated region
    $region46: #{qz_forward.1} parent=1 // pred_check
      _
    $region47: #{qz_forward.1} parent=1 // pred_check_branch
      %95 = sbr.rel (0) target = $region49
    $region48: #{qz_forward.1} parent=1 // pred_region
      _
    $region49: #{qz_forward.1} parent=1 // pred_fallthru
      _
    // Predicated region
    $region50: #{qz_forward.1} parent=1 // pred_check
      _
    $region51: #{qz_forward.1} parent=1 // pred_check_branch
      %97 = sbr.rel (0) target = $region53
    $region52: #{qz_forward.1} parent=1 // pred_region
      _
    $region53: #{qz_forward.1} parent=1 // pred_fallthru
      _
    // Predicated region
    $region54: #{qz_forward.1} parent=1 // pred_check
      _
    $region55: #{qz_forward.1} parent=1 // pred_check_branch
      %99 = sbr.rel (0) target = $region57
    $region56: #{qz_forward.1} parent=1 // pred_region
      _
    $region57: #{qz_forward.1} parent=1 // pred_fallthru
      _
    // Predicated region
    $region58: #{qz_forward.1} parent=1 // pred_check
      _
    $region59: #{qz_forward.1} parent=1 // pred_check_branch
      %101 = sbr.rel (0) target = $region61
    $region60: #{qz_forward.1} parent=1 // pred_region
      _
    $region61: #{qz_forward.1} parent=1 // pred_fallthru
      _
    // Predicated region
    $region62: #{qz_forward.1} parent=1 // pred_check
      _
    $region63: #{qz_forward.1} parent=1 // pred_check_branch
      %103 = sbr.rel (0) target = $region65
    $region64: #{qz_forward.1} parent=1 // pred_region
      _
    $region65: #{qz_forward.1} parent=1 // pred_fallthru
      _
    // Predicated region
    $region66: #{qz_forward.1} parent=1 // pred_check
      _
    $region67: #{qz_forward.1} parent=1 // pred_check_branch
      %105 = sbr.rel (0) target = $region69
    $region68: #{qz_forward.1} parent=1 // pred_region
      _
    $region69: #{qz_forward.1} parent=1 // pred_fallthru
      _
    // Predicated region
    $region70: #{qz_forward.1} parent=1 // pred_check
      _
    $region71: #{qz_forward.1} parent=1 // pred_check_branch
      %107 = sbr.rel (0) target = $region73
    $region72: #{qz_forward.1} parent=1 // pred_region
      _
    $region73: #{qz_forward.1} parent=1 // pred_fallthru
      _
    // Predicated region
    $region74: #{qz_forward.1} parent=1 // pred_check
      _
    $region75: #{qz_forward.1} parent=1 // pred_check_branch
      %109 = sbr.rel (0) target = $region77
    $region76: #{qz_forward.1} parent=1 // pred_region
      _
    $region77: #{qz_forward.1} parent=1 // pred_fallthru
      _
    // Predicated region
    $region78: #{qz_forward.1} parent=1 // pred_check
      _
    $region79: #{qz_forward.1} parent=1 // pred_check_branch
      %111 = sbr.rel (0) target = $region81
    $region80: #{qz_forward.1} parent=1 // pred_region
      _
    $region81: #{qz_forward.1} parent=1 // pred_fallthru
      _
    // Predicated region
    $region82: #{qz_forward.1} parent=1 // pred_check
      _
    $region83: #{qz_forward.1} parent=1 // pred_check_branch
      %113 = sbr.rel (0) target = $region85
    $region84: #{qz_forward.1} parent=1 // pred_region
      _
    $region85: #{qz_forward.1} parent=1 // pred_fallthru
      _
    // Predicated region
    $region86: #{qz_forward.1} parent=1 // pred_check
      _
    $region87: #{qz_forward.1} parent=1 // pred_check_branch
      %115 = sbr.rel (0) target = $region89
    $region88: #{qz_forward.1} parent=1 // pred_region
      _
    $region89: #{qz_forward.1} parent=1 // pred_fallthru
      _
    // Predicated region
    $region90: #{qz_forward.1} parent=1 // pred_check
      _
    $region91: #{qz_forward.1} parent=1 // pred_check_branch
      %117 = sbr.rel (0) target = $region93
    $region92: #{qz_forward.1} parent=1 // pred_region
      _
    $region93: #{qz_forward.1} parent=1 // pred_fallthru
      _
    // Predicated region
    $region94: #{qz_forward.1} parent=1 // pred_check
      _
    $region95: #{qz_forward.1} parent=1 // pred_check_branch
      %119 = sbr.rel (0) target = $region97
    $region96: #{qz_forward.1} parent=1 // pred_region
      _
    $region97: #{qz_forward.1} parent=1 // pred_fallthru
      _
    // Predicated region
    $region98: #{qz_forward.1} parent=1 // pred_check
      _
    $region99: #{qz_forward.1} parent=1 // pred_check_branch
      %121 = sbr.rel (0) target = $region101
    $region100: #{qz_forward.1} parent=1 // pred_region
      _
    $region101: #{qz_forward.1} parent=1 // pred_fallthru
      _
    // Predicated region
    $region102: #{qz_forward.1} parent=1 // pred_check
      _
    $region103: #{qz_forward.1} parent=1 // pred_check_branch
      %123 = sbr.rel (0) target = $region105
    $region104: #{qz_forward.1} parent=1 // pred_region
      _
    $region105: #{qz_forward.1} parent=1 // pred_fallthru
      _
    %s126 = sshll.u32 1, 14
    %s127 = sxor.u32 4294967295, %s126
    %s129 = sld [smem:[#allocation0]]
    %s130 = sadd.s32 2, %s129
    %s132 = sshll.u32 7, 26
    %s133 = sxor.u32 4294967295, %s132
    %s134 = sand.u32 0, %s133
    %s135 = sshll.u32 %s130, 26
    %s136 = sor.u32 %s134, %s135
    %s137 = sshll.u32 [#allocation2], 4
    %s138 = int_to_ptr.vmem [resolvable:$true] %s137
    %141 = sst [smem:[#allocation7]] 512
    %s142 = scalar_lea.smem [#allocation7], 1
    %143 = sst [smem:[%s142]] 512
    %s144 = scalar_lea.smem [#allocation7], 2
    %145 = sst [smem:[%s144]] 4
    %s146 = scalar_lea.smem [#allocation7], 3
    %147 = sst [smem:[%s146]] 64
    %s148 = scalar_lea.smem [#allocation7], 4
    %149 = sst [smem:[%s148]] 128
    %s150 = scalar_lea.smem [#allocation7], 5
    %151 = sst [smem:[%s150]] 2
    %s152 = scalar_lea.smem [#allocation7], 6
    %153 = sst [smem:[%s152]] 256
    %s154 = scalar_lea.smem [#allocation7], 7
    %155 = sst [smem:[%s154]] 64
    %s156 = scalar_lea.smem [#allocation7], 8
    %157 = sst [smem:[%s156]] 4
    %159 = dma.general %s53, 16384, %s138, [#allocation3], [#allocation6], [#allocation7], %s136, 0
    %s160 = scalar_lea.vmem [#allocation2], 1024
    %s161 = scalar_lea.sflag [#allocation3], 1
    %s163 = sshll.u32 1, 14
    %s164 = sxor.u32 4294967295, %s163
    %s166 = sadd.s32 2, %s129
    %s168 = sshll.u32 7, 26
    %s169 = sxor.u32 4294967295, %s168
    %s170 = sand.u32 0, %s169
    %s171 = sshll.u32 %s166, 26
    %s172 = sor.u32 %s170, %s171
    %s173 = sshll.u32 %s160, 4
    %s174 = int_to_ptr.vmem [resolvable:$true] %s173
    %177 = sst [smem:[#allocation9]] 512
    %s178 = scalar_lea.smem [#allocation9], 1
    %179 = sst [smem:[%s178]] 512
    %s180 = scalar_lea.smem [#allocation9], 2
    %181 = sst [smem:[%s180]] 4
    %s182 = scalar_lea.smem [#allocation9], 3
    %183 = sst [smem:[%s182]] 64
    %s184 = scalar_lea.smem [#allocation9], 4
    %185 = sst [smem:[%s184]] 128
    %s186 = scalar_lea.smem [#allocation9], 5
    %187 = sst [smem:[%s186]] 2
    %s188 = scalar_lea.smem [#allocation9], 6
    %189 = sst [smem:[%s188]] 256
    %s190 = scalar_lea.smem [#allocation9], 7
    %191 = sst [smem:[%s190]] 64
    %s192 = scalar_lea.smem [#allocation9], 8
    %193 = sst [smem:[%s192]] 4
    %195 = dma.general %s55, 16384, %s174, %s161, [#allocation8], [#allocation9], %s172, 0
    %s196 = scalar_lea.vmem [#allocation2], 2048
    %s197 = scalar_lea.sflag [#allocation3], 2
    %s199 = sshll.u32 1, 14
    %s200 = sxor.u32 4294967295, %s199
    %s202 = sadd.s32 2, %s129
    %s204 = sshll.u32 7, 26
    %s205 = sxor.u32 4294967295, %s204
    %s206 = sand.u32 0, %s205
    %s207 = sshll.u32 %s202, 26
    %s208 = sor.u32 %s206, %s207
    %s209 = sshll.u32 %s196, 4
    %s210 = int_to_ptr.vmem [resolvable:$true] %s209
    %213 = sst [smem:[#allocation11]] 512
    %s214 = scalar_lea.smem [#allocation11], 1
    %215 = sst [smem:[%s214]] 512
    %s216 = scalar_lea.smem [#allocation11], 2
    %217 = sst [smem:[%s216]] 4
    %s218 = scalar_lea.smem [#allocation11], 3
    %219 = sst [smem:[%s218]] 64
    %s220 = scalar_lea.smem [#allocation11], 4
    %221 = sst [smem:[%s220]] 128
    %s222 = scalar_lea.smem [#allocation11], 5
    %223 = sst [smem:[%s222]] 2
    %s224 = scalar_lea.smem [#allocation11], 6
    %225 = sst [smem:[%s224]] 256
    %s226 = scalar_lea.smem [#allocation11], 7
    %227 = sst [smem:[%s226]] 64
    %s228 = scalar_lea.smem [#allocation11], 8
    %229 = sst [smem:[%s228]] 4
    %231 = dma.general %s57, 16384, %s210, %s197, [#allocation10], [#allocation11], %s208, 0
    %s232 = scalar_lea.vmem [#allocation2], 3072
    %s233 = scalar_lea.sflag [#allocation3], 3
    %s235 = sshll.u32 1, 14
    %s236 = sxor.u32 4294967295, %s235
    %s238 = sadd.s32 2, %s129
    %s240 = sshll.u32 7, 26
    %s241 = sxor.u32 4294967295, %s240
    %s242 = sand.u32 0, %s241
    %s243 = sshll.u32 %s238, 26
    %s244 = sor.u32 %s242, %s243
    %s245 = sshll.u32 %s232, 4
    %s246 = int_to_ptr.vmem [resolvable:$true] %s245
    %249 = sst [smem:[#allocation13]] 512
    %s250 = scalar_lea.smem [#allocation13], 1
    %251 = sst [smem:[%s250]] 512
    %s252 = scalar_lea.smem [#allocation13], 2
    %253 = sst [smem:[%s252]] 4
    %s254 = scalar_lea.smem [#allocation13], 3
    %255 = sst [smem:[%s254]] 64
    %s256 = scalar_lea.smem [#allocation13], 4
    %257 = sst [smem:[%s256]] 128
    %s258 = scalar_lea.smem [#allocation13], 5
    %259 = sst [smem:[%s258]] 2
    %s260 = scalar_lea.smem [#allocation13], 6
    %261 = sst [smem:[%s260]] 256
    %s262 = scalar_lea.smem [#allocation13], 7
    %263 = sst [smem:[%s262]] 64
    %s264 = scalar_lea.smem [#allocation13], 8
    %265 = sst [smem:[%s264]] 4
    %267 = dma.general %s59, 16384, %s246, %s233, [#allocation12], [#allocation13], %s244, 0
    %s268 = scalar_lea.vmem [#allocation2], 4096
    %s269 = scalar_lea.sflag [#allocation3], 4
    %s271 = sshll.u32 1, 14
    %s272 = sxor.u32 4294967295, %s271
    %s274 = sadd.s32 2, %s129
    %s276 = sshll.u32 7, 26
    %s277 = sxor.u32 4294967295, %s276
    %s278 = sand.u32 0, %s277
    %s279 = sshll.u32 %s274, 26
    %s280 = sor.u32 %s278, %s279
    %s281 = sshll.u32 %s268, 4
    %s282 = int_to_ptr.vmem [resolvable:$true] %s281
    %285 = sst [smem:[#allocation15]] 512
    %s286 = scalar_lea.smem [#allocation15], 1
    %287 = sst [smem:[%s286]] 512
    %s288 = scalar_lea.smem [#allocation15], 2
    %289 = sst [smem:[%s288]] 4
    %s290 = scalar_lea.smem [#allocation15], 3
    %291 = sst [smem:[%s290]] 64
    %s292 = scalar_lea.smem [#allocation15], 4
    %293 = sst [smem:[%s292]] 128
    %s294 = scalar_lea.smem [#allocation15], 5
    %295 = sst [smem:[%s294]] 2
    %s296 = scalar_lea.smem [#allocation15], 6
    %297 = sst [smem:[%s296]] 256
    %s298 = scalar_lea.smem [#allocation15], 7
    %299 = sst [smem:[%s298]] 64
    %s300 = scalar_lea.smem [#allocation15], 8
    %301 = sst [smem:[%s300]] 4
    %303 = dma.general %s61, 16384, %s282, %s269, [#allocation14], [#allocation15], %s280, 0
    %v304 = vlaneseq
    %v305 = vand.u32 %v304, 127
    %v306 = vadd.s32 %v305, 128
    %v307 = vadd.s32 %v305, 256
    %v308 = vadd.s32 %v305, 384
    %v309 = vand.u32 %v305, 15
    %v310 = vand.u32 %v306, 15
    %v311 = vand.u32 %v307, 15
    %v312 = vand.u32 %v308, 15
    %v313 = vshra.s32 %v305, 4
    %v314 = vshra.s32 %v306, 4
    %v315 = vshra.s32 %v307, 4
    %v316 = vshra.s32 %v308, 4
    %v317 = vand.u32 %v313, 15
    %v318 = vand.u32 %v314, 15
    %v319 = vand.u32 %v315, 15
    %v320 = vand.u32 %v316, 15
    %v321 = vld [vmem:[%s1] sm:$0xff]
    %v322 = vld [vmem:[%s1 + $0x8] sm:$0xff]
    %v323 = vld [vmem:[%s1 + $0x10] sm:$0xff]
    %v324 = vld [vmem:[%s1 + $0x18] sm:$0xff]
    %v325 = vpack.c.bf16 %v321, %v321
    %v326 = vpack.c.bf16 %v322, %v322
    %v327 = vpack.c.bf16 %v323, %v323
    %v328 = vpack.c.bf16 %v324, %v324
    %v334 = vrot.slane %v325, 4
    %v335 = vrot.slane %v326, 4
    %v336 = vrot.slane %v327, 4
    %v337 = vrot.slane %v328, 4
    %v338 = vrot.slane 0, 4
    %339 = vrot.lane.b32.xlu0 %v334, 127
    %v340 = vpop.permute.xlu0 %339
    %341 = vrot.lane.b32.xlu0 %v335, 127
    %v342 = vpop.permute.xlu0 %341
    %343 = vrot.lane.b32.xlu0 %v336, 127
    %v344 = vpop.permute.xlu0 %343
    %345 = vrot.lane.b32.xlu0 %v337, 127
    %v346 = vpop.permute.xlu0 %345
    %347 = vrot.lane.b32.xlu0 %v338, 127
    %v348 = vpop.permute.xlu0 %347
    %vm349 = vcmask 1039360
    %v350 = vsel %vm349, %v340, %v342
    %v351 = vsel %vm349, %v342, %v344
    %v352 = vsel %vm349, %v344, %v346
    %v353 = vsel %vm349, %v346, %v348
    %354 = vrot.lane.b32.xlu0 %v325, 126
    %v355 = vpop.permute.xlu0 %354
    %356 = vrot.lane.b32.xlu0 %v326, 126
    %v357 = vpop.permute.xlu0 %356
    %358 = vrot.lane.b32.xlu0 %v327, 126
    %v359 = vpop.permute.xlu0 %358
    %360 = vrot.lane.b32.xlu0 %v328, 126
    %v361 = vpop.permute.xlu0 %360
    %362 = vrot.lane.b32.xlu0 0, 126
    %v363 = vpop.permute.xlu0 %362
    %vm364 = vcmask 1031168
    %v365 = vsel %vm364, %v355, %v357
    %v366 = vsel %vm364, %v357, %v359
    %v367 = vsel %vm364, %v359, %v361
    %v368 = vsel %vm364, %v361, %v363
    %369 = vrot.lane.b32.xlu0 %v334, 112
    %v370 = vpop.permute.xlu0 %369
    %371 = vrot.lane.b32.xlu0 %v335, 112
    %v372 = vpop.permute.xlu0 %371
    %373 = vrot.lane.b32.xlu0 %v336, 112
    %v374 = vpop.permute.xlu0 %373
    %375 = vrot.lane.b32.xlu0 %v337, 112
    %v376 = vpop.permute.xlu0 %375
    %377 = vrot.lane.b32.xlu0 %v338, 112
    %v378 = vpop.permute.xlu0 %377
    %vm379 = vcmask 916480
    %v380 = vsel %vm379, %v370, %v372
    %v381 = vsel %vm379, %v372, %v374
    %v382 = vsel %vm379, %v374, %v376
    %v383 = vsel %vm379, %v376, %v378
    %384 = vrot.lane.b32.xlu0 %v325, 111
    %v385 = vpop.permute.xlu0 %384
    %386 = vrot.lane.b32.xlu0 %v326, 111
    %v387 = vpop.permute.xlu0 %386
    %388 = vrot.lane.b32.xlu0 %v327, 111
    %v389 = vpop.permute.xlu0 %388
    %390 = vrot.lane.b32.xlu0 %v328, 111
    %v391 = vpop.permute.xlu0 %390
    %392 = vrot.lane.b32.xlu0 0, 111
    %v393 = vpop.permute.xlu0 %392
    %vm394 = vcmask 908288
    %v395 = vsel %vm394, %v385, %v387
    %v396 = vsel %vm394, %v387, %v389
    %v397 = vsel %vm394, %v389, %v391
    %v398 = vsel %vm394, %v391, %v393
    %399 = vrot.lane.b32.xlu0 %v334, 110
    %v400 = vpop.permute.xlu0 %399
    %401 = vrot.lane.b32.xlu0 %v335, 110
    %v402 = vpop.permute.xlu0 %401
    %403 = vrot.lane.b32.xlu0 %v336, 110
    %v404 = vpop.permute.xlu0 %403
    %405 = vrot.lane.b32.xlu0 %v337, 110
    %v406 = vpop.permute.xlu0 %405
    %407 = vrot.lane.b32.xlu0 %v338, 110
    %v408 = vpop.permute.xlu0 %407
    %vm409 = vcmask 900096
    %v410 = vsel %vm409, %v400, %v402
    %v411 = vsel %vm409, %v402, %v404
    %v412 = vsel %vm409, %v404, %v406
    %v413 = vsel %vm409, %v406, %v408
    %414 = vrot.lane.b32.xlu0 %v325, 96
    %v415 = vpop.permute.xlu0 %414
    %416 = vrot.lane.b32.xlu0 %v326, 96
    %v417 = vpop.permute.xlu0 %416
    %418 = vrot.lane.b32.xlu0 %v327, 96
    %v419 = vpop.permute.xlu0 %418
    %420 = vrot.lane.b32.xlu0 %v328, 96
    %v421 = vpop.permute.xlu0 %420
    %422 = vrot.lane.b32.xlu0 0, 96
    %v423 = vpop.permute.xlu0 %422
    %vm424 = vcmask 785408
    %v425 = vsel %vm424, %v415, %v417
    %v426 = vsel %vm424, %v417, %v419
    %v427 = vsel %vm424, %v419, %v421
    %v428 = vsel %vm424, %v421, %v423
    %429 = vrot.lane.b32.xlu0 %v334, 95
    %v430 = vpop.permute.xlu0 %429
    %431 = vrot.lane.b32.xlu0 %v335, 95
    %v432 = vpop.permute.xlu0 %431
    %433 = vrot.lane.b32.xlu0 %v336, 95
    %v434 = vpop.permute.xlu0 %433
    %435 = vrot.lane.b32.xlu0 %v337, 95
    %v436 = vpop.permute.xlu0 %435
    %437 = vrot.lane.b32.xlu0 %v338, 95
    %v438 = vpop.permute.xlu0 %437
    %vm439 = vcmask 777216
    %v440 = vsel %vm439, %v430, %v432
    %v441 = vsel %vm439, %v432, %v434
    %v442 = vsel %vm439, %v434, %v436
    %v443 = vsel %vm439, %v436, %v438
    %444 = vrot.lane.b32.xlu0 %v325, 94
    %v445 = vpop.permute.xlu0 %444
    %446 = vrot.lane.b32.xlu0 %v326, 94
    %v447 = vpop.permute.xlu0 %446
    %448 = vrot.lane.b32.xlu0 %v327, 94
    %v449 = vpop.permute.xlu0 %448
    %450 = vrot.lane.b32.xlu0 %v328, 94
    %v451 = vpop.permute.xlu0 %450
    %452 = vrot.lane.b32.xlu0 0, 94
    %v453 = vpop.permute.xlu0 %452
    %vm454 = vcmask 769024
    %v455 = vsel %vm454, %v445, %v447
    %v456 = vsel %vm454, %v447, %v449
    %v457 = vsel %vm454, %v449, %v451
    %v458 = vsel %vm454, %v451, %v453
    %vm459 = vcmask 1043456
    %v462 = vsel %vm459, %v325, %v350
    %v466 = vsel %vm459, %v326, %v351
    %v470 = vsel %vm459, %v327, %v352
    %v474 = vsel %vm459, %v328, %v353
    %v478 = vsel %vm459, %v365, %v380
    %v482 = vsel %vm459, %v366, %v381
    %v486 = vsel %vm459, %v367, %v382
    %v490 = vsel %vm459, %v368, %v383
    %v494 = vsel %vm459, %v395, %v410
    %v498 = vsel %vm459, %v396, %v411
    %v502 = vsel %vm459, %v397, %v412
    %v506 = vsel %vm459, %v398, %v413
    %v510 = vsel %vm459, %v425, %v440
    %v514 = vsel %vm459, %v426, %v441
    %v518 = vsel %vm459, %v427, %v442
    %v522 = vsel %vm459, %v428, %v443
    %v524 = vld [vmem:[%s9] sm:$0xf]
    %v525 = vld [vmem:[%s11] sm:$0xff]
    %527 = vset.pattern.permute.xlu0 0
    %528 = vperm.xlu0 %527, %v525
    %v529 = vpop.permute.xlu0 %528
    %vm531 = vcmask 588800
    %v533 = vsel %vm531, %v524, 0
    %v536 = vsel %vm459, %v455, 0
    %v539 = vsel %vm459, %v456, 0
    %v542 = vsel %vm459, %v457, 0
    %v545 = vsel %vm459, %v458, 0
    %547 = vmatprep.subr.bf16.mxu0 %v466
    %548 = vmatpush1.bf16.msra.mxu0 %v462
    %549 = vmatprep.subr.bf16.mxu0 %v482
    %550 = vmatpush1.bf16.msra.mxu0 %v478
    %551 = vmatprep.subr.bf16.mxu0 %v498
    %552 = vmatpush1.bf16.msra.mxu0 %v494
    %553 = vmatprep.subr.bf16.mxu0 %v514
    %554 = vmatpush1.bf16.msra.mxu0 %v510
    %555 = vmatprep.subr.bf16.mxu0 %v539
    %556 = vmatpush1.bf16.msra.mxu0 %v536
    %557 = vmatprep.subr.bf16.mxu0 0
    %558 = vmatpush1.bf16.msra.mxu0 0
    %559 = vmatprep.subr.bf16.mxu0 0
    %560 = vmatpush1.bf16.msra.mxu0 0
    %561 = vmatprep.subr.bf16.mxu0 0
    %562 = vmatpush1.bf16.msra.mxu0 0
    %563 = vmatprep.subr.bf16.mxu0 0
    %564 = vmatpush1.bf16.msra.mxu0 0
    %565 = vmatprep.subr.bf16.mxu0 0
    %566 = vmatpush1.bf16.msra.mxu0 0
    %567 = vmatprep.subr.bf16.mxu0 0
    %568 = vmatpush1.bf16.msra.mxu0 0
    %569 = vmatprep.subr.bf16.mxu0 0
    %570 = vmatpush1.bf16.msra.mxu0 0
    %571 = vmatprep.subr.bf16.mxu0 0
    %572 = vmatpush1.bf16.msra.mxu0 0
    %573 = vmatprep.subr.bf16.mxu0 0
    %574 = vmatpush1.bf16.msra.mxu0 0
    %575 = vmatprep.subr.bf16.mxu0 0
    %576 = vmatpush1.bf16.msra.mxu0 0
    %577 = vmatprep.subr.bf16.mxu0 0
    %578 = vmatpush1.bf16.msra.mxu0 0
    %579 = vmatprep.mubr.bf16.mxu0 0
    %580 = vmatmul.mubr.bf16.gmra.mrb[0].mxu0 %v533
    %v581 = vpop.f32.mrb[0].mxu0
    %v582 = vadd.f32 %v529, %v581
    %v583 = vpop.f32.mrb[0].mxu0
    %v584 = vadd.f32 %v529, %v583
    %v585 = vpop.f32.mrb[0].mxu0
    %v586 = vpop.f32.mrb[0].mxu0
    %587 = vdwg.mxu0
    %588 = vmatprep.subr.bf16.mxu0 %v474
    %589 = vmatpush1.bf16.msra.mxu0 %v470
    %590 = vmatprep.subr.bf16.mxu0 %v490
    %591 = vmatpush1.bf16.msra.mxu0 %v486
    %592 = vmatprep.subr.bf16.mxu0 %v506
    %593 = vmatpush1.bf16.msra.mxu0 %v502
    %594 = vmatprep.subr.bf16.mxu0 %v522
    %595 = vmatpush1.bf16.msra.mxu0 %v518
    %596 = vmatprep.subr.bf16.mxu0 %v545
    %597 = vmatpush1.bf16.msra.mxu0 %v542
    %598 = vmatprep.subr.bf16.mxu0 0
    %599 = vmatpush1.bf16.msra.mxu0 0
    %600 = vmatprep.subr.bf16.mxu0 0
    %601 = vmatpush1.bf16.msra.mxu0 0
    %602 = vmatprep.subr.bf16.mxu0 0
    %603 = vmatpush1.bf16.msra.mxu0 0
    %604 = vmatprep.subr.bf16.mxu0 0
    %605 = vmatpush1.bf16.msra.mxu0 0
    %606 = vmatprep.subr.bf16.mxu0 0
    %607 = vmatpush1.bf16.msra.mxu0 0
    %608 = vmatprep.subr.bf16.mxu0 0
    %609 = vmatpush1.bf16.msra.mxu0 0
    %610 = vmatprep.subr.bf16.mxu0 0
    %611 = vmatpush1.bf16.msra.mxu0 0
    %612 = vmatprep.subr.bf16.mxu0 0
    %613 = vmatpush1.bf16.msra.mxu0 0
    %614 = vmatprep.subr.bf16.mxu0 0
    %615 = vmatpush1.bf16.msra.mxu0 0
    %616 = vmatprep.subr.bf16.mxu0 0
    %617 = vmatpush1.bf16.msra.mxu0 0
    %618 = vmatprep.subr.bf16.mxu0 0
    %619 = vmatpush1.bf16.msra.mxu0 0
    %620 = vmatprep.mubr.bf16.mxu0 0
    %621 = vmatmul.mubr.bf16.gmra.mrb[0].mxu0 %v533
    %v622 = vpop.f32.mrb[0].mxu0
    %v623 = vadd.f32 %v529, %v622
    %v624 = vpop.f32.mrb[0].mxu0
    %v625 = vadd.f32 %v529, %v624
    %v626 = vpop.f32.mrb[0].mxu0
    %v627 = vpop.f32.mrb[0].mxu0
    %628 = vdwg.mxu0
    %vm629 = vcmp.lt.s32.totalorder %v309, 14
    %vm630 = vcmp.lt.s32.totalorder %v310, 14
    %vm631 = vcmp.lt.s32.totalorder %v311, 14
    %vm632 = vcmp.lt.s32.totalorder %v312, 14
    %vm633 = vcmp.lt.s32.totalorder %v317, 14
    %vm634 = vcmp.lt.s32.totalorder %v318, 14
    %vm635 = vcmp.lt.s32.totalorder %v319, 14
    %vm636 = vcmp.lt.s32.totalorder %v320, 14
    %vm637 = vmand %vm629, %vm633
    %vm638 = vmand %vm630, %vm634
    %vm639 = vmand %vm631, %vm635
    %vm640 = vmand %vm632, %vm636
    %v641 = vsel %vm637, 1, 0
    %v642 = vsel %vm638, 1, 0
    %v643 = vsel %vm639, 1, 0
    %v644 = vsel %vm640, 1, 0
    %v645 = vcvt.s32.f32 %v641
    %v646 = vcvt.s32.f32 %v642
    %v647 = vcvt.s32.f32 %v643
    %v648 = vcvt.s32.f32 %v644
    %v649 = vmul.f32 %v582, %v645
    %v650 = vmul.f32 %v584, %v646
    %v651 = vmul.f32 %v623, %v647
    %v652 = vmul.f32 %v625, %v648
    %v653 = vadd.f32 %v649, %v650
    %v654 = vadd.f32 %v653, %v651
    %v655 = vadd.f32 %v654, %v652
    %656 = vadd.xlane.f32.xlu0 %v655
    %v657 = vpop.xlane.xlu0 %656
    %v658 = vmul.f32 %v657, 0.0025510204
    %v659 = vsub.f32 %v582, %v658
    %v660 = vsub.f32 %v584, %v658
    %v661 = vsub.f32 %v623, %v658
    %v662 = vsub.f32 %v625, %v658
    %v663 = vmul.f32 %v659, %v645
    %v664 = vmul.f32 %v660, %v646
    %v665 = vmul.f32 %v661, %v647
    %v666 = vmul.f32 %v662, %v648
    %v667 = vmul.f32 %v663, %v663
    %v668 = vmul.f32 %v664, %v664
    %v669 = vmul.f32 %v665, %v665
    %v670 = vmul.f32 %v666, %v666
    %v671 = vadd.f32 %v667, %v668
    %v672 = vadd.f32 %v671, %v669
    %v673 = vadd.f32 %v672, %v670
    %674 = vadd.xlane.f32.xlu0 %v673
    %v675 = vpop.xlane.xlu0 %674
    %v676 = vmul.f32 %v675, 0.0025510204
    %v677 = vld [vmem:[%s13] sm:$0xff]
    %679 = vset.pattern.permute.xlu0 0
    %680 = vperm.xlu0 %679, %v677
    %v681 = vpop.permute.xlu0 %680
    %v683 = vmul.f32 %v681, %v659
    %v684 = vmul.f32 %v681, %v660
    %v685 = vmul.f32 %v681, %v661
    %v686 = vmul.f32 %v681, %v662
    %v687 = vadd.f32 %v676, 1e-05
    %v688 = vrsqrt.pop %v687
    %v689 = vmul.f32 %v683, %v688
    %v690 = vmul.f32 %v684, %v688
    %v691 = vmul.f32 %v685, %v688
    %v692 = vmul.f32 %v686, %v688
    %v693 = vld [vmem:[%s15] sm:$0xff]
    %695 = vset.pattern.permute.xlu0 0
    %696 = vperm.xlu0 %695, %v693
    %v697 = vpop.permute.xlu0 %696
    %v699 = vadd.f32 %v689, %v697
    %v700 = vadd.f32 %v690, %v697
    %v701 = vadd.f32 %v691, %v697
    %v702 = vadd.f32 %v692, %v697
    %v703 = vmul.f32 %v699, %v645
    %v704 = vmul.f32 %v700, %v646
    %v705 = vmul.f32 %v701, %v647
    %v706 = vmul.f32 %v702, %v648
    %v707 = vpack.c.bf16 %v703, %v703
    %v708 = vpack.c.bf16 %v704, %v704
    %v709 = vpack.c.bf16 %v705, %v705
    %v710 = vpack.c.bf16 %v706, %v706
    %v715 = vrot.slane %v707, 4
    %v716 = vrot.slane %v708, 4
    %v717 = vrot.slane %v709, 4
    %v718 = vrot.slane %v710, 4
    %719 = vrot.lane.b32.xlu0 %v715, 127
    %v720 = vpop.permute.xlu0 %719
    %721 = vrot.lane.b32.xlu0 %v716, 127
    %v722 = vpop.permute.xlu0 %721
    %723 = vrot.lane.b32.xlu0 %v717, 127
    %v724 = vpop.permute.xlu0 %723
    %725 = vrot.lane.b32.xlu0 %v718, 127
    %v726 = vpop.permute.xlu0 %725
    %v727 = vsel %vm349, %v720, %v722
    %v728 = vsel %vm349, %v722, %v724
    %v729 = vsel %vm349, %v724, %v726
    %v730 = vsel %vm349, %v726, %v348
    %731 = vrot.lane.b32.xlu0 %v707, 126
    %v732 = vpop.permute.xlu0 %731
    %733 = vrot.lane.b32.xlu0 %v708, 126
    %v734 = vpop.permute.xlu0 %733
    %735 = vrot.lane.b32.xlu0 %v709, 126
    %v736 = vpop.permute.xlu0 %735
    %737 = vrot.lane.b32.xlu0 %v710, 126
    %v738 = vpop.permute.xlu0 %737
    %v739 = vsel %vm364, %v732, %v734
    %v740 = vsel %vm364, %v734, %v736
    %v741 = vsel %vm364, %v736, %v738
    %v742 = vsel %vm364, %v738, %v363
    %743 = vrot.lane.b32.xlu0 %v715, 112
    %v744 = vpop.permute.xlu0 %743
    %745 = vrot.lane.b32.xlu0 %v716, 112
    %v746 = vpop.permute.xlu0 %745
    %747 = vrot.lane.b32.xlu0 %v717, 112
    %v748 = vpop.permute.xlu0 %747
    %749 = vrot.lane.b32.xlu0 %v718, 112
    %v750 = vpop.permute.xlu0 %749
    %v751 = vsel %vm379, %v744, %v746
    %v752 = vsel %vm379, %v746, %v748
    %v753 = vsel %vm379, %v748, %v750
    %v754 = vsel %vm379, %v750, %v378
    %755 = vrot.lane.b32.xlu0 %v707, 111
    %v756 = vpop.permute.xlu0 %755
    %757 = vrot.lane.b32.xlu0 %v708, 111
    %v758 = vpop.permute.xlu0 %757
    %759 = vrot.lane.b32.xlu0 %v709, 111
    %v760 = vpop.permute.xlu0 %759
    %761 = vrot.lane.b32.xlu0 %v710, 111
    %v762 = vpop.permute.xlu0 %761
    %v763 = vsel %vm394, %v756, %v758
    %v764 = vsel %vm394, %v758, %v760
    %v765 = vsel %vm394, %v760, %v762
    %v766 = vsel %vm394, %v762, %v393
    %767 = vrot.lane.b32.xlu0 %v715, 110
    %v768 = vpop.permute.xlu0 %767
    %769 = vrot.lane.b32.xlu0 %v716, 110
    %v770 = vpop.permute.xlu0 %769
    %771 = vrot.lane.b32.xlu0 %v717, 110
    %v772 = vpop.permute.xlu0 %771
    %773 = vrot.lane.b32.xlu0 %v718, 110
    %v774 = vpop.permute.xlu0 %773
    %v775 = vsel %vm409, %v768, %v770
    %v776 = vsel %vm409, %v770, %v772
    %v777 = vsel %vm409, %v772, %v774
    %v778 = vsel %vm409, %v774, %v408
    %779 = vrot.lane.b32.xlu0 %v707, 96
    %v780 = vpop.permute.xlu0 %779
    %781 = vrot.lane.b32.xlu0 %v708, 96
    %v782 = vpop.permute.xlu0 %781
    %783 = vrot.lane.b32.xlu0 %v709, 96
    %v784 = vpop.permute.xlu0 %783
    %785 = vrot.lane.b32.xlu0 %v710, 96
    %v786 = vpop.permute.xlu0 %785
    %v787 = vsel %vm424, %v780, %v782
    %v788 = vsel %vm424, %v782, %v784
    %v789 = vsel %vm424, %v784, %v786
    %v790 = vsel %vm424, %v786, %v423
    %791 = vrot.lane.b32.xlu0 %v715, 95
    %v792 = vpop.permute.xlu0 %791
    %793 = vrot.lane.b32.xlu0 %v716, 95
    %v794 = vpop.permute.xlu0 %793
    %795 = vrot.lane.b32.xlu0 %v717, 95
    %v796 = vpop.permute.xlu0 %795
    %797 = vrot.lane.b32.xlu0 %v718, 95
    %v798 = vpop.permute.xlu0 %797
    %v799 = vsel %vm439, %v792, %v794
    %v800 = vsel %vm439, %v794, %v796
    %v801 = vsel %vm439, %v796, %v798
    %v802 = vsel %vm439, %v798, %v438
    %803 = vrot.lane.b32.xlu0 %v707, 94
    %v804 = vpop.permute.xlu0 %803
    %805 = vrot.lane.b32.xlu0 %v708, 94
    %v806 = vpop.permute.xlu0 %805
    %807 = vrot.lane.b32.xlu0 %v709, 94
    %v808 = vpop.permute.xlu0 %807
    %809 = vrot.lane.b32.xlu0 %v710, 94
    %v810 = vpop.permute.xlu0 %809
    %v811 = vsel %vm454, %v804, %v806
    %v812 = vsel %vm454, %v806, %v808
    %v813 = vsel %vm454, %v808, %v810
    %v814 = vsel %vm454, %v810, %v453
    %v817 = vsel %vm459, %v707, %v727
    %v821 = vsel %vm459, %v708, %v728
    %v825 = vsel %vm459, %v709, %v729
    %v829 = vsel %vm459, %v710, %v730
    %v833 = vsel %vm459, %v739, %v751
    %v837 = vsel %vm459, %v740, %v752
    %v841 = vsel %vm459, %v741, %v753
    %v845 = vsel %vm459, %v742, %v754
    %v849 = vsel %vm459, %v763, %v775
    %v853 = vsel %vm459, %v764, %v776
    %v857 = vsel %vm459, %v765, %v777
    %v861 = vsel %vm459, %v766, %v778
    %v865 = vsel %vm459, %v787, %v799
    %v869 = vsel %vm459, %v788, %v800
    %v873 = vsel %vm459, %v789, %v801
    %v877 = vsel %vm459, %v790, %v802
    %v879 = vld [vmem:[%s17] sm:$0xf]
    %v880 = vld [vmem:[%s19] sm:$0xff]
    %882 = vset.pattern.permute.xlu0 0
    %883 = vperm.xlu0 %882, %v880
    %v884 = vpop.permute.xlu0 %883
    %v887 = vsel %vm531, %v879, 0
    %v890 = vsel %vm459, %v811, 0
    %v893 = vsel %vm459, %v812, 0
    %v896 = vsel %vm459, %v813, 0
    %v899 = vsel %vm459, %v814, 0
    %901 = vmatprep.subr.bf16.mxu0 %v821
    %902 = vmatpush1.bf16.msra.mxu0 %v817
    %903 = vmatprep.subr.bf16.mxu0 %v837
    %904 = vmatpush1.bf16.msra.mxu0 %v833
    %905 = vmatprep.subr.bf16.mxu0 %v853
    %906 = vmatpush1.bf16.msra.mxu0 %v849
    %907 = vmatprep.subr.bf16.mxu0 %v869
    %908 = vmatpush1.bf16.msra.mxu0 %v865
    %909 = vmatprep.subr.bf16.mxu0 %v893
    %910 = vmatpush1.bf16.msra.mxu0 %v890
    %911 = vmatprep.subr.bf16.mxu0 0
    %912 = vmatpush1.bf16.msra.mxu0 0
    %913 = vmatprep.subr.bf16.mxu0 0
    %914 = vmatpush1.bf16.msra.mxu0 0
    %915 = vmatprep.subr.bf16.mxu0 0
    %916 = vmatpush1.bf16.msra.mxu0 0
    %917 = vmatprep.subr.bf16.mxu0 0
    %918 = vmatpush1.bf16.msra.mxu0 0
    %919 = vmatprep.subr.bf16.mxu0 0
    %920 = vmatpush1.bf16.msra.mxu0 0
    %921 = vmatprep.subr.bf16.mxu0 0
    %922 = vmatpush1.bf16.msra.mxu0 0
    %923 = vmatprep.subr.bf16.mxu0 0
    %924 = vmatpush1.bf16.msra.mxu0 0
    %925 = vmatprep.subr.bf16.mxu0 0
    %926 = vmatpush1.bf16.msra.mxu0 0
    %927 = vmatprep.subr.bf16.mxu0 0
    %928 = vmatpush1.bf16.msra.mxu0 0
    %929 = vmatprep.subr.bf16.mxu0 0
    %930 = vmatpush1.bf16.msra.mxu0 0
    %931 = vmatprep.subr.bf16.mxu0 0
    %932 = vmatpush1.bf16.msra.mxu0 0
    %933 = vmatprep.mubr.bf16.mxu0 0
    %934 = vmatmul.mubr.bf16.gmra.mrb[0].mxu0 %v887
    %v935 = vpop.f32.mrb[0].mxu0
    %v936 = vadd.f32 %v884, %v935
    %v937 = vpop.f32.mrb[0].mxu0
    %v938 = vadd.f32 %v884, %v937
    %v939 = vpop.f32.mrb[0].mxu0
    %v940 = vpop.f32.mrb[0].mxu0
    %941 = vdwg.mxu0
    %942 = vmatprep.subr.bf16.mxu0 %v829
    %943 = vmatpush1.bf16.msra.mxu0 %v825
    %944 = vmatprep.subr.bf16.mxu0 %v845
    %945 = vmatpush1.bf16.msra.mxu0 %v841
    %946 = vmatprep.subr.bf16.mxu0 %v861
    %947 = vmatpush1.bf16.msra.mxu0 %v857
    %948 = vmatprep.subr.bf16.mxu0 %v877
    %949 = vmatpush1.bf16.msra.mxu0 %v873
    %950 = vmatprep.subr.bf16.mxu0 %v899
    %951 = vmatpush1.bf16.msra.mxu0 %v896
    %952 = vmatprep.subr.bf16.mxu0 0
    %953 = vmatpush1.bf16.msra.mxu0 0
    %954 = vmatprep.subr.bf16.mxu0 0
    %955 = vmatpush1.bf16.msra.mxu0 0
    %956 = vmatprep.subr.bf16.mxu0 0
    %957 = vmatpush1.bf16.msra.mxu0 0
    %958 = vmatprep.subr.bf16.mxu0 0
    %959 = vmatpush1.bf16.msra.mxu0 0
    %960 = vmatprep.subr.bf16.mxu0 0
    %961 = vmatpush1.bf16.msra.mxu0 0
    %962 = vmatprep.subr.bf16.mxu0 0
    %963 = vmatpush1.bf16.msra.mxu0 0
    %964 = vmatprep.subr.bf16.mxu0 0
    %965 = vmatpush1.bf16.msra.mxu0 0
    %966 = vmatprep.subr.bf16.mxu0 0
    %967 = vmatpush1.bf16.msra.mxu0 0
    %968 = vmatprep.subr.bf16.mxu0 0
    %969 = vmatpush1.bf16.msra.mxu0 0
    %970 = vmatprep.subr.bf16.mxu0 0
    %971 = vmatpush1.bf16.msra.mxu0 0
    %972 = vmatprep.subr.bf16.mxu0 0
    %973 = vmatpush1.bf16.msra.mxu0 0
    %974 = vmatprep.mubr.bf16.mxu0 0
    %975 = vmatmul.mubr.bf16.gmra.mrb[0].mxu0 %v887
    %v976 = vpop.f32.mrb[0].mxu0
    %v977 = vadd.f32 %v884, %v976
    %v978 = vpop.f32.mrb[0].mxu0
    %v979 = vadd.f32 %v884, %v978
    %v980 = vpop.f32.mrb[0].mxu0
    %v981 = vpop.f32.mrb[0].mxu0
    %982 = vdwg.mxu0
    %vm983 = vcmp.lt.s32.totalorder %v309, 12
    %vm984 = vcmp.lt.s32.totalorder %v310, 12
    %vm985 = vcmp.lt.s32.totalorder %v311, 12
    %vm986 = vcmp.lt.s32.totalorder %v312, 12
    %vm987 = vcmp.lt.s32.totalorder %v317, 12
    %vm988 = vcmp.lt.s32.totalorder %v318, 12
    %vm989 = vcmp.lt.s32.totalorder %v319, 12
    %vm990 = vcmp.lt.s32.totalorder %v320, 12
    %vm991 = vmand %vm983, %vm987
    %vm992 = vmand %vm984, %vm988
    %vm993 = vmand %vm985, %vm989
    %vm994 = vmand %vm986, %vm990
    %v995 = vsel %vm991, 1, 0
    %v996 = vsel %vm992, 1, 0
    %v997 = vsel %vm993, 1, 0
    %v998 = vsel %vm994, 1, 0
    %v999 = vcvt.s32.f32 %v995
    %v1000 = vcvt.s32.f32 %v996
    %v1001 = vcvt.s32.f32 %v997
    %v1002 = vcvt.s32.f32 %v998
    %v1003 = vmul.f32 %v936, %v999
    %v1004 = vmul.f32 %v938, %v1000
    %v1005 = vmul.f32 %v977, %v1001
    %v1006 = vmul.f32 %v979, %v1002
    %v1007 = vadd.f32 %v1003, %v1004
    %v1008 = vadd.f32 %v1007, %v1005
    %v1009 = vadd.f32 %v1008, %v1006
    %1010 = vadd.xlane.f32.xlu0 %v1009
    %v1011 = vpop.xlane.xlu0 %1010
    %v1012 = vmul.f32 %v1011, 0.0034722222
    %v1013 = vsub.f32 %v936, %v1012
    %v1014 = vsub.f32 %v938, %v1012
    %v1015 = vsub.f32 %v977, %v1012
    %v1016 = vsub.f32 %v979, %v1012
    %v1017 = vmul.f32 %v1013, %v999
    %v1018 = vmul.f32 %v1014, %v1000
    %v1019 = vmul.f32 %v1015, %v1001
    %v1020 = vmul.f32 %v1016, %v1002
    %v1021 = vmul.f32 %v1017, %v1017
    %v1022 = vmul.f32 %v1018, %v1018
    %v1023 = vmul.f32 %v1019, %v1019
    %v1024 = vmul.f32 %v1020, %v1020
    %v1025 = vadd.f32 %v1021, %v1022
    %v1026 = vadd.f32 %v1025, %v1023
    %v1027 = vadd.f32 %v1026, %v1024
    %1028 = vadd.xlane.f32.xlu0 %v1027
    %v1029 = vpop.xlane.xlu0 %1028
    %v1030 = vmul.f32 %v1029, 0.0034722222
    %v1031 = vld [vmem:[%s21] sm:$0xff]
    %1033 = vset.pattern.permute.xlu0 0
    %1034 = vperm.xlu0 %1033, %v1031
    %v1035 = vpop.permute.xlu0 %1034
    %v1037 = vmul.f32 %v1035, %v1013
    %v1038 = vmul.f32 %v1035, %v1014
    %v1039 = vmul.f32 %v1035, %v1015
    %v1040 = vmul.f32 %v1035, %v1016
    %v1041 = vadd.f32 %v1030, 1e-05
    %v1042 = vrsqrt.pop %v1041
    %v1043 = vmul.f32 %v1037, %v1042
    %v1044 = vmul.f32 %v1038, %v1042
    %v1045 = vmul.f32 %v1039, %v1042
    %v1046 = vmul.f32 %v1040, %v1042
    %v1047 = vld [vmem:[%s23] sm:$0xff]
    %1049 = vset.pattern.permute.xlu0 0
    %1050 = vperm.xlu0 %1049, %v1047
    %v1051 = vpop.permute.xlu0 %1050
    %v1053 = vadd.f32 %v1043, %v1051
    %v1054 = vadd.f32 %v1044, %v1051
    %v1055 = vadd.f32 %v1045, %v1051
    %v1056 = vadd.f32 %v1046, %v1051
    %v1057 = vmul.f32 %v1053, %v999
    %v1058 = vmul.f32 %v1054, %v1000
    %v1059 = vmul.f32 %v1055, %v1001
    %v1060 = vmul.f32 %v1056, %v1002
    %v1061 = vpack.c.bf16 %v1057, %v1057
    %v1062 = vpack.c.bf16 %v1058, %v1058
    %v1063 = vpack.c.bf16 %v1059, %v1059
    %v1064 = vpack.c.bf16 %v1060, %v1060
    %v1069 = vrot.slane %v1061, 4
    %v1070 = vrot.slane %v1062, 4
    %v1071 = vrot.slane %v1063, 4
    %v1072 = vrot.slane %v1064, 4
    %1073 = vrot.lane.b32.xlu0 %v1069, 127
    %v1074 = vpop.permute.xlu0 %1073
    %1075 = vrot.lane.b32.xlu0 %v1070, 127
    %v1076 = vpop.permute.xlu0 %1075
    %1077 = vrot.lane.b32.xlu0 %v1071, 127
    %v1078 = vpop.permute.xlu0 %1077
    %1079 = vrot.lane.b32.xlu0 %v1072, 127
    %v1080 = vpop.permute.xlu0 %1079
    %v1081 = vsel %vm349, %v1074, %v1076
    %v1082 = vsel %vm349, %v1076, %v1078
    %v1083 = vsel %vm349, %v1078, %v1080
    %v1084 = vsel %vm349, %v1080, %v348
    %1085 = vrot.lane.b32.xlu0 %v1061, 126
    %v1086 = vpop.permute.xlu0 %1085
    %1087 = vrot.lane.b32.xlu0 %v1062, 126
    %v1088 = vpop.permute.xlu0 %1087
    %1089 = vrot.lane.b32.xlu0 %v1063, 126
    %v1090 = vpop.permute.xlu0 %1089
    %1091 = vrot.lane.b32.xlu0 %v1064, 126
    %v1092 = vpop.permute.xlu0 %1091
    %v1093 = vsel %vm364, %v1086, %v1088
    %v1094 = vsel %vm364, %v1088, %v1090
    %v1095 = vsel %vm364, %v1090, %v1092
    %v1096 = vsel %vm364, %v1092, %v363
    %1097 = vrot.lane.b32.xlu0 %v1069, 112
    %v1098 = vpop.permute.xlu0 %1097
    %1099 = vrot.lane.b32.xlu0 %v1070, 112
    %v1100 = vpop.permute.xlu0 %1099
    %1101 = vrot.lane.b32.xlu0 %v1071, 112
    %v1102 = vpop.permute.xlu0 %1101
    %1103 = vrot.lane.b32.xlu0 %v1072, 112
    %v1104 = vpop.permute.xlu0 %1103
    %v1105 = vsel %vm379, %v1098, %v1100
    %v1106 = vsel %vm379, %v1100, %v1102
    %v1107 = vsel %vm379, %v1102, %v1104
    %v1108 = vsel %vm379, %v1104, %v378
    %1109 = vrot.lane.b32.xlu0 %v1061, 111
    %v1110 = vpop.permute.xlu0 %1109
    %1111 = vrot.lane.b32.xlu0 %v1062, 111
    %v1112 = vpop.permute.xlu0 %1111
    %1113 = vrot.lane.b32.xlu0 %v1063, 111
    %v1114 = vpop.permute.xlu0 %1113
    %1115 = vrot.lane.b32.xlu0 %v1064, 111
    %v1116 = vpop.permute.xlu0 %1115
    %v1117 = vsel %vm394, %v1110, %v1112
    %v1118 = vsel %vm394, %v1112, %v1114
    %v1119 = vsel %vm394, %v1114, %v1116
    %v1120 = vsel %vm394, %v1116, %v393
    %1121 = vrot.lane.b32.xlu0 %v1069, 110
    %v1122 = vpop.permute.xlu0 %1121
    %1123 = vrot.lane.b32.xlu0 %v1070, 110
    %v1124 = vpop.permute.xlu0 %1123
    %1125 = vrot.lane.b32.xlu0 %v1071, 110
    %v1126 = vpop.permute.xlu0 %1125
    %1127 = vrot.lane.b32.xlu0 %v1072, 110
    %v1128 = vpop.permute.xlu0 %1127
    %v1129 = vsel %vm409, %v1122, %v1124
    %v1130 = vsel %vm409, %v1124, %v1126
    %v1131 = vsel %vm409, %v1126, %v1128
    %v1132 = vsel %vm409, %v1128, %v408
    %1133 = vrot.lane.b32.xlu0 %v1061, 96
    %v1134 = vpop.permute.xlu0 %1133
    %1135 = vrot.lane.b32.xlu0 %v1062, 96
    %v1136 = vpop.permute.xlu0 %1135
    %1137 = vrot.lane.b32.xlu0 %v1063, 96
    %v1138 = vpop.permute.xlu0 %1137
    %1139 = vrot.lane.b32.xlu0 %v1064, 96
    %v1140 = vpop.permute.xlu0 %1139
    %v1141 = vsel %vm424, %v1134, %v1136
    %v1142 = vsel %vm424, %v1136, %v1138
    %v1143 = vsel %vm424, %v1138, %v1140
    %v1144 = vsel %vm424, %v1140, %v423
    %1145 = vrot.lane.b32.xlu0 %v1069, 95
    %v1146 = vpop.permute.xlu0 %1145
    %1147 = vrot.lane.b32.xlu0 %v1070, 95
    %v1148 = vpop.permute.xlu0 %1147
    %1149 = vrot.lane.b32.xlu0 %v1071, 95
    %v1150 = vpop.permute.xlu0 %1149
    %1151 = vrot.lane.b32.xlu0 %v1072, 95
    %v1152 = vpop.permute.xlu0 %1151
    %v1153 = vsel %vm439, %v1146, %v1148
    %v1154 = vsel %vm439, %v1148, %v1150
    %v1155 = vsel %vm439, %v1150, %v1152
    %v1156 = vsel %vm439, %v1152, %v438
    %1157 = vrot.lane.b32.xlu0 %v1061, 94
    %v1158 = vpop.permute.xlu0 %1157
    %1159 = vrot.lane.b32.xlu0 %v1062, 94
    %v1160 = vpop.permute.xlu0 %1159
    %1161 = vrot.lane.b32.xlu0 %v1063, 94
    %v1162 = vpop.permute.xlu0 %1161
    %1163 = vrot.lane.b32.xlu0 %v1064, 94
    %v1164 = vpop.permute.xlu0 %1163
    %v1165 = vsel %vm454, %v1158, %v1160
    %v1166 = vsel %vm454, %v1160, %v1162
    %v1167 = vsel %vm454, %v1162, %v1164
    %v1168 = vsel %vm454, %v1164, %v453
    %v1171 = vsel %vm459, %v1061, %v1081
    %v1175 = vsel %vm459, %v1062, %v1082
    %v1179 = vsel %vm459, %v1063, %v1083
    %v1183 = vsel %vm459, %v1064, %v1084
    %v1187 = vsel %vm459, %v1093, %v1105
    %v1191 = vsel %vm459, %v1094, %v1106
    %v1195 = vsel %vm459, %v1095, %v1107
    %v1199 = vsel %vm459, %v1096, %v1108
    %v1203 = vsel %vm459, %v1117, %v1129
    %v1207 = vsel %vm459, %v1118, %v1130
    %v1211 = vsel %vm459, %v1119, %v1131
    %v1215 = vsel %vm459, %v1120, %v1132
    %v1219 = vsel %vm459, %v1141, %v1153
    %v1223 = vsel %vm459, %v1142, %v1154
    %v1227 = vsel %vm459, %v1143, %v1155
    %v1231 = vsel %vm459, %v1144, %v1156
    %v1233 = vld [vmem:[%s25] sm:$0xf]
    %v1234 = vld [vmem:[%s27] sm:$0xff]
    %1236 = vset.pattern.permute.xlu0 0
    %1237 = vperm.xlu0 %1236, %v1234
    %v1238 = vpop.permute.xlu0 %1237
    %v1241 = vsel %vm531, %v1233, 0
    %v1244 = vsel %vm459, %v1165, 0
    %v1247 = vsel %vm459, %v1166, 0
    %v1250 = vsel %vm459, %v1167, 0
    %v1253 = vsel %vm459, %v1168, 0
    %1255 = vmatprep.subr.bf16.mxu0 %v1175
    %1256 = vmatpush1.bf16.msra.mxu0 %v1171
    %1257 = vmatprep.subr.bf16.mxu0 %v1191
    %1258 = vmatpush1.bf16.msra.mxu0 %v1187
    %1259 = vmatprep.subr.bf16.mxu0 %v1207
    %1260 = vmatpush1.bf16.msra.mxu0 %v1203
    %1261 = vmatprep.subr.bf16.mxu0 %v1223
    %1262 = vmatpush1.bf16.msra.mxu0 %v1219
    %1263 = vmatprep.subr.bf16.mxu0 %v1247
    %1264 = vmatpush1.bf16.msra.mxu0 %v1244
    %1265 = vmatprep.subr.bf16.mxu0 0
    %1266 = vmatpush1.bf16.msra.mxu0 0
    %1267 = vmatprep.subr.bf16.mxu0 0
    %1268 = vmatpush1.bf16.msra.mxu0 0
    %1269 = vmatprep.subr.bf16.mxu0 0
    %1270 = vmatpush1.bf16.msra.mxu0 0
    %1271 = vmatprep.subr.bf16.mxu0 0
    %1272 = vmatpush1.bf16.msra.mxu0 0
    %1273 = vmatprep.subr.bf16.mxu0 0
    %1274 = vmatpush1.bf16.msra.mxu0 0
    %1275 = vmatprep.subr.bf16.mxu0 0
    %1276 = vmatpush1.bf16.msra.mxu0 0
    %1277 = vmatprep.subr.bf16.mxu0 0
    %1278 = vmatpush1.bf16.msra.mxu0 0
    %1279 = vmatprep.subr.bf16.mxu0 0
    %1280 = vmatpush1.bf16.msra.mxu0 0
    %1281 = vmatprep.subr.bf16.mxu0 0
    %1282 = vmatpush1.bf16.msra.mxu0 0
    %1283 = vmatprep.subr.bf16.mxu0 0
    %1284 = vmatpush1.bf16.msra.mxu0 0
    %1285 = vmatprep.subr.bf16.mxu0 0
    %1286 = vmatpush1.bf16.msra.mxu0 0
    %1287 = vmatprep.mubr.bf16.mxu0 0
    %1288 = vmatmul.mubr.bf16.gmra.mrb[0].mxu0 %v1241
    %v1289 = vpop.f32.mrb[0].mxu0
    %v1290 = vadd.f32 %v1238, %v1289
    %v1291 = vpop.f32.mrb[0].mxu0
    %v1292 = vadd.f32 %v1238, %v1291
    %v1293 = vpop.f32.mrb[0].mxu0
    %v1294 = vpop.f32.mrb[0].mxu0
    %1295 = vdwg.mxu0
    %1296 = vmatprep.subr.bf16.mxu0 %v1183
    %1297 = vmatpush1.bf16.msra.mxu0 %v1179
    %1298 = vmatprep.subr.bf16.mxu0 %v1199
    %1299 = vmatpush1.bf16.msra.mxu0 %v1195
    %1300 = vmatprep.subr.bf16.mxu0 %v1215
    %1301 = vmatpush1.bf16.msra.mxu0 %v1211
    %1302 = vmatprep.subr.bf16.mxu0 %v1231
    %1303 = vmatpush1.bf16.msra.mxu0 %v1227
    %1304 = vmatprep.subr.bf16.mxu0 %v1253
    %1305 = vmatpush1.bf16.msra.mxu0 %v1250
    %1306 = vmatprep.subr.bf16.mxu0 0
    %1307 = vmatpush1.bf16.msra.mxu0 0
    %1308 = vmatprep.subr.bf16.mxu0 0
    %1309 = vmatpush1.bf16.msra.mxu0 0
    %1310 = vmatprep.subr.bf16.mxu0 0
    %1311 = vmatpush1.bf16.msra.mxu0 0
    %1312 = vmatprep.subr.bf16.mxu0 0
    %1313 = vmatpush1.bf16.msra.mxu0 0
    %1314 = vmatprep.subr.bf16.mxu0 0
    %1315 = vmatpush1.bf16.msra.mxu0 0
    %1316 = vmatprep.subr.bf16.mxu0 0
    %1317 = vmatpush1.bf16.msra.mxu0 0
    %1318 = vmatprep.subr.bf16.mxu0 0
    %1319 = vmatpush1.bf16.msra.mxu0 0
    %1320 = vmatprep.subr.bf16.mxu0 0
    %1321 = vmatpush1.bf16.msra.mxu0 0
    %1322 = vmatprep.subr.bf16.mxu0 0
    %1323 = vmatpush1.bf16.msra.mxu0 0
    %1324 = vmatprep.subr.bf16.mxu0 0
    %1325 = vmatpush1.bf16.msra.mxu0 0
    %1326 = vmatprep.subr.bf16.mxu0 0
    %1327 = vmatpush1.bf16.msra.mxu0 0
    %1328 = vmatprep.mubr.bf16.mxu0 0
    %1329 = vmatmul.mubr.bf16.gmra.mrb[0].mxu0 %v1241
    %v1330 = vpop.f32.mrb[0].mxu0
    %v1331 = vadd.f32 %v1238, %v1330
    %v1332 = vpop.f32.mrb[0].mxu0
    %v1333 = vadd.f32 %v1238, %v1332
    %v1334 = vpop.f32.mrb[0].mxu0
    %v1335 = vpop.f32.mrb[0].mxu0
    %1336 = vdwg.mxu0
    %vm1337 = vcmp.lt.s32.totalorder %v309, 10
    %vm1338 = vcmp.lt.s32.totalorder %v310, 10
    %vm1339 = vcmp.lt.s32.totalorder %v311, 10
    %vm1340 = vcmp.lt.s32.totalorder %v312, 10
    %vm1341 = vcmp.lt.s32.totalorder %v317, 10
    %vm1342 = vcmp.lt.s32.totalorder %v318, 10
    %vm1343 = vcmp.lt.s32.totalorder %v319, 10
    %vm1344 = vcmp.lt.s32.totalorder %v320, 10
    %vm1345 = vmand %vm1337, %vm1341
    %vm1346 = vmand %vm1338, %vm1342
    %vm1347 = vmand %vm1339, %vm1343
    %vm1348 = vmand %vm1340, %vm1344
    %v1349 = vsel %vm1345, 1, 0
    %v1350 = vsel %vm1346, 1, 0
    %v1351 = vsel %vm1347, 1, 0
    %v1352 = vsel %vm1348, 1, 0
    %v1353 = vcvt.s32.f32 %v1349
    %v1354 = vcvt.s32.f32 %v1350
    %v1355 = vcvt.s32.f32 %v1351
    %v1356 = vcvt.s32.f32 %v1352
    %v1357 = vmul.f32 %v1290, %v1353
    %v1358 = vmul.f32 %v1292, %v1354
    %v1359 = vmul.f32 %v1331, %v1355
    %v1360 = vmul.f32 %v1333, %v1356
    %v1361 = vadd.f32 %v1357, %v1358
    %v1362 = vadd.f32 %v1361, %v1359
    %v1363 = vadd.f32 %v1362, %v1360
    %1364 = vadd.xlane.f32.xlu0 %v1363
    %v1365 = vpop.xlane.xlu0 %1364
    %v1366 = vmul.f32 %v1365, 0.005
    %v1367 = vsub.f32 %v1290, %v1366
    %v1368 = vsub.f32 %v1292, %v1366
    %v1369 = vsub.f32 %v1331, %v1366
    %v1370 = vsub.f32 %v1333, %v1366
    %v1371 = vmul.f32 %v1367, %v1353
    %v1372 = vmul.f32 %v1368, %v1354
    %v1373 = vmul.f32 %v1369, %v1355
    %v1374 = vmul.f32 %v1370, %v1356
    %v1375 = vmul.f32 %v1371, %v1371
    %v1376 = vmul.f32 %v1372, %v1372
    %v1377 = vmul.f32 %v1373, %v1373
    %v1378 = vmul.f32 %v1374, %v1374
    %v1379 = vadd.f32 %v1375, %v1376
    %v1380 = vadd.f32 %v1379, %v1377
    %v1381 = vadd.f32 %v1380, %v1378
    %1382 = vadd.xlane.f32.xlu0 %v1381
    %v1383 = vpop.xlane.xlu0 %1382
    %v1384 = vmul.f32 %v1383, 0.005
    %v1385 = vld [vmem:[%s29] sm:$0xff]
    %1387 = vset.pattern.permute.xlu0 0
    %1388 = vperm.xlu0 %1387, %v1385
    %v1389 = vpop.permute.xlu0 %1388
    %v1391 = vmul.f32 %v1389, %v1367
    %v1392 = vmul.f32 %v1389, %v1368
    %v1393 = vmul.f32 %v1389, %v1369
    %v1394 = vmul.f32 %v1389, %v1370
    %v1395 = vadd.f32 %v1384, 1e-05
    %v1396 = vrsqrt.pop %v1395
    %v1397 = vmul.f32 %v1391, %v1396
    %v1398 = vmul.f32 %v1392, %v1396
    %v1399 = vmul.f32 %v1393, %v1396
    %v1400 = vmul.f32 %v1394, %v1396
    %v1401 = vld [vmem:[%s31] sm:$0xff]
    %1403 = vset.pattern.permute.xlu0 0
    %1404 = vperm.xlu0 %1403, %v1401
    %v1405 = vpop.permute.xlu0 %1404
    %v1407 = vadd.f32 %v1397, %v1405
    %v1408 = vadd.f32 %v1398, %v1405
    %v1409 = vadd.f32 %v1399, %v1405
    %v1410 = vadd.f32 %v1400, %v1405
    %v1411 = vmul.f32 %v1407, %v1353
    %v1412 = vmul.f32 %v1408, %v1354
    %v1413 = vmul.f32 %v1409, %v1355
    %v1414 = vmul.f32 %v1410, %v1356
    %v1415 = vpack.c.bf16 %v1411, %v1411
    %v1416 = vpack.c.bf16 %v1412, %v1412
    %v1417 = vpack.c.bf16 %v1413, %v1413
    %v1418 = vpack.c.bf16 %v1414, %v1414
    %v1423 = vrot.slane %v1415, 4
    %v1424 = vrot.slane %v1416, 4
    %v1425 = vrot.slane %v1417, 4
    %v1426 = vrot.slane %v1418, 4
    %1427 = vrot.lane.b32.xlu0 %v1423, 127
    %v1428 = vpop.permute.xlu0 %1427
    %1429 = vrot.lane.b32.xlu0 %v1424, 127
    %v1430 = vpop.permute.xlu0 %1429
    %1431 = vrot.lane.b32.xlu0 %v1425, 127
    %v1432 = vpop.permute.xlu0 %1431
    %1433 = vrot.lane.b32.xlu0 %v1426, 127
    %v1434 = vpop.permute.xlu0 %1433
    %v1435 = vsel %vm349, %v1428, %v1430
    %v1436 = vsel %vm349, %v1430, %v1432
    %v1437 = vsel %vm349, %v1432, %v1434
    %v1438 = vsel %vm349, %v1434, %v348
    %1439 = vrot.lane.b32.xlu0 %v1415, 126
    %v1440 = vpop.permute.xlu0 %1439
    %1441 = vrot.lane.b32.xlu0 %v1416, 126
    %v1442 = vpop.permute.xlu0 %1441
    %1443 = vrot.lane.b32.xlu0 %v1417, 126
    %v1444 = vpop.permute.xlu0 %1443
    %1445 = vrot.lane.b32.xlu0 %v1418, 126
    %v1446 = vpop.permute.xlu0 %1445
    %v1447 = vsel %vm364, %v1440, %v1442
    %v1448 = vsel %vm364, %v1442, %v1444
    %v1449 = vsel %vm364, %v1444, %v1446
    %v1450 = vsel %vm364, %v1446, %v363
    %1451 = vrot.lane.b32.xlu0 %v1423, 112
    %v1452 = vpop.permute.xlu0 %1451
    %1453 = vrot.lane.b32.xlu0 %v1424, 112
    %v1454 = vpop.permute.xlu0 %1453
    %1455 = vrot.lane.b32.xlu0 %v1425, 112
    %v1456 = vpop.permute.xlu0 %1455
    %1457 = vrot.lane.b32.xlu0 %v1426, 112
    %v1458 = vpop.permute.xlu0 %1457
    %v1459 = vsel %vm379, %v1452, %v1454
    %v1460 = vsel %vm379, %v1454, %v1456
    %v1461 = vsel %vm379, %v1456, %v1458
    %v1462 = vsel %vm379, %v1458, %v378
    %1463 = vrot.lane.b32.xlu0 %v1415, 111
    %v1464 = vpop.permute.xlu0 %1463
    %1465 = vrot.lane.b32.xlu0 %v1416, 111
    %v1466 = vpop.permute.xlu0 %1465
    %1467 = vrot.lane.b32.xlu0 %v1417, 111
    %v1468 = vpop.permute.xlu0 %1467
    %1469 = vrot.lane.b32.xlu0 %v1418, 111
    %v1470 = vpop.permute.xlu0 %1469
    %v1471 = vsel %vm394, %v1464, %v1466
    %v1472 = vsel %vm394, %v1466, %v1468
    %v1473 = vsel %vm394, %v1468, %v1470
    %v1474 = vsel %vm394, %v1470, %v393
    %1475 = vrot.lane.b32.xlu0 %v1423, 110
    %v1476 = vpop.permute.xlu0 %1475
    %1477 = vrot.lane.b32.xlu0 %v1424, 110
    %v1478 = vpop.permute.xlu0 %1477
    %1479 = vrot.lane.b32.xlu0 %v1425, 110
    %v1480 = vpop.permute.xlu0 %1479
    %1481 = vrot.lane.b32.xlu0 %v1426, 110
    %v1482 = vpop.permute.xlu0 %1481
    %v1483 = vsel %vm409, %v1476, %v1478
    %v1484 = vsel %vm409, %v1478, %v1480
    %v1485 = vsel %vm409, %v1480, %v1482
    %v1486 = vsel %vm409, %v1482, %v408
    %1487 = vrot.lane.b32.xlu0 %v1415, 96
    %v1488 = vpop.permute.xlu0 %1487
    %1489 = vrot.lane.b32.xlu0 %v1416, 96
    %v1490 = vpop.permute.xlu0 %1489
    %1491 = vrot.lane.b32.xlu0 %v1417, 96
    %v1492 = vpop.permute.xlu0 %1491
    %1493 = vrot.lane.b32.xlu0 %v1418, 96
    %v1494 = vpop.permute.xlu0 %1493
    %v1495 = vsel %vm424, %v1488, %v1490
    %v1496 = vsel %vm424, %v1490, %v1492
    %v1497 = vsel %vm424, %v1492, %v1494
    %v1498 = vsel %vm424, %v1494, %v423
    %1499 = vrot.lane.b32.xlu0 %v1423, 95
    %v1500 = vpop.permute.xlu0 %1499
    %1501 = vrot.lane.b32.xlu0 %v1424, 95
    %v1502 = vpop.permute.xlu0 %1501
    %1503 = vrot.lane.b32.xlu0 %v1425, 95
    %v1504 = vpop.permute.xlu0 %1503
    %1505 = vrot.lane.b32.xlu0 %v1426, 95
    %v1506 = vpop.permute.xlu0 %1505
    %v1507 = vsel %vm439, %v1500, %v1502
    %v1508 = vsel %vm439, %v1502, %v1504
    %v1509 = vsel %vm439, %v1504, %v1506
    %v1510 = vsel %vm439, %v1506, %v438
    %1511 = vrot.lane.b32.xlu0 %v1415, 94
    %v1512 = vpop.permute.xlu0 %1511
    %1513 = vrot.lane.b32.xlu0 %v1416, 94
    %v1514 = vpop.permute.xlu0 %1513
    %1515 = vrot.lane.b32.xlu0 %v1417, 94
    %v1516 = vpop.permute.xlu0 %1515
    %1517 = vrot.lane.b32.xlu0 %v1418, 94
    %v1518 = vpop.permute.xlu0 %1517
    %v1519 = vsel %vm454, %v1512, %v1514
    %v1520 = vsel %vm454, %v1514, %v1516
    %v1521 = vsel %vm454, %v1516, %v1518
    %v1522 = vsel %vm454, %v1518, %v453
    %v1525 = vsel %vm459, %v1415, %v1435
    %v1529 = vsel %vm459, %v1416, %v1436
    %v1533 = vsel %vm459, %v1417, %v1437
    %v1537 = vsel %vm459, %v1418, %v1438
    %v1541 = vsel %vm459, %v1447, %v1459
    %v1545 = vsel %vm459, %v1448, %v1460
    %v1549 = vsel %vm459, %v1449, %v1461
    %v1553 = vsel %vm459, %v1450, %v1462
    %v1557 = vsel %vm459, %v1471, %v1483
    %v1561 = vsel %vm459, %v1472, %v1484
    %v1565 = vsel %vm459, %v1473, %v1485
    %v1569 = vsel %vm459, %v1474, %v1486
    %v1573 = vsel %vm459, %v1495, %v1507
    %v1577 = vsel %vm459, %v1496, %v1508
    %v1581 = vsel %vm459, %v1497, %v1509
    %v1585 = vsel %vm459, %v1498, %v1510
    %v1587 = vld [vmem:[%s33] sm:$0xf]
    %v1588 = vld [vmem:[%s35] sm:$0xff]
    %1590 = vset.pattern.permute.xlu0 0
    %1591 = vperm.xlu0 %1590, %v1588
    %v1592 = vpop.permute.xlu0 %1591
    %v1595 = vsel %vm531, %v1587, 0
    %v1598 = vsel %vm459, %v1519, 0
    %v1601 = vsel %vm459, %v1520, 0
    %v1604 = vsel %vm459, %v1521, 0
    %v1607 = vsel %vm459, %v1522, 0
    %1609 = vmatprep.subr.bf16.mxu0 %v1529
    %1610 = vmatpush1.bf16.msra.mxu0 %v1525
    %1611 = vmatprep.subr.bf16.mxu0 %v1545
    %1612 = vmatpush1.bf16.msra.mxu0 %v1541
    %1613 = vmatprep.subr.bf16.mxu0 %v1561
    %1614 = vmatpush1.bf16.msra.mxu0 %v1557
    %1615 = vmatprep.subr.bf16.mxu0 %v1577
    %1616 = vmatpush1.bf16.msra.mxu0 %v1573
    %1617 = vmatprep.subr.bf16.mxu0 %v1601
    %1618 = vmatpush1.bf16.msra.mxu0 %v1598
    %1619 = vmatprep.subr.bf16.mxu0 0
    %1620 = vmatpush1.bf16.msra.mxu0 0
    %1621 = vmatprep.subr.bf16.mxu0 0
    %1622 = vmatpush1.bf16.msra.mxu0 0
    %1623 = vmatprep.subr.bf16.mxu0 0
    %1624 = vmatpush1.bf16.msra.mxu0 0
    %1625 = vmatprep.subr.bf16.mxu0 0
    %1626 = vmatpush1.bf16.msra.mxu0 0
    %1627 = vmatprep.subr.bf16.mxu0 0
    %1628 = vmatpush1.bf16.msra.mxu0 0
    %1629 = vmatprep.subr.bf16.mxu0 0
    %1630 = vmatpush1.bf16.msra.mxu0 0
    %1631 = vmatprep.subr.bf16.mxu0 0
    %1632 = vmatpush1.bf16.msra.mxu0 0
    %1633 = vmatprep.subr.bf16.mxu0 0
    %1634 = vmatpush1.bf16.msra.mxu0 0
    %1635 = vmatprep.subr.bf16.mxu0 0
    %1636 = vmatpush1.bf16.msra.mxu0 0
    %1637 = vmatprep.subr.bf16.mxu0 0
    %1638 = vmatpush1.bf16.msra.mxu0 0
    %1639 = vmatprep.subr.bf16.mxu0 0
    %1640 = vmatpush1.bf16.msra.mxu0 0
    %1641 = vmatprep.mubr.bf16.mxu0 0
    %1642 = vmatmul.mubr.bf16.gmra.mrb[0].mxu0 %v1595
    %v1643 = vpop.f32.mrb[0].mxu0
    %v1644 = vadd.f32 %v1592, %v1643
    %v1645 = vpop.f32.mrb[0].mxu0
    %v1646 = vadd.f32 %v1592, %v1645
    %v1647 = vpop.f32.mrb[0].mxu0
    %v1648 = vpop.f32.mrb[0].mxu0
    %1649 = vdwg.mxu0
    %1650 = vmatprep.subr.bf16.mxu0 %v1537
    %1651 = vmatpush1.bf16.msra.mxu0 %v1533
    %1652 = vmatprep.subr.bf16.mxu0 %v1553
    %1653 = vmatpush1.bf16.msra.mxu0 %v1549
    %1654 = vmatprep.subr.bf16.mxu0 %v1569
    %1655 = vmatpush1.bf16.msra.mxu0 %v1565
    %1656 = vmatprep.subr.bf16.mxu0 %v1585
    %1657 = vmatpush1.bf16.msra.mxu0 %v1581
    %1658 = vmatprep.subr.bf16.mxu0 %v1607
    %1659 = vmatpush1.bf16.msra.mxu0 %v1604
    %1660 = vmatprep.subr.bf16.mxu0 0
    %1661 = vmatpush1.bf16.msra.mxu0 0
    %1662 = vmatprep.subr.bf16.mxu0 0
    %1663 = vmatpush1.bf16.msra.mxu0 0
    %1664 = vmatprep.subr.bf16.mxu0 0
    %1665 = vmatpush1.bf16.msra.mxu0 0
    %1666 = vmatprep.subr.bf16.mxu0 0
    %1667 = vmatpush1.bf16.msra.mxu0 0
    %1668 = vmatprep.subr.bf16.mxu0 0
    %1669 = vmatpush1.bf16.msra.mxu0 0
    %1670 = vmatprep.subr.bf16.mxu0 0
    %1671 = vmatpush1.bf16.msra.mxu0 0
    %1672 = vmatprep.subr.bf16.mxu0 0
    %1673 = vmatpush1.bf16.msra.mxu0 0
    %1674 = vmatprep.subr.bf16.mxu0 0
    %1675 = vmatpush1.bf16.msra.mxu0 0
    %1676 = vmatprep.subr.bf16.mxu0 0
    %1677 = vmatpush1.bf16.msra.mxu0 0
    %1678 = vmatprep.subr.bf16.mxu0 0
    %1679 = vmatpush1.bf16.msra.mxu0 0
    %1680 = vmatprep.subr.bf16.mxu0 0
    %1681 = vmatpush1.bf16.msra.mxu0 0
    %1682 = vmatprep.mubr.bf16.mxu0 0
    %1683 = vmatmul.mubr.bf16.gmra.mrb[0].mxu0 %v1595
    %v1684 = vpop.f32.mrb[0].mxu0
    %v1685 = vadd.f32 %v1592, %v1684
    %v1686 = vpop.f32.mrb[0].mxu0
    %v1687 = vadd.f32 %v1592, %v1686
    %v1688 = vpop.f32.mrb[0].mxu0
    %v1689 = vpop.f32.mrb[0].mxu0
    %1690 = vdwg.mxu0
    %vm1691 = vcmp.lt.s32.totalorder %v309, 8
    %vm1692 = vcmp.lt.s32.totalorder %v310, 8
    %vm1693 = vcmp.lt.s32.totalorder %v311, 8
    %vm1694 = vcmp.lt.s32.totalorder %v312, 8
    %vm1695 = vcmp.lt.s32.totalorder %v317, 8
    %vm1696 = vcmp.lt.s32.totalorder %v318, 8
    %vm1697 = vcmp.lt.s32.totalorder %v319, 8
    %vm1698 = vcmp.lt.s32.totalorder %v320, 8
    %vm1699 = vmand %vm1691, %vm1695
    %vm1700 = vmand %vm1692, %vm1696
    %vm1701 = vmand %vm1693, %vm1697
    %vm1702 = vmand %vm1694, %vm1698
    %v1703 = vsel %vm1699, 1, 0
    %v1704 = vsel %vm1700, 1, 0
    %v1705 = vsel %vm1701, 1, 0
    %v1706 = vsel %vm1702, 1, 0
    %v1707 = vcvt.s32.f32 %v1703
    %v1708 = vcvt.s32.f32 %v1704
    %v1709 = vcvt.s32.f32 %v1705
    %v1710 = vcvt.s32.f32 %v1706
    %v1711 = vmul.f32 %v1644, %v1707
    %v1712 = vmul.f32 %v1646, %v1708
    %v1713 = vmul.f32 %v1685, %v1709
    %v1714 = vmul.f32 %v1687, %v1710
    %v1715 = vadd.f32 %v1711, %v1712
    %v1716 = vadd.f32 %v1715, %v1713
    %v1717 = vadd.f32 %v1716, %v1714
    %1718 = vadd.xlane.f32.xlu0 %v1717
    %v1719 = vpop.xlane.xlu0 %1718
    %v1720 = vmul.f32 %v1719, 0.0078125
    %v1721 = vsub.f32 %v1644, %v1720
    %v1722 = vsub.f32 %v1646, %v1720
    %v1723 = vsub.f32 %v1685, %v1720
    %v1724 = vsub.f32 %v1687, %v1720
    %v1725 = vmul.f32 %v1721, %v1707
    %v1726 = vmul.f32 %v1722, %v1708
    %v1727 = vmul.f32 %v1723, %v1709
    %v1728 = vmul.f32 %v1724, %v1710
    %v1729 = vmul.f32 %v1725, %v1725
    %v1730 = vmul.f32 %v1726, %v1726
    %v1731 = vmul.f32 %v1727, %v1727
    %v1732 = vmul.f32 %v1728, %v1728
    %v1733 = vadd.f32 %v1729, %v1730
    %v1734 = vadd.f32 %v1733, %v1731
    %v1735 = vadd.f32 %v1734, %v1732
    %1736 = vadd.xlane.f32.xlu0 %v1735
    %v1737 = vpop.xlane.xlu0 %1736
    %v1738 = vmul.f32 %v1737, 0.0078125
    %v1739 = vld [vmem:[%s37] sm:$0xff]
    %1741 = vset.pattern.permute.xlu0 0
    %1742 = vperm.xlu0 %1741, %v1739
    %v1743 = vpop.permute.xlu0 %1742
    %v1745 = vmul.f32 %v1743, %v1721
    %v1746 = vmul.f32 %v1743, %v1722
    %v1747 = vmul.f32 %v1743, %v1723
    %v1748 = vmul.f32 %v1743, %v1724
    %v1749 = vadd.f32 %v1738, 1e-05
    %v1750 = vrsqrt.pop %v1749
    %v1751 = vmul.f32 %v1745, %v1750
    %v1752 = vmul.f32 %v1746, %v1750
    %v1753 = vmul.f32 %v1747, %v1750
    %v1754 = vmul.f32 %v1748, %v1750
    %v1755 = vld [vmem:[%s39] sm:$0xff]
    %1757 = vset.pattern.permute.xlu0 0
    %1758 = vperm.xlu0 %1757, %v1755
    %v1759 = vpop.permute.xlu0 %1758
    %v1761 = vadd.f32 %v1751, %v1759
    %v1762 = vadd.f32 %v1752, %v1759
    %v1763 = vadd.f32 %v1753, %v1759
    %v1764 = vadd.f32 %v1754, %v1759
    %v1765 = vmul.f32 %v1761, %v1707
    %v1766 = vmul.f32 %v1762, %v1708
    %v1767 = vmul.f32 %v1763, %v1709
    %v1768 = vmul.f32 %v1764, %v1710
    %v1769 = vpack.c.bf16 %v1765, %v1765
    %v1770 = vpack.c.bf16 %v1766, %v1766
    %v1771 = vpack.c.bf16 %v1767, %v1767
    %v1772 = vpack.c.bf16 %v1768, %v1768
    %v1773 = vld [vmem:[%s7] sm:$0xf]
    %v1774 = vld [vmem:[%s7 + $0x4] sm:$0xf]
    %v1775 = vld [vmem:[%s7 + $0x8] sm:$0xf]
    %v1776 = vld [vmem:[%s7 + $0xc] sm:$0xf]
    %v1777 = vld [vmem:[%s7 + $0x10] sm:$0xf]
    %v1778 = vld [vmem:[%s7 + $0x14] sm:$0xf]
    %v1779 = vld [vmem:[%s7 + $0x18] sm:$0xf]
    %v1780 = vld [vmem:[%s7 + $0x1c] sm:$0xf]
    %v1781 = vld [vmem:[%s7 + $0x20] sm:$0xf]
    %v1782 = vld [vmem:[%s7 + $0x24] sm:$0xf]
    %v1783 = vld [vmem:[%s7 + $0x28] sm:$0xf]
    %v1784 = vld [vmem:[%s7 + $0x2c] sm:$0xf]
    %v1785 = vld [vmem:[%s7 + $0x30] sm:$0xf]
    %v1786 = vld [vmem:[%s7 + $0x34] sm:$0xf]
    %v1787 = vld [vmem:[%s7 + $0x38] sm:$0xf]
    %v1788 = vld [vmem:[%s7 + $0x3c] sm:$0xf]
    %v1789 = vld [vmem:[%s7 + $0x40] sm:$0xf]
    %v1790 = vld [vmem:[%s7 + $0x44] sm:$0xf]
    %v1791 = vld [vmem:[%s7 + $0x48] sm:$0xf]
    %v1792 = vld [vmem:[%s7 + $0x4c] sm:$0xf]
    %v1793 = vld [vmem:[%s7 + $0x50] sm:$0xf]
    %v1794 = vld [vmem:[%s7 + $0x54] sm:$0xf]
    %v1795 = vld [vmem:[%s7 + $0x58] sm:$0xf]
    %v1796 = vld [vmem:[%s7 + $0x5c] sm:$0xf]
    %v1797 = vld [vmem:[%s7 + $0x60] sm:$0xf]
    %v1798 = vld [vmem:[%s7 + $0x64] sm:$0xf]
    %v1799 = vld [vmem:[%s7 + $0x68] sm:$0xf]
    %v1800 = vld [vmem:[%s7 + $0x6c] sm:$0xf]
    %v1801 = vld [vmem:[%s7 + $0x70] sm:$0xf]
    %v1802 = vld [vmem:[%s7 + $0x74] sm:$0xf]
    %v1803 = vld [vmem:[%s7 + $0x78] sm:$0xf]
    %v1804 = vld [vmem:[%s7 + $0x7c] sm:$0xf]
    %v1837 = vunpack.c.l.b16 %v1773
    %v1838 = vunpack.c.l.b16 %v1774
    %v1839 = vunpack.c.l.b16 %v1775
    %v1840 = vunpack.c.l.b16 %v1776
    %v1841 = vunpack.c.l.b16 %v1777
    %v1842 = vunpack.c.l.b16 %v1778
    %v1843 = vunpack.c.l.b16 %v1779
    %v1844 = vunpack.c.l.b16 %v1780
    %v1845 = vunpack.c.l.b16 %v1781
    %v1846 = vunpack.c.l.b16 %v1782
    %v1847 = vunpack.c.l.b16 %v1783
    %v1848 = vunpack.c.l.b16 %v1784
    %v1849 = vunpack.c.l.b16 %v1785
    %v1850 = vunpack.c.l.b16 %v1786
    %v1851 = vunpack.c.l.b16 %v1787
    %v1852 = vunpack.c.l.b16 %v1788
    %v1853 = vunpack.c.l.b16 %v1789
    %v1854 = vunpack.c.l.b16 %v1790
    %v1855 = vunpack.c.l.b16 %v1791
    %v1856 = vunpack.c.l.b16 %v1792
    %v1857 = vunpack.c.l.b16 %v1793
    %v1858 = vunpack.c.l.b16 %v1794
    %v1859 = vunpack.c.l.b16 %v1795
    %v1860 = vunpack.c.l.b16 %v1796
    %v1861 = vunpack.c.l.b16 %v1797
    %v1862 = vunpack.c.l.b16 %v1798
    %v1863 = vunpack.c.l.b16 %v1799
    %v1864 = vunpack.c.l.b16 %v1800
    %v1865 = vunpack.c.l.b16 %v1801
    %v1866 = vunpack.c.l.b16 %v1802
    %v1867 = vunpack.c.l.b16 %v1803
    %v1868 = vunpack.c.l.b16 %v1804
    %v1869 = vpack.c.b16 %v1838, %v1837
    %v1870 = vpack.c.b16 %v1840, %v1839
    %v1871 = vpack.c.b16 %v1842, %v1841
    %v1872 = vpack.c.b16 %v1844, %v1843
    %v1873 = vpack.c.b16 %v1846, %v1845
    %v1874 = vpack.c.b16 %v1848, %v1847
    %v1875 = vpack.c.b16 %v1850, %v1849
    %v1876 = vpack.c.b16 %v1852, %v1851
    %v1877 = vpack.c.b16 %v1854, %v1853
    %v1878 = vpack.c.b16 %v1856, %v1855
    %v1879 = vpack.c.b16 %v1858, %v1857
    %v1880 = vpack.c.b16 %v1860, %v1859
    %v1881 = vpack.c.b16 %v1862, %v1861
    %v1882 = vpack.c.b16 %v1864, %v1863
    %v1883 = vpack.c.b16 %v1866, %v1865
    %v1884 = vpack.c.b16 %v1868, %v1867
    %1901 = vmatprep.subr.bf16.mxu0 0
    %1902 = vmatpush1.bf16.msra.mxu0 %v1869
    %1903 = vmatprep.subr.bf16.mxu0 0
    %1904 = vmatpush1.bf16.msra.mxu0 %v1870
    %1905 = vmatprep.subr.bf16.mxu0 0
    %1906 = vmatpush1.bf16.msra.mxu0 %v1871
    %1907 = vmatprep.subr.bf16.mxu0 0
    %1908 = vmatpush1.bf16.msra.mxu0 %v1872
    %1909 = vmatprep.subr.bf16.mxu0 0
    %1910 = vmatpush1.bf16.msra.mxu0 %v1873
    %1911 = vmatprep.subr.bf16.mxu0 0
    %1912 = vmatpush1.bf16.msra.mxu0 %v1874
    %1913 = vmatprep.subr.bf16.mxu0 0
    %1914 = vmatpush1.bf16.msra.mxu0 %v1875
    %1915 = vmatprep.subr.bf16.mxu0 0
    %1916 = vmatpush1.bf16.msra.mxu0 %v1876
    %1917 = vmatprep.subr.bf16.mxu0 0
    %1918 = vmatpush1.bf16.msra.mxu0 %v1877
    %1919 = vmatprep.subr.bf16.mxu0 0
    %1920 = vmatpush1.bf16.msra.mxu0 %v1878
    %1921 = vmatprep.subr.bf16.mxu0 0
    %1922 = vmatpush1.bf16.msra.mxu0 %v1879
    %1923 = vmatprep.subr.bf16.mxu0 0
    %1924 = vmatpush1.bf16.msra.mxu0 %v1880
    %1925 = vmatprep.subr.bf16.mxu0 0
    %1926 = vmatpush1.bf16.msra.mxu0 %v1881
    %1927 = vmatprep.subr.bf16.mxu0 0
    %1928 = vmatpush1.bf16.msra.mxu0 %v1882
    %1929 = vmatprep.subr.bf16.mxu0 0
    %1930 = vmatpush1.bf16.msra.mxu0 %v1883
    %1931 = vmatprep.subr.bf16.mxu0 0
    %1932 = vmatpush1.bf16.msra.mxu0 %v1884
    %1933 = vmatprep.mubr.bf16.mxu0 %v1770
    %1934 = vmatmul.mubr.bf16.gmra.mrb[0].mxu0 %v1769
    %v1935 = vpop.f32.mrb[0].mxu0
    %v1936 = vadd.f32 0.0, %v1935
    %v1937 = vpop.f32.mrb[0].mxu0
    %v1938 = vpop.f32.mrb[0].mxu0
    %v1939 = vpop.f32.mrb[0].mxu0
    %1940 = vdwg.mxu0
    %v1942 = vrot.slane %v1936, 1
    %1943 = vrot.lane.b32.xlu0 %v1942, 64
    %v1944 = vpop.permute.xlu0 %1943
    %v1946 = vrot.slane %v1936, 2
    %v1948 = vrot.slane %v1936, 3
    %1949 = vrot.lane.b32.xlu0 %v1948, 64
    %v1950 = vpop.permute.xlu0 %1949
    %v1952 = vrot.slane %v1936, 4
    %v1954 = vrot.slane %v1936, 5
    %1955 = vrot.lane.b32.xlu0 %v1954, 64
    %v1956 = vpop.permute.xlu0 %1955
    %v1958 = vrot.slane %v1936, 6
    %v1960 = vrot.slane %v1936, 7
    %1961 = vrot.lane.b32.xlu0 %v1960, 64
    %v1962 = vpop.permute.xlu0 %1961
    %vm1964 = vcmask 523264
    %v1965 = vsel %vm1964, %v1936, %v1944
    %v1966 = vsel %vm1964, %v1946, %v1950
    %v1967 = vsel %vm1964, %v1952, %v1956
    %v1968 = vsel %vm1964, %v1958, %v1962
    %1969 = vmatprep.subr.bf16.mxu0 0
    %1970 = vmatpush1.bf16.msra.mxu0 %v1869
    %1971 = vmatprep.subr.bf16.mxu0 0
    %1972 = vmatpush1.bf16.msra.mxu0 %v1870
    %1973 = vmatprep.subr.bf16.mxu0 0
    %1974 = vmatpush1.bf16.msra.mxu0 %v1871
    %1975 = vmatprep.subr.bf16.mxu0 0
    %1976 = vmatpush1.bf16.msra.mxu0 %v1872
    %1977 = vmatprep.subr.bf16.mxu0 0
    %1978 = vmatpush1.bf16.msra.mxu0 %v1873
    %1979 = vmatprep.subr.bf16.mxu0 0
    %1980 = vmatpush1.bf16.msra.mxu0 %v1874
    %1981 = vmatprep.subr.bf16.mxu0 0
    %1982 = vmatpush1.bf16.msra.mxu0 %v1875
    %1983 = vmatprep.subr.bf16.mxu0 0
    %1984 = vmatpush1.bf16.msra.mxu0 %v1876
    %1985 = vmatprep.subr.bf16.mxu0 0
    %1986 = vmatpush1.bf16.msra.mxu0 %v1877
    %1987 = vmatprep.subr.bf16.mxu0 0
    %1988 = vmatpush1.bf16.msra.mxu0 %v1878
    %1989 = vmatprep.subr.bf16.mxu0 0
    %1990 = vmatpush1.bf16.msra.mxu0 %v1879
    %1991 = vmatprep.subr.bf16.mxu0 0
    %1992 = vmatpush1.bf16.msra.mxu0 %v1880
    %1993 = vmatprep.subr.bf16.mxu0 0
    %1994 = vmatpush1.bf16.msra.mxu0 %v1881
    %1995 = vmatprep.subr.bf16.mxu0 0
    %1996 = vmatpush1.bf16.msra.mxu0 %v1882
    %1997 = vmatprep.subr.bf16.mxu0 0
    %1998 = vmatpush1.bf16.msra.mxu0 %v1883
    %1999 = vmatprep.subr.bf16.mxu0 0
    %2000 = vmatpush1.bf16.msra.mxu0 %v1884
    %2001 = vmatprep.mubr.bf16.mxu0 %v1772
    %2002 = vmatmul.mubr.bf16.gmra.mrb[0].mxu0 %v1771
    %v2003 = vpop.f32.mrb[0].mxu0
    %v2004 = vadd.f32 0.0, %v2003
    %v2005 = vpop.f32.mrb[0].mxu0
    %v2006 = vpop.f32.mrb[0].mxu0
    %v2007 = vpop.f32.mrb[0].mxu0
    %2008 = vdwg.mxu0
    %v2010 = vrot.slane %v2004, 1
    %2011 = vrot.lane.b32.xlu0 %v2010, 64
    %v2012 = vpop.permute.xlu0 %2011
    %v2014 = vrot.slane %v2004, 2
    %v2016 = vrot.slane %v2004, 3
    %2017 = vrot.lane.b32.xlu0 %v2016, 64
    %v2018 = vpop.permute.xlu0 %2017
    %v2020 = vrot.slane %v2004, 4
    %v2022 = vrot.slane %v2004, 5
    %2023 = vrot.lane.b32.xlu0 %v2022, 64
    %v2024 = vpop.permute.xlu0 %2023
    %v2026 = vrot.slane %v2004, 6
    %v2028 = vrot.slane %v2004, 7
    %2029 = vrot.lane.b32.xlu0 %v2028, 64
    %v2030 = vpop.permute.xlu0 %2029
    %v2032 = vsel %vm1964, %v2004, %v2012
    %v2033 = vsel %vm1964, %v2014, %v2018
    %v2034 = vsel %vm1964, %v2020, %v2024
    %v2035 = vsel %vm1964, %v2026, %v2030
    %v2040 = vrot.slane %v2032, 7
    %v2041 = vrot.slane %v2033, 7
    %v2042 = vrot.slane %v2034, 7
    %v2043 = vrot.slane %v2035, 7
    %vm2048 = vcmask 1040384
    %v2049 = vsel %vm2048, %v1965, %v2040
    %v2050 = vsel %vm2048, %v1966, %v2041
    %v2051 = vsel %vm2048, %v1967, %v2042
    %v2052 = vsel %vm2048, %v1968, %v2043
    %v2053 = vpack.c.bf16 %v2049, %v2049
    %v2054 = vpack.c.bf16 %v2050, %v2050
    %v2055 = vpack.c.bf16 %v2051, %v2051
    %v2056 = vpack.c.bf16 %v2052, %v2052
    %s2057 = smul.u32 4, 64
    %s2058 = smul.u32 %s2057, 4
    %s2059 = sshll.u32 %s2058, 4
    %2060 = dma.done [#allocation3], %s2059
    %s2061 = sshll.u32 %s2058, 4
    %2062 = dma.done %s161, %s2061
    %v2063 = vld [vmem:[#allocation2] sm:$0xff]
    %v2064 = vld [vmem:[#allocation2 + $0x8] sm:$0xff]
    %v2065 = vld [vmem:[#allocation2 + $0x10] sm:$0xff]
    %v2066 = vld [vmem:[#allocation2 + $0x18] sm:$0xff]
    %v2067 = vld [vmem:[#allocation2 + $0x20] sm:$0xff]
    %v2068 = vld [vmem:[#allocation2 + $0x28] sm:$0xff]
    %v2069 = vld [vmem:[#allocation2 + $0x30] sm:$0xff]
    %v2070 = vld [vmem:[#allocation2 + $0x38] sm:$0xff]
    %v2071 = vld [vmem:[#allocation2 + $0x40] sm:$0xff]
    %v2072 = vld [vmem:[#allocation2 + $0x48] sm:$0xff]
    %v2073 = vld [vmem:[#allocation2 + $0x50] sm:$0xff]
    %v2074 = vld [vmem:[#allocation2 + $0x58] sm:$0xff]
    %v2075 = vld [vmem:[#allocation2 + $0x60] sm:$0xff]
    %v2076 = vld [vmem:[#allocation2 + $0x68] sm:$0xff]
    %v2077 = vld [vmem:[#allocation2 + $0x70] sm:$0xff]
    %v2078 = vld [vmem:[#allocation2 + $0x78] sm:$0xff]
    %v2079 = vld [vmem:[#allocation2 + $0x80] sm:$0xff]
    %v2080 = vld [vmem:[#allocation2 + $0x88] sm:$0xff]
    %v2081 = vld [vmem:[#allocation2 + $0x90] sm:$0xff]
    %v2082 = vld [vmem:[#allocation2 + $0x98] sm:$0xff]
    %v2083 = vld [vmem:[#allocation2 + $0xa0] sm:$0xff]
    %v2084 = vld [vmem:[#allocation2 + $0xa8] sm:$0xff]
    %v2085 = vld [vmem:[#allocation2 + $0xb0] sm:$0xff]
    %v2086 = vld [vmem:[#allocation2 + $0xb8] sm:$0xff]
    %v2087 = vld [vmem:[#allocation2 + $0xc0] sm:$0xff]
    %v2088 = vld [vmem:[#allocation2 + $0xc8] sm:$0xff]
    %v2089 = vld [vmem:[#allocation2 + $0xd0] sm:$0xff]
    %v2090 = vld [vmem:[#allocation2 + $0xd8] sm:$0xff]
    %v2091 = vld [vmem:[#allocation2 + $0xe0] sm:$0xff]
    %v2092 = vld [vmem:[#allocation2 + $0xe8] sm:$0xff]
    %v2093 = vld [vmem:[#allocation2 + $0xf0] sm:$0xff]
    %v2094 = vld [vmem:[#allocation2 + $0xf8] sm:$0xff]
    %v2095 = vld [vmem:[#allocation2 + $0x100] sm:$0xff]
    %v2096 = vld [vmem:[#allocation2 + $0x108] sm:$0xff]
    %v2097 = vld [vmem:[#allocation2 + $0x110] sm:$0xff]
    %v2098 = vld [vmem:[#allocation2 + $0x118] sm:$0xff]
    %v2099 = vld [vmem:[#allocation2 + $0x120] sm:$0xff]
    %v2100 = vld [vmem:[#allocation2 + $0x128] sm:$0xff]
    %v2101 = vld [vmem:[#allocation2 + $0x130] sm:$0xff]
    %v2102 = vld [vmem:[#allocation2 + $0x138] sm:$0xff]
    %v2103 = vld [vmem:[#allocation2 + $0x140] sm:$0xff]
    %v2104 = vld [vmem:[#allocation2 + $0x148] sm:$0xff]
    %v2105 = vld [vmem:[#allocation2 + $0x150] sm:$0xff]
    %v2106 = vld [vmem:[#allocation2 + $0x158] sm:$0xff]
    %v2107 = vld [vmem:[#allocation2 + $0x160] sm:$0xff]
    %v2108 = vld [vmem:[#allocation2 + $0x168] sm:$0xff]
    %v2109 = vld [vmem:[#allocation2 + $0x170] sm:$0xff]
    %v2110 = vld [vmem:[#allocation2 + $0x178] sm:$0xff]
    %v2111 = vld [vmem:[#allocation2 + $0x180] sm:$0xff]
    %v2112 = vld [vmem:[#allocation2 + $0x188] sm:$0xff]
    %v2113 = vld [vmem:[#allocation2 + $0x190] sm:$0xff]
    %v2114 = vld [vmem:[#allocation2 + $0x198] sm:$0xff]
    %v2115 = vld [vmem:[#allocation2 + $0x1a0] sm:$0xff]
    %v2116 = vld [vmem:[#allocation2 + $0x1a8] sm:$0xff]
    %v2117 = vld [vmem:[#allocation2 + $0x1b0] sm:$0xff]
    %v2118 = vld [vmem:[#allocation2 + $0x1b8] sm:$0xff]
    %v2119 = vld [vmem:[#allocation2 + $0x1c0] sm:$0xff]
    %v2120 = vld [vmem:[#allocation2 + $0x1c8] sm:$0xff]
    %v2121 = vld [vmem:[#allocation2 + $0x1d0] sm:$0xff]
    %v2122 = vld [vmem:[#allocation2 + $0x1d8] sm:$0xff]
    %v2123 = vld [vmem:[#allocation2 + $0x1e0] sm:$0xff]
    %v2124 = vld [vmem:[#allocation2 + $0x1e8] sm:$0xff]
    %v2125 = vld [vmem:[#allocation2 + $0x1f0] sm:$0xff]
    %v2126 = vld [vmem:[#allocation2 + $0x1f8] sm:$0xff]
    %v2127 = vld [vmem:[#allocation2 + $0x200] sm:$0xff]
    %v2128 = vld [vmem:[#allocation2 + $0x208] sm:$0xff]
    %v2129 = vld [vmem:[#allocation2 + $0x210] sm:$0xff]
    %v2130 = vld [vmem:[#allocation2 + $0x218] sm:$0xff]
    %v2131 = vld [vmem:[#allocation2 + $0x220] sm:$0xff]
    %v2132 = vld [vmem:[#allocation2 + $0x228] sm:$0xff]
    %v2133 = vld [vmem:[#allocation2 + $0x230] sm:$0xff]
    %v2134 = vld [vmem:[#allocation2 + $0x238] sm:$0xff]
    %v2135 = vld [vmem:[#allocation2 + $0x240] sm:$0xff]
    %v2136 = vld [vmem:[#allocation2 + $0x248] sm:$0xff]
    %v2137 = vld [vmem:[#allocation2 + $0x250] sm:$0xff]
    %v2138 = vld [vmem:[#allocation2 + $0x258] sm:$0xff]
    %v2139 = vld [vmem:[#allocation2 + $0x260] sm:$0xff]
    %v2140 = vld [vmem:[#allocation2 + $0x268] sm:$0xff]
    %v2141 = vld [vmem:[#allocation2 + $0x270] sm:$0xff]
    %v2142 = vld [vmem:[#allocation2 + $0x278] sm:$0xff]
    %v2143 = vld [vmem:[#allocation2 + $0x280] sm:$0xff]
    %v2144 = vld [vmem:[#allocation2 + $0x288] sm:$0xff]
    %v2145 = vld [vmem:[#allocation2 + $0x290] sm:$0xff]
    %v2146 = vld [vmem:[#allocation2 + $0x298] sm:$0xff]
    %v2147 = vld [vmem:[#allocation2 + $0x2a0] sm:$0xff]
    %v2148 = vld [vmem:[#allocation2 + $0x2a8] sm:$0xff]
    %v2149 = vld [vmem:[#allocation2 + $0x2b0] sm:$0xff]
    %v2150 = vld [vmem:[#allocation2 + $0x2b8] sm:$0xff]
    %v2151 = vld [vmem:[#allocation2 + $0x2c0] sm:$0xff]
    %v2152 = vld [vmem:[#allocation2 + $0x2c8] sm:$0xff]
    %v2153 = vld [vmem:[#allocation2 + $0x2d0] sm:$0xff]
    %v2154 = vld [vmem:[#allocation2 + $0x2d8] sm:$0xff]
    %v2155 = vld [vmem:[#allocation2 + $0x2e0] sm:$0xff]
    %v2156 = vld [vmem:[#allocation2 + $0x2e8] sm:$0xff]
    %v2157 = vld [vmem:[#allocation2 + $0x2f0] sm:$0xff]
    %v2158 = vld [vmem:[#allocation2 + $0x2f8] sm:$0xff]
    %v2159 = vld [vmem:[#allocation2 + $0x300] sm:$0xff]
    %v2160 = vld [vmem:[#allocation2 + $0x308] sm:$0xff]
    %v2161 = vld [vmem:[#allocation2 + $0x310] sm:$0xff]
    %v2162 = vld [vmem:[#allocation2 + $0x318] sm:$0xff]
    %v2163 = vld [vmem:[#allocation2 + $0x320] sm:$0xff]
    %v2164 = vld [vmem:[#allocation2 + $0x328] sm:$0xff]
    %v2165 = vld [vmem:[#allocation2 + $0x330] sm:$0xff]
    %v2166 = vld [vmem:[#allocation2 + $0x338] sm:$0xff]
    %v2167 = vld [vmem:[#allocation2 + $0x340] sm:$0xff]
    %v2168 = vld [vmem:[#allocation2 + $0x348] sm:$0xff]
    %v2169 = vld [vmem:[#allocation2 + $0x350] sm:$0xff]
    %v2170 = vld [vmem:[#allocation2 + $0x358] sm:$0xff]
    %v2171 = vld [vmem:[#allocation2 + $0x360] sm:$0xff]
    %v2172 = vld [vmem:[#allocation2 + $0x368] sm:$0xff]
    %v2173 = vld [vmem:[#allocation2 + $0x370] sm:$0xff]
    %v2174 = vld [vmem:[#allocation2 + $0x378] sm:$0xff]
    %v2175 = vld [vmem:[#allocation2 + $0x380] sm:$0xff]
    %v2176 = vld [vmem:[#allocation2 + $0x388] sm:$0xff]
    %v2177 = vld [vmem:[#allocation2 + $0x390] sm:$0xff]
    %v2178 = vld [vmem:[#allocation2 + $0x398] sm:$0xff]
    %v2179 = vld [vmem:[#allocation2 + $0x3a0] sm:$0xff]
    %v2180 = vld [vmem:[#allocation2 + $0x3a8] sm:$0xff]
    %v2181 = vld [vmem:[#allocation2 + $0x3b0] sm:$0xff]
    %v2182 = vld [vmem:[#allocation2 + $0x3b8] sm:$0xff]
    %v2183 = vld [vmem:[#allocation2 + $0x3c0] sm:$0xff]
    %v2184 = vld [vmem:[#allocation2 + $0x3c8] sm:$0xff]
    %v2185 = vld [vmem:[#allocation2 + $0x3d0] sm:$0xff]
    %v2186 = vld [vmem:[#allocation2 + $0x3d8] sm:$0xff]
    %v2187 = vld [vmem:[#allocation2 + $0x3e0] sm:$0xff]
    %v2188 = vld [vmem:[#allocation2 + $0x3e8] sm:$0xff]
    %v2189 = vld [vmem:[#allocation2 + $0x3f0] sm:$0xff]
    %v2190 = vld [vmem:[#allocation2 + $0x3f8] sm:$0xff]
    %v2191 = vld [vmem:[%s3] sm:$0xff]
    %v2193 = vcombine.high %v2191, %v2191
    %v2195 = vunpack.c.l.s4 1983009808
    %v2196 = vunpack.c.0.s8 %v2195
    %v2197 = vlaneseq
    %v2198 = vshrl.u32 %v2197, 7
    %v2199 = vsub.s32 %v2196, %v2198
    %v2200 = vrot.slane %v2191, %v2199
    %v2202 = vunpack.c.l.s4 1983009808
    %v2203 = vunpack.c.0.s8 %v2202
    %v2204 = vlaneseq
    %v2205 = vshrl.u32 %v2204, 7
    %v2206 = vsub.s32 %v2203, %v2205
    %v2207 = vrot.slane %v2193, %v2206
    %v2208 = vcombine.high %v2200, %v2200
    %v2209 = vcombine.high %v2207, %v2207
    %v2214 = vpack.c.bf16 %v2200, %v2200
    %v2215 = vpack.c.bf16 %v2208, %v2208
    %v2216 = vpack.c.bf16 %v2207, %v2207
    %v2217 = vpack.c.bf16 %v2209, %v2209
    %v2218 = vld [vmem:[%s160] sm:$0xff]
    %v2219 = vld [vmem:[%s160 + $0x8] sm:$0xff]
    %v2220 = vld [vmem:[%s160 + $0x10] sm:$0xff]
    %v2221 = vld [vmem:[%s160 + $0x18] sm:$0xff]
    %v2222 = vld [vmem:[%s160 + $0x20] sm:$0xff]
    %v2223 = vld [vmem:[%s160 + $0x28] sm:$0xff]
    %v2224 = vld [vmem:[%s160 + $0x30] sm:$0xff]
    %v2225 = vld [vmem:[%s160 + $0x38] sm:$0xff]
    %v2226 = vld [vmem:[%s160 + $0x40] sm:$0xff]
    %v2227 = vld [vmem:[%s160 + $0x48] sm:$0xff]
    %v2228 = vld [vmem:[%s160 + $0x50] sm:$0xff]
    %v2229 = vld [vmem:[%s160 + $0x58] sm:$0xff]
    %v2230 = vld [vmem:[%s160 + $0x60] sm:$0xff]
    %v2231 = vld [vmem:[%s160 + $0x68] sm:$0xff]
    %v2232 = vld [vmem:[%s160 + $0x70] sm:$0xff]
    %v2233 = vld [vmem:[%s160 + $0x78] sm:$0xff]
    %v2234 = vld [vmem:[%s160 + $0x80] sm:$0xff]
    %v2235 = vld [vmem:[%s160 + $0x88] sm:$0xff]
    %v2236 = vld [vmem:[%s160 + $0x90] sm:$0xff]
    %v2237 = vld [vmem:[%s160 + $0x98] sm:$0xff]
    %v2238 = vld [vmem:[%s160 + $0xa0] sm:$0xff]
    %v2239 = vld [vmem:[%s160 + $0xa8] sm:$0xff]
    %v2240 = vld [vmem:[%s160 + $0xb0] sm:$0xff]
    %v2241 = vld [vmem:[%s160 + $0xb8] sm:$0xff]
    %v2242 = vld [vmem:[%s160 + $0xc0] sm:$0xff]
    %v2243 = vld [vmem:[%s160 + $0xc8] sm:$0xff]
    %v2244 = vld [vmem:[%s160 + $0xd0] sm:$0xff]
    %v2245 = vld [vmem:[%s160 + $0xd8] sm:$0xff]
    %v2246 = vld [vmem:[%s160 + $0xe0] sm:$0xff]
    %v2247 = vld [vmem:[%s160 + $0xe8] sm:$0xff]
    %v2248 = vld [vmem:[%s160 + $0xf0] sm:$0xff]
    %v2249 = vld [vmem:[%s160 + $0xf8] sm:$0xff]
    %v2250 = vld [vmem:[%s160 + $0x100] sm:$0xff]
    %v2251 = vld [vmem:[%s160 + $0x108] sm:$0xff]
    %v2252 = vld [vmem:[%s160 + $0x110] sm:$0xff]
    %v2253 = vld [vmem:[%s160 + $0x118] sm:$0xff]
    %v2254 = vld [vmem:[%s160 + $0x120] sm:$0xff]
    %v2255 = vld [vmem:[%s160 + $0x128] sm:$0xff]
    %v2256 = vld [vmem:[%s160 + $0x130] sm:$0xff]
    %v2257 = vld [vmem:[%s160 + $0x138] sm:$0xff]
    %v2258 = vld [vmem:[%s160 + $0x140] sm:$0xff]
    %v2259 = vld [vmem:[%s160 + $0x148] sm:$0xff]
    %v2260 = vld [vmem:[%s160 + $0x150] sm:$0xff]
    %v2261 = vld [vmem:[%s160 + $0x158] sm:$0xff]
    %v2262 = vld [vmem:[%s160 + $0x160] sm:$0xff]
    %v2263 = vld [vmem:[%s160 + $0x168] sm:$0xff]
    %v2264 = vld [vmem:[%s160 + $0x170] sm:$0xff]
    %v2265 = vld [vmem:[%s160 + $0x178] sm:$0xff]
    %v2266 = vld [vmem:[%s160 + $0x180] sm:$0xff]
    %v2267 = vld [vmem:[%s160 + $0x188] sm:$0xff]
    %v2268 = vld [vmem:[%s160 + $0x190] sm:$0xff]
    %v2269 = vld [vmem:[%s160 + $0x198] sm:$0xff]
    %v2270 = vld [vmem:[%s160 + $0x1a0] sm:$0xff]
    %v2271 = vld [vmem:[%s160 + $0x1a8] sm:$0xff]
    %v2272 = vld [vmem:[%s160 + $0x1b0] sm:$0xff]
    %v2273 = vld [vmem:[%s160 + $0x1b8] sm:$0xff]
    %v2274 = vld [vmem:[%s160 + $0x1c0] sm:$0xff]
    %v2275 = vld [vmem:[%s160 + $0x1c8] sm:$0xff]
    %v2276 = vld [vmem:[%s160 + $0x1d0] sm:$0xff]
    %v2277 = vld [vmem:[%s160 + $0x1d8] sm:$0xff]
    %v2278 = vld [vmem:[%s160 + $0x1e0] sm:$0xff]
    %v2279 = vld [vmem:[%s160 + $0x1e8] sm:$0xff]
    %v2280 = vld [vmem:[%s160 + $0x1f0] sm:$0xff]
    %v2281 = vld [vmem:[%s160 + $0x1f8] sm:$0xff]
    %v2282 = vld [vmem:[%s160 + $0x200] sm:$0xff]
    %v2283 = vld [vmem:[%s160 + $0x208] sm:$0xff]
    %v2284 = vld [vmem:[%s160 + $0x210] sm:$0xff]
    %v2285 = vld [vmem:[%s160 + $0x218] sm:$0xff]
    %v2286 = vld [vmem:[%s160 + $0x220] sm:$0xff]
    %v2287 = vld [vmem:[%s160 + $0x228] sm:$0xff]
    %v2288 = vld [vmem:[%s160 + $0x230] sm:$0xff]
    %v2289 = vld [vmem:[%s160 + $0x238] sm:$0xff]
    %v2290 = vld [vmem:[%s160 + $0x240] sm:$0xff]
    %v2291 = vld [vmem:[%s160 + $0x248] sm:$0xff]
    %v2292 = vld [vmem:[%s160 + $0x250] sm:$0xff]
    %v2293 = vld [vmem:[%s160 + $0x258] sm:$0xff]
    %v2294 = vld [vmem:[%s160 + $0x260] sm:$0xff]
    %v2295 = vld [vmem:[%s160 + $0x268] sm:$0xff]
    %v2296 = vld [vmem:[%s160 + $0x270] sm:$0xff]
    %v2297 = vld [vmem:[%s160 + $0x278] sm:$0xff]
    %v2298 = vld [vmem:[%s160 + $0x280] sm:$0xff]
    %v2299 = vld [vmem:[%s160 + $0x288] sm:$0xff]
    %v2300 = vld [vmem:[%s160 + $0x290] sm:$0xff]
    %v2301 = vld [vmem:[%s160 + $0x298] sm:$0xff]
    %v2302 = vld [vmem:[%s160 + $0x2a0] sm:$0xff]
    %v2303 = vld [vmem:[%s160 + $0x2a8] sm:$0xff]
    %v2304 = vld [vmem:[%s160 + $0x2b0] sm:$0xff]
    %v2305 = vld [vmem:[%s160 + $0x2b8] sm:$0xff]
    %v2306 = vld [vmem:[%s160 + $0x2c0] sm:$0xff]
    %v2307 = vld [vmem:[%s160 + $0x2c8] sm:$0xff]
    %v2308 = vld [vmem:[%s160 + $0x2d0] sm:$0xff]
    %v2309 = vld [vmem:[%s160 + $0x2d8] sm:$0xff]
    %v2310 = vld [vmem:[%s160 + $0x2e0] sm:$0xff]
    %v2311 = vld [vmem:[%s160 + $0x2e8] sm:$0xff]
    %v2312 = vld [vmem:[%s160 + $0x2f0] sm:$0xff]
    %v2313 = vld [vmem:[%s160 + $0x2f8] sm:$0xff]
    %v2314 = vld [vmem:[%s160 + $0x300] sm:$0xff]
    %v2315 = vld [vmem:[%s160 + $0x308] sm:$0xff]
    %v2316 = vld [vmem:[%s160 + $0x310] sm:$0xff]
    %v2317 = vld [vmem:[%s160 + $0x318] sm:$0xff]
    %v2318 = vld [vmem:[%s160 + $0x320] sm:$0xff]
    %v2319 = vld [vmem:[%s160 + $0x328] sm:$0xff]
    %v2320 = vld [vmem:[%s160 + $0x330] sm:$0xff]
    %v2321 = vld [vmem:[%s160 + $0x338] sm:$0xff]
    %v2322 = vld [vmem:[%s160 + $0x340] sm:$0xff]
    %v2323 = vld [vmem:[%s160 + $0x348] sm:$0xff]
    %v2324 = vld [vmem:[%s160 + $0x350] sm:$0xff]
    %v2325 = vld [vmem:[%s160 + $0x358] sm:$0xff]
    %v2326 = vld [vmem:[%s160 + $0x360] sm:$0xff]
    %v2327 = vld [vmem:[%s160 + $0x368] sm:$0xff]
    %v2328 = vld [vmem:[%s160 + $0x370] sm:$0xff]
    %v2329 = vld [vmem:[%s160 + $0x378] sm:$0xff]
    %v2330 = vld [vmem:[%s160 + $0x380] sm:$0xff]
    %v2331 = vld [vmem:[%s160 + $0x388] sm:$0xff]
    %v2332 = vld [vmem:[%s160 + $0x390] sm:$0xff]
    %v2333 = vld [vmem:[%s160 + $0x398] sm:$0xff]
    %v2334 = vld [vmem:[%s160 + $0x3a0] sm:$0xff]
    %v2335 = vld [vmem:[%s160 + $0x3a8] sm:$0xff]
    %v2336 = vld [vmem:[%s160 + $0x3b0] sm:$0xff]
    %v2337 = vld [vmem:[%s160 + $0x3b8] sm:$0xff]
    %v2338 = vld [vmem:[%s160 + $0x3c0] sm:$0xff]
    %v2339 = vld [vmem:[%s160 + $0x3c8] sm:$0xff]
    %v2340 = vld [vmem:[%s160 + $0x3d0] sm:$0xff]
    %v2341 = vld [vmem:[%s160 + $0x3d8] sm:$0xff]
    %v2342 = vld [vmem:[%s160 + $0x3e0] sm:$0xff]
    %v2343 = vld [vmem:[%s160 + $0x3e8] sm:$0xff]
    %v2344 = vld [vmem:[%s160 + $0x3f0] sm:$0xff]
    %v2345 = vld [vmem:[%s160 + $0x3f8] sm:$0xff]
    %2346 = vmatprep.subr.bf16.mxu0 %v2219
    %2347 = vmatpush1.bf16.msra.mxu0 %v2218
    %2348 = vmatprep.subr.bf16.mxu0 %v2223
    %2349 = vmatpush1.bf16.msra.mxu0 %v2222
    %2350 = vmatprep.subr.bf16.mxu0 %v2227
    %2351 = vmatpush1.bf16.msra.mxu0 %v2226
    %2352 = vmatprep.subr.bf16.mxu0 %v2231
    %2353 = vmatpush1.bf16.msra.mxu0 %v2230
    %2354 = vmatprep.subr.bf16.mxu0 %v2235
    %2355 = vmatpush1.bf16.msra.mxu0 %v2234
    %2356 = vmatprep.subr.bf16.mxu0 %v2239
    %2357 = vmatpush1.bf16.msra.mxu0 %v2238
    %2358 = vmatprep.subr.bf16.mxu0 %v2243
    %2359 = vmatpush1.bf16.msra.mxu0 %v2242
    %2360 = vmatprep.subr.bf16.mxu0 %v2247
    %2361 = vmatpush1.bf16.msra.mxu0 %v2246
    %2362 = vmatprep.subr.bf16.mxu0 %v2251
    %2363 = vmatpush1.bf16.msra.mxu0 %v2250
    %2364 = vmatprep.subr.bf16.mxu0 %v2255
    %2365 = vmatpush1.bf16.msra.mxu0 %v2254
    %2366 = vmatprep.subr.bf16.mxu0 %v2259
    %2367 = vmatpush1.bf16.msra.mxu0 %v2258
    %2368 = vmatprep.subr.bf16.mxu0 %v2263
    %2369 = vmatpush1.bf16.msra.mxu0 %v2262
    %2370 = vmatprep.subr.bf16.mxu0 %v2267
    %2371 = vmatpush1.bf16.msra.mxu0 %v2266
    %2372 = vmatprep.subr.bf16.mxu0 %v2271
    %2373 = vmatpush1.bf16.msra.mxu0 %v2270
    %2374 = vmatprep.subr.bf16.mxu0 %v2275
    %2375 = vmatpush1.bf16.msra.mxu0 %v2274
    %2376 = vmatprep.subr.bf16.mxu0 %v2279
    %2377 = vmatpush1.bf16.msra.mxu0 %v2278
    %2378 = vmatprep.mubr.bf16.mxu0 %v2215
    %2379 = vmatmul.mubr.bf16.gmra.mrb[0].mxu0 %v2214
    %v2380 = vpop.f32.mrb[0].mxu0
    %v2381 = vadd.f32 0.0, %v2380
    %v2382 = vpop.f32.mrb[0].mxu0
    %v2383 = vadd.f32 0.0, %v2382
    %v2384 = vpop.f32.mrb[0].mxu0
    %v2385 = vpop.f32.mrb[0].mxu0
    %2386 = vdwg.mxu0
    %2387 = vmatprep.subr.bf16.mxu0 %v2283
    %2388 = vmatpush1.bf16.msra.mxu0 %v2282
    %2389 = vmatprep.subr.bf16.mxu0 %v2287
    %2390 = vmatpush1.bf16.msra.mxu0 %v2286
    %2391 = vmatprep.subr.bf16.mxu0 %v2291
    %2392 = vmatpush1.bf16.msra.mxu0 %v2290
    %2393 = vmatprep.subr.bf16.mxu0 %v2295
    %2394 = vmatpush1.bf16.msra.mxu0 %v2294
    %2395 = vmatprep.subr.bf16.mxu0 %v2299
    %2396 = vmatpush1.bf16.msra.mxu0 %v2298
    %2397 = vmatprep.subr.bf16.mxu0 %v2303
    %2398 = vmatpush1.bf16.msra.mxu0 %v2302
    %2399 = vmatprep.subr.bf16.mxu0 %v2307
    %2400 = vmatpush1.bf16.msra.mxu0 %v2306
    %2401 = vmatprep.subr.bf16.mxu0 %v2311
    %2402 = vmatpush1.bf16.msra.mxu0 %v2310
    %2403 = vmatprep.subr.bf16.mxu0 %v2315
    %2404 = vmatpush1.bf16.msra.mxu0 %v2314
    %2405 = vmatprep.subr.bf16.mxu0 %v2319
    %2406 = vmatpush1.bf16.msra.mxu0 %v2318
    %2407 = vmatprep.subr.bf16.mxu0 %v2323
    %2408 = vmatpush1.bf16.msra.mxu0 %v2322
    %2409 = vmatprep.subr.bf16.mxu0 %v2327
    %2410 = vmatpush1.bf16.msra.mxu0 %v2326
    %2411 = vmatprep.subr.bf16.mxu0 %v2331
    %2412 = vmatpush1.bf16.msra.mxu0 %v2330
    %2413 = vmatprep.subr.bf16.mxu0 %v2335
    %2414 = vmatpush1.bf16.msra.mxu0 %v2334
    %2415 = vmatprep.subr.bf16.mxu0 %v2339
    %2416 = vmatpush1.bf16.msra.mxu0 %v2338
    %2417 = vmatprep.subr.bf16.mxu0 %v2343
    %2418 = vmatpush1.bf16.msra.mxu0 %v2342
    %2419 = vmatprep.mubr.bf16.mxu0 %v2217
    %2420 = vmatmul.mubr.bf16.gmra.mrb[0].mxu0 %v2216
    %v2421 = vpop.f32.mrb[0].mxu0
    %v2422 = vadd.f32 %v2381, %v2421
    %v2423 = vpop.f32.mrb[0].mxu0
    %v2424 = vadd.f32 %v2383, %v2423
    %v2425 = vpop.f32.mrb[0].mxu0
    %v2426 = vpop.f32.mrb[0].mxu0
    %2427 = vdwg.mxu0
    %2428 = vmatprep.subr.bf16.mxu0 %v2221
    %2429 = vmatpush1.bf16.msra.mxu0 %v2220
    %2430 = vmatprep.subr.bf16.mxu0 %v2225
    %2431 = vmatpush1.bf16.msra.mxu0 %v2224
    %2432 = vmatprep.subr.bf16.mxu0 %v2229
    %2433 = vmatpush1.bf16.msra.mxu0 %v2228
    %2434 = vmatprep.subr.bf16.mxu0 %v2233
    %2435 = vmatpush1.bf16.msra.mxu0 %v2232
    %2436 = vmatprep.subr.bf16.mxu0 %v2237
    %2437 = vmatpush1.bf16.msra.mxu0 %v2236
    %2438 = vmatprep.subr.bf16.mxu0 %v2241
    %2439 = vmatpush1.bf16.msra.mxu0 %v2240
    %2440 = vmatprep.subr.bf16.mxu0 %v2245
    %2441 = vmatpush1.bf16.msra.mxu0 %v2244
    %2442 = vmatprep.subr.bf16.mxu0 %v2249
    %2443 = vmatpush1.bf16.msra.mxu0 %v2248
    %2444 = vmatprep.subr.bf16.mxu0 %v2253
    %2445 = vmatpush1.bf16.msra.mxu0 %v2252
    %2446 = vmatprep.subr.bf16.mxu0 %v2257
    %2447 = vmatpush1.bf16.msra.mxu0 %v2256
    %2448 = vmatprep.subr.bf16.mxu0 %v2261
    %2449 = vmatpush1.bf16.msra.mxu0 %v2260
    %2450 = vmatprep.subr.bf16.mxu0 %v2265
    %2451 = vmatpush1.bf16.msra.mxu0 %v2264
    %2452 = vmatprep.subr.bf16.mxu0 %v2269
    %2453 = vmatpush1.bf16.msra.mxu0 %v2268
    %2454 = vmatprep.subr.bf16.mxu0 %v2273
    %2455 = vmatpush1.bf16.msra.mxu0 %v2272
    %2456 = vmatprep.subr.bf16.mxu0 %v2277
    %2457 = vmatpush1.bf16.msra.mxu0 %v2276
    %2458 = vmatprep.subr.bf16.mxu0 %v2281
    %2459 = vmatpush1.bf16.msra.mxu0 %v2280
    %2460 = vmatprep.mubr.bf16.mxu0 %v2215
    %2461 = vmatmul.mubr.bf16.gmra.mrb[0].mxu0 %v2214
    %v2462 = vpop.f32.mrb[0].mxu0
    %v2463 = vadd.f32 0.0, %v2462
    %v2464 = vpop.f32.mrb[0].mxu0
    %v2465 = vadd.f32 0.0, %v2464
    %v2466 = vpop.f32.mrb[0].mxu0
    %v2467 = vpop.f32.mrb[0].mxu0
    %2468 = vdwg.mxu0
    %2469 = vmatprep.subr.bf16.mxu0 %v2285
    %2470 = vmatpush1.bf16.msra.mxu0 %v2284
    %2471 = vmatprep.subr.bf16.mxu0 %v2289
    %2472 = vmatpush1.bf16.msra.mxu0 %v2288
    %2473 = vmatprep.subr.bf16.mxu0 %v2293
    %2474 = vmatpush1.bf16.msra.mxu0 %v2292
    %2475 = vmatprep.subr.bf16.mxu0 %v2297
    %2476 = vmatpush1.bf16.msra.mxu0 %v2296
    %2477 = vmatprep.subr.bf16.mxu0 %v2301
    %2478 = vmatpush1.bf16.msra.mxu0 %v2300
    %2479 = vmatprep.subr.bf16.mxu0 %v2305
    %2480 = vmatpush1.bf16.msra.mxu0 %v2304
    %2481 = vmatprep.subr.bf16.mxu0 %v2309
    %2482 = vmatpush1.bf16.msra.mxu0 %v2308
    %2483 = vmatprep.subr.bf16.mxu0 %v2313
    %2484 = vmatpush1.bf16.msra.mxu0 %v2312
    %2485 = vmatprep.subr.bf16.mxu0 %v2317
    %2486 = vmatpush1.bf16.msra.mxu0 %v2316
    %2487 = vmatprep.subr.bf16.mxu0 %v2321
    %2488 = vmatpush1.bf16.msra.mxu0 %v2320
    %2489 = vmatprep.subr.bf16.mxu0 %v2325
    %2490 = vmatpush1.bf16.msra.mxu0 %v2324
    %2491 = vmatprep.subr.bf16.mxu0 %v2329
    %2492 = vmatpush1.bf16.msra.mxu0 %v2328
    %2493 = vmatprep.subr.bf16.mxu0 %v2333
    %2494 = vmatpush1.bf16.msra.mxu0 %v2332
    %2495 = vmatprep.subr.bf16.mxu0 %v2337
    %2496 = vmatpush1.bf16.msra.mxu0 %v2336
    %2497 = vmatprep.subr.bf16.mxu0 %v2341
    %2498 = vmatpush1.bf16.msra.mxu0 %v2340
    %2499 = vmatprep.subr.bf16.mxu0 %v2345
    %2500 = vmatpush1.bf16.msra.mxu0 %v2344
    %2501 = vmatprep.mubr.bf16.mxu0 %v2217
    %2502 = vmatmul.mubr.bf16.gmra.mrb[0].mxu0 %v2216
    %v2503 = vpop.f32.mrb[0].mxu0
    %v2504 = vadd.f32 %v2463, %v2503
    %v2505 = vpop.f32.mrb[0].mxu0
    %v2506 = vadd.f32 %v2465, %v2505
    %v2507 = vpop.f32.mrb[0].mxu0
    %v2508 = vpop.f32.mrb[0].mxu0
    %2509 = vdwg.mxu0
    %2510 = vmatprep.subr.bf16.mxu0 %v2064
    %2511 = vmatpush1.bf16.msra.mxu0 %v2063
    %2512 = vmatprep.subr.bf16.mxu0 %v2068
    %2513 = vmatpush1.bf16.msra.mxu0 %v2067
    %2514 = vmatprep.subr.bf16.mxu0 %v2072
    %2515 = vmatpush1.bf16.msra.mxu0 %v2071
    %2516 = vmatprep.subr.bf16.mxu0 %v2076
    %2517 = vmatpush1.bf16.msra.mxu0 %v2075
    %2518 = vmatprep.subr.bf16.mxu0 %v2080
    %2519 = vmatpush1.bf16.msra.mxu0 %v2079
    %2520 = vmatprep.subr.bf16.mxu0 %v2084
    %2521 = vmatpush1.bf16.msra.mxu0 %v2083
    %2522 = vmatprep.subr.bf16.mxu0 %v2088
    %2523 = vmatpush1.bf16.msra.mxu0 %v2087
    %2524 = vmatprep.subr.bf16.mxu0 %v2092
    %2525 = vmatpush1.bf16.msra.mxu0 %v2091
    %2526 = vmatprep.subr.bf16.mxu0 %v2096
    %2527 = vmatpush1.bf16.msra.mxu0 %v2095
    %2528 = vmatprep.subr.bf16.mxu0 %v2100
    %2529 = vmatpush1.bf16.msra.mxu0 %v2099
    %2530 = vmatprep.subr.bf16.mxu0 %v2104
    %2531 = vmatpush1.bf16.msra.mxu0 %v2103
    %2532 = vmatprep.subr.bf16.mxu0 %v2108
    %2533 = vmatpush1.bf16.msra.mxu0 %v2107
    %2534 = vmatprep.subr.bf16.mxu0 %v2112
    %2535 = vmatpush1.bf16.msra.mxu0 %v2111
    %2536 = vmatprep.subr.bf16.mxu0 %v2116
    %2537 = vmatpush1.bf16.msra.mxu0 %v2115
    %2538 = vmatprep.subr.bf16.mxu0 %v2120
    %2539 = vmatpush1.bf16.msra.mxu0 %v2119
    %2540 = vmatprep.subr.bf16.mxu0 %v2124
    %2541 = vmatpush1.bf16.msra.mxu0 %v2123
    %2542 = vmatprep.mubr.bf16.mxu0 %v2054
    %2543 = vmatmul.mubr.bf16.gmra.mrb[0].mxu0 %v2053
    %v2544 = vpop.f32.mrb[0].mxu0
    %v2545 = vadd.f32 %v2422, %v2544
    %v2546 = vpop.f32.mrb[0].mxu0
    %v2547 = vadd.f32 %v2424, %v2546
    %v2548 = vpop.f32.mrb[0].mxu0
    %v2549 = vpop.f32.mrb[0].mxu0
    %2550 = vdwg.mxu0
    %2551 = vmatprep.subr.bf16.mxu0 %v2128
    %2552 = vmatpush1.bf16.msra.mxu0 %v2127
    %2553 = vmatprep.subr.bf16.mxu0 %v2132
    %2554 = vmatpush1.bf16.msra.mxu0 %v2131
    %2555 = vmatprep.subr.bf16.mxu0 %v2136
    %2556 = vmatpush1.bf16.msra.mxu0 %v2135
    %2557 = vmatprep.subr.bf16.mxu0 %v2140
    %2558 = vmatpush1.bf16.msra.mxu0 %v2139
    %2559 = vmatprep.subr.bf16.mxu0 %v2144
    %2560 = vmatpush1.bf16.msra.mxu0 %v2143
    %2561 = vmatprep.subr.bf16.mxu0 %v2148
    %2562 = vmatpush1.bf16.msra.mxu0 %v2147
    %2563 = vmatprep.subr.bf16.mxu0 %v2152
    %2564 = vmatpush1.bf16.msra.mxu0 %v2151
    %2565 = vmatprep.subr.bf16.mxu0 %v2156
    %2566 = vmatpush1.bf16.msra.mxu0 %v2155
    %2567 = vmatprep.subr.bf16.mxu0 %v2160
    %2568 = vmatpush1.bf16.msra.mxu0 %v2159
    %2569 = vmatprep.subr.bf16.mxu0 %v2164
    %2570 = vmatpush1.bf16.msra.mxu0 %v2163
    %2571 = vmatprep.subr.bf16.mxu0 %v2168
    %2572 = vmatpush1.bf16.msra.mxu0 %v2167
    %2573 = vmatprep.subr.bf16.mxu0 %v2172
    %2574 = vmatpush1.bf16.msra.mxu0 %v2171
    %2575 = vmatprep.subr.bf16.mxu0 %v2176
    %2576 = vmatpush1.bf16.msra.mxu0 %v2175
    %2577 = vmatprep.subr.bf16.mxu0 %v2180
    %2578 = vmatpush1.bf16.msra.mxu0 %v2179
    %2579 = vmatprep.subr.bf16.mxu0 %v2184
    %2580 = vmatpush1.bf16.msra.mxu0 %v2183
    %2581 = vmatprep.subr.bf16.mxu0 %v2188
    %2582 = vmatpush1.bf16.msra.mxu0 %v2187
    %2583 = vmatprep.mubr.bf16.mxu0 %v2056
    %2584 = vmatmul.mubr.bf16.gmra.mrb[0].mxu0 %v2055
    %v2585 = vpop.f32.mrb[0].mxu0
    %v2586 = vadd.f32 %v2545, %v2585
    %v2587 = vpop.f32.mrb[0].mxu0
    %v2588 = vadd.f32 %v2547, %v2587
    %v2589 = vpop.f32.mrb[0].mxu0
    %v2590 = vpop.f32.mrb[0].mxu0
    %2591 = vdwg.mxu0
    %2592 = vmatprep.subr.bf16.mxu0 %v2066
    %2593 = vmatpush1.bf16.msra.mxu0 %v2065
    %2594 = vmatprep.subr.bf16.mxu0 %v2070
    %2595 = vmatpush1.bf16.msra.mxu0 %v2069
    %2596 = vmatprep.subr.bf16.mxu0 %v2074
    %2597 = vmatpush1.bf16.msra.mxu0 %v2073
    %2598 = vmatprep.subr.bf16.mxu0 %v2078
    %2599 = vmatpush1.bf16.msra.mxu0 %v2077
    %2600 = vmatprep.subr.bf16.mxu0 %v2082
    %2601 = vmatpush1.bf16.msra.mxu0 %v2081
    %2602 = vmatprep.subr.bf16.mxu0 %v2086
    %2603 = vmatpush1.bf16.msra.mxu0 %v2085
    %2604 = vmatprep.subr.bf16.mxu0 %v2090
    %2605 = vmatpush1.bf16.msra.mxu0 %v2089
    %2606 = vmatprep.subr.bf16.mxu0 %v2094
    %2607 = vmatpush1.bf16.msra.mxu0 %v2093
    %2608 = vmatprep.subr.bf16.mxu0 %v2098
    %2609 = vmatpush1.bf16.msra.mxu0 %v2097
    %2610 = vmatprep.subr.bf16.mxu0 %v2102
    %2611 = vmatpush1.bf16.msra.mxu0 %v2101
    %2612 = vmatprep.subr.bf16.mxu0 %v2106
    %2613 = vmatpush1.bf16.msra.mxu0 %v2105
    %2614 = vmatprep.subr.bf16.mxu0 %v2110
    %2615 = vmatpush1.bf16.msra.mxu0 %v2109
    %2616 = vmatprep.subr.bf16.mxu0 %v2114
    %2617 = vmatpush1.bf16.msra.mxu0 %v2113
    %2618 = vmatprep.subr.bf16.mxu0 %v2118
    %2619 = vmatpush1.bf16.msra.mxu0 %v2117
    %2620 = vmatprep.subr.bf16.mxu0 %v2122
    %2621 = vmatpush1.bf16.msra.mxu0 %v2121
    %2622 = vmatprep.subr.bf16.mxu0 %v2126
    %2623 = vmatpush1.bf16.msra.mxu0 %v2125
    %2624 = vmatprep.mubr.bf16.mxu0 %v2054
    %2625 = vmatmul.mubr.bf16.gmra.mrb[0].mxu0 %v2053
    %v2626 = vpop.f32.mrb[0].mxu0
    %v2627 = vadd.f32 %v2504, %v2626
    %v2628 = vpop.f32.mrb[0].mxu0
    %v2629 = vadd.f32 %v2506, %v2628
    %v2630 = vpop.f32.mrb[0].mxu0
    %v2631 = vpop.f32.mrb[0].mxu0
    %2632 = vdwg.mxu0
    %2633 = vmatprep.subr.bf16.mxu0 %v2130
    %2634 = vmatpush1.bf16.msra.mxu0 %v2129
    %2635 = vmatprep.subr.bf16.mxu0 %v2134
    %2636 = vmatpush1.bf16.msra.mxu0 %v2133
    %2637 = vmatprep.subr.bf16.mxu0 %v2138
    %2638 = vmatpush1.bf16.msra.mxu0 %v2137
    %2639 = vmatprep.subr.bf16.mxu0 %v2142
    %2640 = vmatpush1.bf16.msra.mxu0 %v2141
    %2641 = vmatprep.subr.bf16.mxu0 %v2146
    %2642 = vmatpush1.bf16.msra.mxu0 %v2145
    %2643 = vmatprep.subr.bf16.mxu0 %v2150
    %2644 = vmatpush1.bf16.msra.mxu0 %v2149
    %2645 = vmatprep.subr.bf16.mxu0 %v2154
    %2646 = vmatpush1.bf16.msra.mxu0 %v2153
    %2647 = vmatprep.subr.bf16.mxu0 %v2158
    %2648 = vmatpush1.bf16.msra.mxu0 %v2157
    %2649 = vmatprep.subr.bf16.mxu0 %v2162
    %2650 = vmatpush1.bf16.msra.mxu0 %v2161
    %2651 = vmatprep.subr.bf16.mxu0 %v2166
    %2652 = vmatpush1.bf16.msra.mxu0 %v2165
    %2653 = vmatprep.subr.bf16.mxu0 %v2170
    %2654 = vmatpush1.bf16.msra.mxu0 %v2169
    %2655 = vmatprep.subr.bf16.mxu0 %v2174
    %2656 = vmatpush1.bf16.msra.mxu0 %v2173
    %2657 = vmatprep.subr.bf16.mxu0 %v2178
    %2658 = vmatpush1.bf16.msra.mxu0 %v2177
    %2659 = vmatprep.subr.bf16.mxu0 %v2182
    %2660 = vmatpush1.bf16.msra.mxu0 %v2181
    %2661 = vmatprep.subr.bf16.mxu0 %v2186
    %2662 = vmatpush1.bf16.msra.mxu0 %v2185
    %2663 = vmatprep.subr.bf16.mxu0 %v2190
    %2664 = vmatpush1.bf16.msra.mxu0 %v2189
    %2665 = vmatprep.mubr.bf16.mxu0 %v2056
    %2666 = vmatmul.mubr.bf16.gmra.mrb[0].mxu0 %v2055
    %v2667 = vpop.f32.mrb[0].mxu0
    %v2668 = vadd.f32 %v2627, %v2667
    %v2669 = vpop.f32.mrb[0].mxu0
    %v2670 = vadd.f32 %v2629, %v2669
    %v2671 = vpop.f32.mrb[0].mxu0
    %v2672 = vpop.f32.mrb[0].mxu0
    %2673 = vdwg.mxu0
    %v2674 = vld [vmem:[%s41] sm:$0xf]
    %v2676 = vlaneseq
    %v2677 = vshrl.u32 %v2676, 7
    %v2678 = vsub.s32 0, %v2677
    %v2679 = vrot.slane %v2674, %v2678
    %v2680 = vlaneseq
    %v2681 = vshrl.u32 %v2680, 7
    %v2682 = vsub.s32 1, %v2681
    %v2683 = vrot.slane %v2674, %v2682
    %v2684 = vlaneseq
    %v2685 = vshrl.u32 %v2684, 7
    %v2686 = vsub.s32 2, %v2685
    %v2687 = vrot.slane %v2674, %v2686
    %v2688 = vlaneseq
    %v2689 = vshrl.u32 %v2688, 7
    %v2690 = vsub.s32 3, %v2689
    %v2691 = vrot.slane %v2674, %v2690
    %v2696 = vadd.f32 %v2586, %v2679
    %v2697 = vadd.f32 %v2588, %v2683
    %v2698 = vadd.f32 %v2668, %v2687
    %v2699 = vadd.f32 %v2670, %v2691
    %vm2700 = vcmask 1041408
    %v2701 = vsel %vm2700, %v2696, 0.0
    %v2702 = vrot.slane %v2701, 4
    %v2703 = vadd.f32 %v2701, %v2702
    %v2704 = vrot.slane %v2703, 2
    %v2705 = vadd.f32 %v2703, %v2704
    %v2706 = vrot.slane %v2705, 1
    %v2707 = vadd.f32 %v2705, %v2706
    %v2708 = vsel %vm2700, %v2697, 0.0
    %v2709 = vrot.slane %v2708, 4
    %v2710 = vadd.f32 %v2708, %v2709
    %v2711 = vrot.slane %v2710, 2
    %v2712 = vadd.f32 %v2710, %v2711
    %v2713 = vrot.slane %v2712, 1
    %v2714 = vadd.f32 %v2712, %v2713
    %v2715 = vsel %vm2700, %v2698, 0.0
    %v2716 = vrot.slane %v2715, 4
    %v2717 = vadd.f32 %v2715, %v2716
    %v2718 = vrot.slane %v2717, 2
    %v2719 = vadd.f32 %v2717, %v2718
    %v2720 = vrot.slane %v2719, 1
    %v2721 = vadd.f32 %v2719, %v2720
    %v2722 = vsel %vm2700, %v2699, 0.0
    %v2723 = vrot.slane %v2722, 4
    %v2724 = vadd.f32 %v2722, %v2723
    %v2725 = vrot.slane %v2724, 2
    %v2726 = vadd.f32 %v2724, %v2725
    %v2727 = vrot.slane %v2726, 1
    %v2728 = vadd.f32 %v2726, %v2727
    %v2729 = vrcp.pop 2.0
    %v2730 = vmul.f32 %v2707, %v2729
    %v2731 = vmul.f32 %v2714, %v2729
    %v2732 = vmul.f32 %v2721, %v2729
    %v2733 = vmul.f32 %v2728, %v2729
    %v2734 = vsub.f32 %v2696, %v2730
    %v2735 = vsub.f32 %v2697, %v2731
    %v2736 = vsub.f32 %v2698, %v2732
    %v2737 = vsub.f32 %v2699, %v2733
    %v2738 = vmul.f32 %v2734, %v2734
    %v2739 = vmul.f32 %v2735, %v2735
    %v2740 = vmul.f32 %v2736, %v2736
    %v2741 = vmul.f32 %v2737, %v2737
    %v2742 = vsel %vm2700, %v2738, 0.0
    %v2743 = vrot.slane %v2742, 4
    %v2744 = vadd.f32 %v2742, %v2743
    %v2745 = vrot.slane %v2744, 2
    %v2746 = vadd.f32 %v2744, %v2745
    %v2747 = vrot.slane %v2746, 1
    %v2748 = vadd.f32 %v2746, %v2747
    %v2749 = vsel %vm2700, %v2739, 0.0
    %v2750 = vrot.slane %v2749, 4
    %v2751 = vadd.f32 %v2749, %v2750
    %v2752 = vrot.slane %v2751, 2
    %v2753 = vadd.f32 %v2751, %v2752
    %v2754 = vrot.slane %v2753, 1
    %v2755 = vadd.f32 %v2753, %v2754
    %v2756 = vsel %vm2700, %v2740, 0.0
    %v2757 = vrot.slane %v2756, 4
    %v2758 = vadd.f32 %v2756, %v2757
    %v2759 = vrot.slane %v2758, 2
    %v2760 = vadd.f32 %v2758, %v2759
    %v2761 = vrot.slane %v2760, 1
    %v2762 = vadd.f32 %v2760, %v2761
    %v2763 = vsel %vm2700, %v2741, 0.0
    %v2764 = vrot.slane %v2763, 4
    %v2765 = vadd.f32 %v2763, %v2764
    %v2766 = vrot.slane %v2765, 2
    %v2767 = vadd.f32 %v2765, %v2766
    %v2768 = vrot.slane %v2767, 1
    %v2769 = vadd.f32 %v2767, %v2768
    %v2770 = vmul.f32 %v2748, %v2729
    %v2771 = vmul.f32 %v2755, %v2729
    %v2772 = vmul.f32 %v2762, %v2729
    %v2773 = vmul.f32 %v2769, %v2729
    %v2774 = vld [vmem:[%s43] sm:$0xf]
    %v2776 = vlaneseq
    %v2777 = vshrl.u32 %v2776, 7
    %v2778 = vsub.s32 0, %v2777
    %v2779 = vrot.slane %v2774, %v2778
    %v2780 = vlaneseq
    %v2781 = vshrl.u32 %v2780, 7
    %v2782 = vsub.s32 1, %v2781
    %v2783 = vrot.slane %v2774, %v2782
    %v2784 = vlaneseq
    %v2785 = vshrl.u32 %v2784, 7
    %v2786 = vsub.s32 2, %v2785
    %v2787 = vrot.slane %v2774, %v2786
    %v2788 = vlaneseq
    %v2789 = vshrl.u32 %v2788, 7
    %v2790 = vsub.s32 3, %v2789
    %v2791 = vrot.slane %v2774, %v2790
    %v2796 = vmul.f32 %v2779, %v2734
    %v2797 = vmul.f32 %v2783, %v2735
    %v2798 = vmul.f32 %v2787, %v2736
    %v2799 = vmul.f32 %v2791, %v2737
    %v2800 = vadd.f32 %v2770, 1e-05
    %v2801 = vadd.f32 %v2771, 1e-05
    %v2802 = vadd.f32 %v2772, 1e-05
    %v2803 = vadd.f32 %v2773, 1e-05
    %v2804 = vrsqrt.pop %v2800
    %v2805 = vrsqrt.pop %v2801
    %v2806 = vrsqrt.pop %v2802
    %v2807 = vrsqrt.pop %v2803
    %v2808 = vmul.f32 %v2796, %v2804
    %v2809 = vmul.f32 %v2797, %v2805
    %v2810 = vmul.f32 %v2798, %v2806
    %v2811 = vmul.f32 %v2799, %v2807
    %v2812 = vld [vmem:[%s45] sm:$0xf]
    %v2814 = vlaneseq
    %v2815 = vshrl.u32 %v2814, 7
    %v2816 = vsub.s32 0, %v2815
    %v2817 = vrot.slane %v2812, %v2816
    %v2818 = vlaneseq
    %v2819 = vshrl.u32 %v2818, 7
    %v2820 = vsub.s32 1, %v2819
    %v2821 = vrot.slane %v2812, %v2820
    %v2822 = vlaneseq
    %v2823 = vshrl.u32 %v2822, 7
    %v2824 = vsub.s32 2, %v2823
    %v2825 = vrot.slane %v2812, %v2824
    %v2826 = vlaneseq
    %v2827 = vshrl.u32 %v2826, 7
    %v2828 = vsub.s32 3, %v2827
    %v2829 = vrot.slane %v2812, %v2828
    %v2834 = vadd.f32 %v2808, %v2817
    %v2835 = vadd.f32 %v2809, %v2821
    %v2836 = vadd.f32 %v2810, %v2825
    %v2837 = vadd.f32 %v2811, %v2829
    %s2838 = sshll.u32 %s2058, 4
    %2839 = dma.done %s197, %s2838
    %v2840 = vpack.c.bf16 %v2834, %v2834
    %v2841 = vpack.c.bf16 %v2835, %v2835
    %v2842 = vpack.c.bf16 %v2836, %v2836
    %v2843 = vpack.c.bf16 %v2837, %v2837
    %v2844 = vld [vmem:[%s196] sm:$0xff]
    %v2845 = vld [vmem:[%s196 + $0x8] sm:$0xff]
    %v2846 = vld [vmem:[%s196 + $0x10] sm:$0xff]
    %v2847 = vld [vmem:[%s196 + $0x18] sm:$0xff]
    %v2848 = vld [vmem:[%s196 + $0x20] sm:$0xff]
    %v2849 = vld [vmem:[%s196 + $0x28] sm:$0xff]
    %v2850 = vld [vmem:[%s196 + $0x30] sm:$0xff]
    %v2851 = vld [vmem:[%s196 + $0x38] sm:$0xff]
    %v2852 = vld [vmem:[%s196 + $0x40] sm:$0xff]
    %v2853 = vld [vmem:[%s196 + $0x48] sm:$0xff]
    %v2854 = vld [vmem:[%s196 + $0x50] sm:$0xff]
    %v2855 = vld [vmem:[%s196 + $0x58] sm:$0xff]
    %v2856 = vld [vmem:[%s196 + $0x60] sm:$0xff]
    %v2857 = vld [vmem:[%s196 + $0x68] sm:$0xff]
    %v2858 = vld [vmem:[%s196 + $0x70] sm:$0xff]
    %v2859 = vld [vmem:[%s196 + $0x78] sm:$0xff]
    %v2860 = vld [vmem:[%s196 + $0x80] sm:$0xff]
    %v2861 = vld [vmem:[%s196 + $0x88] sm:$0xff]
    %v2862 = vld [vmem:[%s196 + $0x90] sm:$0xff]
    %v2863 = vld [vmem:[%s196 + $0x98] sm:$0xff]
    %v2864 = vld [vmem:[%s196 + $0xa0] sm:$0xff]
    %v2865 = vld [vmem:[%s196 + $0xa8] sm:$0xff]
    %v2866 = vld [vmem:[%s196 + $0xb0] sm:$0xff]
    %v2867 = vld [vmem:[%s196 + $0xb8] sm:$0xff]
    %v2868 = vld [vmem:[%s196 + $0xc0] sm:$0xff]
    %v2869 = vld [vmem:[%s196 + $0xc8] sm:$0xff]
    %v2870 = vld [vmem:[%s196 + $0xd0] sm:$0xff]
    %v2871 = vld [vmem:[%s196 + $0xd8] sm:$0xff]
    %v2872 = vld [vmem:[%s196 + $0xe0] sm:$0xff]
    %v2873 = vld [vmem:[%s196 + $0xe8] sm:$0xff]
    %v2874 = vld [vmem:[%s196 + $0xf0] sm:$0xff]
    %v2875 = vld [vmem:[%s196 + $0xf8] sm:$0xff]
    %v2876 = vld [vmem:[%s196 + $0x100] sm:$0xff]
    %v2877 = vld [vmem:[%s196 + $0x108] sm:$0xff]
    %v2878 = vld [vmem:[%s196 + $0x110] sm:$0xff]
    %v2879 = vld [vmem:[%s196 + $0x118] sm:$0xff]
    %v2880 = vld [vmem:[%s196 + $0x120] sm:$0xff]
    %v2881 = vld [vmem:[%s196 + $0x128] sm:$0xff]
    %v2882 = vld [vmem:[%s196 + $0x130] sm:$0xff]
    %v2883 = vld [vmem:[%s196 + $0x138] sm:$0xff]
    %v2884 = vld [vmem:[%s196 + $0x140] sm:$0xff]
    %v2885 = vld [vmem:[%s196 + $0x148] sm:$0xff]
    %v2886 = vld [vmem:[%s196 + $0x150] sm:$0xff]
    %v2887 = vld [vmem:[%s196 + $0x158] sm:$0xff]
    %v2888 = vld [vmem:[%s196 + $0x160] sm:$0xff]
    %v2889 = vld [vmem:[%s196 + $0x168] sm:$0xff]
    %v2890 = vld [vmem:[%s196 + $0x170] sm:$0xff]
    %v2891 = vld [vmem:[%s196 + $0x178] sm:$0xff]
    %v2892 = vld [vmem:[%s196 + $0x180] sm:$0xff]
    %v2893 = vld [vmem:[%s196 + $0x188] sm:$0xff]
    %v2894 = vld [vmem:[%s196 + $0x190] sm:$0xff]
    %v2895 = vld [vmem:[%s196 + $0x198] sm:$0xff]
    %v2896 = vld [vmem:[%s196 + $0x1a0] sm:$0xff]
    %v2897 = vld [vmem:[%s196 + $0x1a8] sm:$0xff]
    %v2898 = vld [vmem:[%s196 + $0x1b0] sm:$0xff]
    %v2899 = vld [vmem:[%s196 + $0x1b8] sm:$0xff]
    %v2900 = vld [vmem:[%s196 + $0x1c0] sm:$0xff]
    %v2901 = vld [vmem:[%s196 + $0x1c8] sm:$0xff]
    %v2902 = vld [vmem:[%s196 + $0x1d0] sm:$0xff]
    %v2903 = vld [vmem:[%s196 + $0x1d8] sm:$0xff]
    %v2904 = vld [vmem:[%s196 + $0x1e0] sm:$0xff]
    %v2905 = vld [vmem:[%s196 + $0x1e8] sm:$0xff]
    %v2906 = vld [vmem:[%s196 + $0x1f0] sm:$0xff]
    %v2907 = vld [vmem:[%s196 + $0x1f8] sm:$0xff]
    %v2908 = vld [vmem:[%s196 + $0x200] sm:$0xff]
    %v2909 = vld [vmem:[%s196 + $0x208] sm:$0xff]
    %v2910 = vld [vmem:[%s196 + $0x210] sm:$0xff]
    %v2911 = vld [vmem:[%s196 + $0x218] sm:$0xff]
    %v2912 = vld [vmem:[%s196 + $0x220] sm:$0xff]
    %v2913 = vld [vmem:[%s196 + $0x228] sm:$0xff]
    %v2914 = vld [vmem:[%s196 + $0x230] sm:$0xff]
    %v2915 = vld [vmem:[%s196 + $0x238] sm:$0xff]
    %v2916 = vld [vmem:[%s196 + $0x240] sm:$0xff]
    %v2917 = vld [vmem:[%s196 + $0x248] sm:$0xff]
    %v2918 = vld [vmem:[%s196 + $0x250] sm:$0xff]
    %v2919 = vld [vmem:[%s196 + $0x258] sm:$0xff]
    %v2920 = vld [vmem:[%s196 + $0x260] sm:$0xff]
    %v2921 = vld [vmem:[%s196 + $0x268] sm:$0xff]
    %v2922 = vld [vmem:[%s196 + $0x270] sm:$0xff]
    %v2923 = vld [vmem:[%s196 + $0x278] sm:$0xff]
    %v2924 = vld [vmem:[%s196 + $0x280] sm:$0xff]
    %v2925 = vld [vmem:[%s196 + $0x288] sm:$0xff]
    %v2926 = vld [vmem:[%s196 + $0x290] sm:$0xff]
    %v2927 = vld [vmem:[%s196 + $0x298] sm:$0xff]
    %v2928 = vld [vmem:[%s196 + $0x2a0] sm:$0xff]
    %v2929 = vld [vmem:[%s196 + $0x2a8] sm:$0xff]
    %v2930 = vld [vmem:[%s196 + $0x2b0] sm:$0xff]
    %v2931 = vld [vmem:[%s196 + $0x2b8] sm:$0xff]
    %v2932 = vld [vmem:[%s196 + $0x2c0] sm:$0xff]
    %v2933 = vld [vmem:[%s196 + $0x2c8] sm:$0xff]
    %v2934 = vld [vmem:[%s196 + $0x2d0] sm:$0xff]
    %v2935 = vld [vmem:[%s196 + $0x2d8] sm:$0xff]
    %v2936 = vld [vmem:[%s196 + $0x2e0] sm:$0xff]
    %v2937 = vld [vmem:[%s196 + $0x2e8] sm:$0xff]
    %v2938 = vld [vmem:[%s196 + $0x2f0] sm:$0xff]
    %v2939 = vld [vmem:[%s196 + $0x2f8] sm:$0xff]
    %v2940 = vld [vmem:[%s196 + $0x300] sm:$0xff]
    %v2941 = vld [vmem:[%s196 + $0x308] sm:$0xff]
    %v2942 = vld [vmem:[%s196 + $0x310] sm:$0xff]
    %v2943 = vld [vmem:[%s196 + $0x318] sm:$0xff]
    %v2944 = vld [vmem:[%s196 + $0x320] sm:$0xff]
    %v2945 = vld [vmem:[%s196 + $0x328] sm:$0xff]
    %v2946 = vld [vmem:[%s196 + $0x330] sm:$0xff]
    %v2947 = vld [vmem:[%s196 + $0x338] sm:$0xff]
    %v2948 = vld [vmem:[%s196 + $0x340] sm:$0xff]
    %v2949 = vld [vmem:[%s196 + $0x348] sm:$0xff]
    %v2950 = vld [vmem:[%s196 + $0x350] sm:$0xff]
    %v2951 = vld [vmem:[%s196 + $0x358] sm:$0xff]
    %v2952 = vld [vmem:[%s196 + $0x360] sm:$0xff]
    %v2953 = vld [vmem:[%s196 + $0x368] sm:$0xff]
    %v2954 = vld [vmem:[%s196 + $0x370] sm:$0xff]
    %v2955 = vld [vmem:[%s196 + $0x378] sm:$0xff]
    %v2956 = vld [vmem:[%s196 + $0x380] sm:$0xff]
    %v2957 = vld [vmem:[%s196 + $0x388] sm:$0xff]
    %v2958 = vld [vmem:[%s196 + $0x390] sm:$0xff]
    %v2959 = vld [vmem:[%s196 + $0x398] sm:$0xff]
    %v2960 = vld [vmem:[%s196 + $0x3a0] sm:$0xff]
    %v2961 = vld [vmem:[%s196 + $0x3a8] sm:$0xff]
    %v2962 = vld [vmem:[%s196 + $0x3b0] sm:$0xff]
    %v2963 = vld [vmem:[%s196 + $0x3b8] sm:$0xff]
    %v2964 = vld [vmem:[%s196 + $0x3c0] sm:$0xff]
    %v2965 = vld [vmem:[%s196 + $0x3c8] sm:$0xff]
    %v2966 = vld [vmem:[%s196 + $0x3d0] sm:$0xff]
    %v2967 = vld [vmem:[%s196 + $0x3d8] sm:$0xff]
    %v2968 = vld [vmem:[%s196 + $0x3e0] sm:$0xff]
    %v2969 = vld [vmem:[%s196 + $0x3e8] sm:$0xff]
    %v2970 = vld [vmem:[%s196 + $0x3f0] sm:$0xff]
    %v2971 = vld [vmem:[%s196 + $0x3f8] sm:$0xff]
    %v2972 = vld [vmem:[%s47] sm:$0xf]
    %v2974 = vlaneseq
    %v2975 = vshrl.u32 %v2974, 7
    %v2976 = vsub.s32 0, %v2975
    %v2977 = vrot.slane %v2972, %v2976
    %v2978 = vlaneseq
    %v2979 = vshrl.u32 %v2978, 7
    %v2980 = vsub.s32 1, %v2979
    %v2981 = vrot.slane %v2972, %v2980
    %v2982 = vlaneseq
    %v2983 = vshrl.u32 %v2982, 7
    %v2984 = vsub.s32 2, %v2983
    %v2985 = vrot.slane %v2972, %v2984
    %v2986 = vlaneseq
    %v2987 = vshrl.u32 %v2986, 7
    %v2988 = vsub.s32 3, %v2987
    %v2989 = vrot.slane %v2972, %v2988
    %2994 = vmatprep.subr.bf16.mxu0 %v2845
    %2995 = vmatpush1.bf16.msra.mxu0 %v2844
    %2996 = vmatprep.subr.bf16.mxu0 %v2849
    %2997 = vmatpush1.bf16.msra.mxu0 %v2848
    %2998 = vmatprep.subr.bf16.mxu0 %v2853
    %2999 = vmatpush1.bf16.msra.mxu0 %v2852
    %3000 = vmatprep.subr.bf16.mxu0 %v2857
    %3001 = vmatpush1.bf16.msra.mxu0 %v2856
    %3002 = vmatprep.subr.bf16.mxu0 %v2861
    %3003 = vmatpush1.bf16.msra.mxu0 %v2860
    %3004 = vmatprep.subr.bf16.mxu0 %v2865
    %3005 = vmatpush1.bf16.msra.mxu0 %v2864
    %3006 = vmatprep.subr.bf16.mxu0 %v2869
    %3007 = vmatpush1.bf16.msra.mxu0 %v2868
    %3008 = vmatprep.subr.bf16.mxu0 %v2873
    %3009 = vmatpush1.bf16.msra.mxu0 %v2872
    %3010 = vmatprep.subr.bf16.mxu0 %v2877
    %3011 = vmatpush1.bf16.msra.mxu0 %v2876
    %3012 = vmatprep.subr.bf16.mxu0 %v2881
    %3013 = vmatpush1.bf16.msra.mxu0 %v2880
    %3014 = vmatprep.subr.bf16.mxu0 %v2885
    %3015 = vmatpush1.bf16.msra.mxu0 %v2884
    %3016 = vmatprep.subr.bf16.mxu0 %v2889
    %3017 = vmatpush1.bf16.msra.mxu0 %v2888
    %3018 = vmatprep.subr.bf16.mxu0 %v2893
    %3019 = vmatpush1.bf16.msra.mxu0 %v2892
    %3020 = vmatprep.subr.bf16.mxu0 %v2897
    %3021 = vmatpush1.bf16.msra.mxu0 %v2896
    %3022 = vmatprep.subr.bf16.mxu0 %v2901
    %3023 = vmatpush1.bf16.msra.mxu0 %v2900
    %3024 = vmatprep.subr.bf16.mxu0 %v2905
    %3025 = vmatpush1.bf16.msra.mxu0 %v2904
    %3026 = vmatprep.mubr.bf16.mxu0 %v2841
    %3027 = vmatmul.mubr.bf16.gmra.mrb[0].mxu0 %v2840
    %v3028 = vpop.f32.mrb[0].mxu0
    %v3029 = vadd.f32 %v2977, %v3028
    %v3030 = vpop.f32.mrb[0].mxu0
    %v3031 = vadd.f32 %v2981, %v3030
    %v3032 = vpop.f32.mrb[0].mxu0
    %v3033 = vpop.f32.mrb[0].mxu0
    %3034 = vdwg.mxu0
    %3035 = vmatprep.subr.bf16.mxu0 %v2909
    %3036 = vmatpush1.bf16.msra.mxu0 %v2908
    %3037 = vmatprep.subr.bf16.mxu0 %v2913
    %3038 = vmatpush1.bf16.msra.mxu0 %v2912
    %3039 = vmatprep.subr.bf16.mxu0 %v2917
    %3040 = vmatpush1.bf16.msra.mxu0 %v2916
    %3041 = vmatprep.subr.bf16.mxu0 %v2921
    %3042 = vmatpush1.bf16.msra.mxu0 %v2920
    %3043 = vmatprep.subr.bf16.mxu0 %v2925
    %3044 = vmatpush1.bf16.msra.mxu0 %v2924
    %3045 = vmatprep.subr.bf16.mxu0 %v2929
    %3046 = vmatpush1.bf16.msra.mxu0 %v2928
    %3047 = vmatprep.subr.bf16.mxu0 %v2933
    %3048 = vmatpush1.bf16.msra.mxu0 %v2932
    %3049 = vmatprep.subr.bf16.mxu0 %v2937
    %3050 = vmatpush1.bf16.msra.mxu0 %v2936
    %3051 = vmatprep.subr.bf16.mxu0 %v2941
    %3052 = vmatpush1.bf16.msra.mxu0 %v2940
    %3053 = vmatprep.subr.bf16.mxu0 %v2945
    %3054 = vmatpush1.bf16.msra.mxu0 %v2944
    %3055 = vmatprep.subr.bf16.mxu0 %v2949
    %3056 = vmatpush1.bf16.msra.mxu0 %v2948
    %3057 = vmatprep.subr.bf16.mxu0 %v2953
    %3058 = vmatpush1.bf16.msra.mxu0 %v2952
    %3059 = vmatprep.subr.bf16.mxu0 %v2957
    %3060 = vmatpush1.bf16.msra.mxu0 %v2956
    %3061 = vmatprep.subr.bf16.mxu0 %v2961
    %3062 = vmatpush1.bf16.msra.mxu0 %v2960
    %3063 = vmatprep.subr.bf16.mxu0 %v2965
    %3064 = vmatpush1.bf16.msra.mxu0 %v2964
    %3065 = vmatprep.subr.bf16.mxu0 %v2969
    %3066 = vmatpush1.bf16.msra.mxu0 %v2968
    %3067 = vmatprep.mubr.bf16.mxu0 %v2843
    %3068 = vmatmul.mubr.bf16.gmra.mrb[0].mxu0 %v2842
    %v3069 = vpop.f32.mrb[0].mxu0
    %v3070 = vadd.f32 %v3029, %v3069
    %v3071 = vpop.f32.mrb[0].mxu0
    %v3072 = vadd.f32 %v3031, %v3071
    %v3073 = vpop.f32.mrb[0].mxu0
    %v3074 = vpop.f32.mrb[0].mxu0
    %3075 = vdwg.mxu0
    %3076 = vmatprep.subr.bf16.mxu0 %v2847
    %3077 = vmatpush1.bf16.msra.mxu0 %v2846
    %3078 = vmatprep.subr.bf16.mxu0 %v2851
    %3079 = vmatpush1.bf16.msra.mxu0 %v2850
    %3080 = vmatprep.subr.bf16.mxu0 %v2855
    %3081 = vmatpush1.bf16.msra.mxu0 %v2854
    %3082 = vmatprep.subr.bf16.mxu0 %v2859
    %3083 = vmatpush1.bf16.msra.mxu0 %v2858
    %3084 = vmatprep.subr.bf16.mxu0 %v2863
    %3085 = vmatpush1.bf16.msra.mxu0 %v2862
    %3086 = vmatprep.subr.bf16.mxu0 %v2867
    %3087 = vmatpush1.bf16.msra.mxu0 %v2866
    %3088 = vmatprep.subr.bf16.mxu0 %v2871
    %3089 = vmatpush1.bf16.msra.mxu0 %v2870
    %3090 = vmatprep.subr.bf16.mxu0 %v2875
    %3091 = vmatpush1.bf16.msra.mxu0 %v2874
    %3092 = vmatprep.subr.bf16.mxu0 %v2879
    %3093 = vmatpush1.bf16.msra.mxu0 %v2878
    %3094 = vmatprep.subr.bf16.mxu0 %v2883
    %3095 = vmatpush1.bf16.msra.mxu0 %v2882
    %3096 = vmatprep.subr.bf16.mxu0 %v2887
    %3097 = vmatpush1.bf16.msra.mxu0 %v2886
    %3098 = vmatprep.subr.bf16.mxu0 %v2891
    %3099 = vmatpush1.bf16.msra.mxu0 %v2890
    %3100 = vmatprep.subr.bf16.mxu0 %v2895
    %3101 = vmatpush1.bf16.msra.mxu0 %v2894
    %3102 = vmatprep.subr.bf16.mxu0 %v2899
    %3103 = vmatpush1.bf16.msra.mxu0 %v2898
    %3104 = vmatprep.subr.bf16.mxu0 %v2903
    %3105 = vmatpush1.bf16.msra.mxu0 %v2902
    %3106 = vmatprep.subr.bf16.mxu0 %v2907
    %3107 = vmatpush1.bf16.msra.mxu0 %v2906
    %3108 = vmatprep.mubr.bf16.mxu0 %v2841
    %3109 = vmatmul.mubr.bf16.gmra.mrb[0].mxu0 %v2840
    %v3110 = vpop.f32.mrb[0].mxu0
    %v3111 = vadd.f32 %v2985, %v3110
    %v3112 = vpop.f32.mrb[0].mxu0
    %v3113 = vadd.f32 %v2989, %v3112
    %v3114 = vpop.f32.mrb[0].mxu0
    %v3115 = vpop.f32.mrb[0].mxu0
    %3116 = vdwg.mxu0
    %3117 = vmatprep.subr.bf16.mxu0 %v2911
    %3118 = vmatpush1.bf16.msra.mxu0 %v2910
    %3119 = vmatprep.subr.bf16.mxu0 %v2915
    %3120 = vmatpush1.bf16.msra.mxu0 %v2914
    %3121 = vmatprep.subr.bf16.mxu0 %v2919
    %3122 = vmatpush1.bf16.msra.mxu0 %v2918
    %3123 = vmatprep.subr.bf16.mxu0 %v2923
    %3124 = vmatpush1.bf16.msra.mxu0 %v2922
    %3125 = vmatprep.subr.bf16.mxu0 %v2927
    %3126 = vmatpush1.bf16.msra.mxu0 %v2926
    %3127 = vmatprep.subr.bf16.mxu0 %v2931
    %3128 = vmatpush1.bf16.msra.mxu0 %v2930
    %3129 = vmatprep.subr.bf16.mxu0 %v2935
    %3130 = vmatpush1.bf16.msra.mxu0 %v2934
    %3131 = vmatprep.subr.bf16.mxu0 %v2939
    %3132 = vmatpush1.bf16.msra.mxu0 %v2938
    %3133 = vmatprep.subr.bf16.mxu0 %v2943
    %3134 = vmatpush1.bf16.msra.mxu0 %v2942
    %3135 = vmatprep.subr.bf16.mxu0 %v2947
    %3136 = vmatpush1.bf16.msra.mxu0 %v2946
    %3137 = vmatprep.subr.bf16.mxu0 %v2951
    %3138 = vmatpush1.bf16.msra.mxu0 %v2950
    %3139 = vmatprep.subr.bf16.mxu0 %v2955
    %3140 = vmatpush1.bf16.msra.mxu0 %v2954
    %3141 = vmatprep.subr.bf16.mxu0 %v2959
    %3142 = vmatpush1.bf16.msra.mxu0 %v2958
    %3143 = vmatprep.subr.bf16.mxu0 %v2963
    %3144 = vmatpush1.bf16.msra.mxu0 %v2962
    %3145 = vmatprep.subr.bf16.mxu0 %v2967
    %3146 = vmatpush1.bf16.msra.mxu0 %v2966
    %3147 = vmatprep.subr.bf16.mxu0 %v2971
    %3148 = vmatpush1.bf16.msra.mxu0 %v2970
    %3149 = vmatprep.mubr.bf16.mxu0 %v2843
    %3150 = vmatmul.mubr.bf16.gmra.mrb[0].mxu0 %v2842
    %v3151 = vpop.f32.mrb[0].mxu0
    %v3152 = vadd.f32 %v3111, %v3151
    %v3153 = vpop.f32.mrb[0].mxu0
    %v3154 = vadd.f32 %v3113, %v3153
    %v3155 = vpop.f32.mrb[0].mxu0
    %v3156 = vpop.f32.mrb[0].mxu0
    %3157 = vdwg.mxu0
    %v3158 = vadd.f32 %v3070, %v2696
    %v3159 = vadd.f32 %v3072, %v2697
    %v3160 = vadd.f32 %v3152, %v2698
    %v3161 = vadd.f32 %v3154, %v2699
    %v3162 = vpack.c.bf16 %v3158, %v3158
    %v3163 = vpack.c.bf16 %v3159, %v3159
    %v3164 = vpack.c.bf16 %v3160, %v3160
    %v3165 = vpack.c.bf16 %v3161, %v3161
    %s3166 = sshll.u32 %s2058, 4
    %3167 = dma.done %s233, %s3166
    %s3168 = sshll.u32 %s2058, 4
    %3169 = dma.done %s269, %s3168
    %v3170 = vld [vmem:[%s232] sm:$0xff]
    %v3171 = vld [vmem:[%s232 + $0x8] sm:$0xff]
    %v3172 = vld [vmem:[%s232 + $0x10] sm:$0xff]
    %v3173 = vld [vmem:[%s232 + $0x18] sm:$0xff]
    %v3174 = vld [vmem:[%s232 + $0x20] sm:$0xff]
    %v3175 = vld [vmem:[%s232 + $0x28] sm:$0xff]
    %v3176 = vld [vmem:[%s232 + $0x30] sm:$0xff]
    %v3177 = vld [vmem:[%s232 + $0x38] sm:$0xff]
    %v3178 = vld [vmem:[%s232 + $0x40] sm:$0xff]
    %v3179 = vld [vmem:[%s232 + $0x48] sm:$0xff]
    %v3180 = vld [vmem:[%s232 + $0x50] sm:$0xff]
    %v3181 = vld [vmem:[%s232 + $0x58] sm:$0xff]
    %v3182 = vld [vmem:[%s232 + $0x60] sm:$0xff]
    %v3183 = vld [vmem:[%s232 + $0x68] sm:$0xff]
    %v3184 = vld [vmem:[%s232 + $0x70] sm:$0xff]
    %v3185 = vld [vmem:[%s232 + $0x78] sm:$0xff]
    %v3186 = vld [vmem:[%s232 + $0x80] sm:$0xff]
    %v3187 = vld [vmem:[%s232 + $0x88] sm:$0xff]
    %v3188 = vld [vmem:[%s232 + $0x90] sm:$0xff]
    %v3189 = vld [vmem:[%s232 + $0x98] sm:$0xff]
    %v3190 = vld [vmem:[%s232 + $0xa0] sm:$0xff]
    %v3191 = vld [vmem:[%s232 + $0xa8] sm:$0xff]
    %v3192 = vld [vmem:[%s232 + $0xb0] sm:$0xff]
    %v3193 = vld [vmem:[%s232 + $0xb8] sm:$0xff]
    %v3194 = vld [vmem:[%s232 + $0xc0] sm:$0xff]
    %v3195 = vld [vmem:[%s232 + $0xc8] sm:$0xff]
    %v3196 = vld [vmem:[%s232 + $0xd0] sm:$0xff]
    %v3197 = vld [vmem:[%s232 + $0xd8] sm:$0xff]
    %v3198 = vld [vmem:[%s232 + $0xe0] sm:$0xff]
    %v3199 = vld [vmem:[%s232 + $0xe8] sm:$0xff]
    %v3200 = vld [vmem:[%s232 + $0xf0] sm:$0xff]
    %v3201 = vld [vmem:[%s232 + $0xf8] sm:$0xff]
    %v3202 = vld [vmem:[%s232 + $0x100] sm:$0xff]
    %v3203 = vld [vmem:[%s232 + $0x108] sm:$0xff]
    %v3204 = vld [vmem:[%s232 + $0x110] sm:$0xff]
    %v3205 = vld [vmem:[%s232 + $0x118] sm:$0xff]
    %v3206 = vld [vmem:[%s232 + $0x120] sm:$0xff]
    %v3207 = vld [vmem:[%s232 + $0x128] sm:$0xff]
    %v3208 = vld [vmem:[%s232 + $0x130] sm:$0xff]
    %v3209 = vld [vmem:[%s232 + $0x138] sm:$0xff]
    %v3210 = vld [vmem:[%s232 + $0x140] sm:$0xff]
    %v3211 = vld [vmem:[%s232 + $0x148] sm:$0xff]
    %v3212 = vld [vmem:[%s232 + $0x150] sm:$0xff]
    %v3213 = vld [vmem:[%s232 + $0x158] sm:$0xff]
    %v3214 = vld [vmem:[%s232 + $0x160] sm:$0xff]
    %v3215 = vld [vmem:[%s232 + $0x168] sm:$0xff]
    %v3216 = vld [vmem:[%s232 + $0x170] sm:$0xff]
    %v3217 = vld [vmem:[%s232 + $0x178] sm:$0xff]
    %v3218 = vld [vmem:[%s232 + $0x180] sm:$0xff]
    %v3219 = vld [vmem:[%s232 + $0x188] sm:$0xff]
    %v3220 = vld [vmem:[%s232 + $0x190] sm:$0xff]
    %v3221 = vld [vmem:[%s232 + $0x198] sm:$0xff]
    %v3222 = vld [vmem:[%s232 + $0x1a0] sm:$0xff]
    %v3223 = vld [vmem:[%s232 + $0x1a8] sm:$0xff]
    %v3224 = vld [vmem:[%s232 + $0x1b0] sm:$0xff]
    %v3225 = vld [vmem:[%s232 + $0x1b8] sm:$0xff]
    %v3226 = vld [vmem:[%s232 + $0x1c0] sm:$0xff]
    %v3227 = vld [vmem:[%s232 + $0x1c8] sm:$0xff]
    %v3228 = vld [vmem:[%s232 + $0x1d0] sm:$0xff]
    %v3229 = vld [vmem:[%s232 + $0x1d8] sm:$0xff]
    %v3230 = vld [vmem:[%s232 + $0x1e0] sm:$0xff]
    %v3231 = vld [vmem:[%s232 + $0x1e8] sm:$0xff]
    %v3232 = vld [vmem:[%s232 + $0x1f0] sm:$0xff]
    %v3233 = vld [vmem:[%s232 + $0x1f8] sm:$0xff]
    %v3234 = vld [vmem:[%s232 + $0x200] sm:$0xff]
    %v3235 = vld [vmem:[%s232 + $0x208] sm:$0xff]
    %v3236 = vld [vmem:[%s232 + $0x210] sm:$0xff]
    %v3237 = vld [vmem:[%s232 + $0x218] sm:$0xff]
    %v3238 = vld [vmem:[%s232 + $0x220] sm:$0xff]
    %v3239 = vld [vmem:[%s232 + $0x228] sm:$0xff]
    %v3240 = vld [vmem:[%s232 + $0x230] sm:$0xff]
    %v3241 = vld [vmem:[%s232 + $0x238] sm:$0xff]
    %v3242 = vld [vmem:[%s232 + $0x240] sm:$0xff]
    %v3243 = vld [vmem:[%s232 + $0x248] sm:$0xff]
    %v3244 = vld [vmem:[%s232 + $0x250] sm:$0xff]
    %v3245 = vld [vmem:[%s232 + $0x258] sm:$0xff]
    %v3246 = vld [vmem:[%s232 + $0x260] sm:$0xff]
    %v3247 = vld [vmem:[%s232 + $0x268] sm:$0xff]
    %v3248 = vld [vmem:[%s232 + $0x270] sm:$0xff]
    %v3249 = vld [vmem:[%s232 + $0x278] sm:$0xff]
    %v3250 = vld [vmem:[%s232 + $0x280] sm:$0xff]
    %v3251 = vld [vmem:[%s232 + $0x288] sm:$0xff]
    %v3252 = vld [vmem:[%s232 + $0x290] sm:$0xff]
    %v3253 = vld [vmem:[%s232 + $0x298] sm:$0xff]
    %v3254 = vld [vmem:[%s232 + $0x2a0] sm:$0xff]
    %v3255 = vld [vmem:[%s232 + $0x2a8] sm:$0xff]
    %v3256 = vld [vmem:[%s232 + $0x2b0] sm:$0xff]
    %v3257 = vld [vmem:[%s232 + $0x2b8] sm:$0xff]
    %v3258 = vld [vmem:[%s232 + $0x2c0] sm:$0xff]
    %v3259 = vld [vmem:[%s232 + $0x2c8] sm:$0xff]
    %v3260 = vld [vmem:[%s232 + $0x2d0] sm:$0xff]
    %v3261 = vld [vmem:[%s232 + $0x2d8] sm:$0xff]
    %v3262 = vld [vmem:[%s232 + $0x2e0] sm:$0xff]
    %v3263 = vld [vmem:[%s232 + $0x2e8] sm:$0xff]
    %v3264 = vld [vmem:[%s232 + $0x2f0] sm:$0xff]
    %v3265 = vld [vmem:[%s232 + $0x2f8] sm:$0xff]
    %v3266 = vld [vmem:[%s232 + $0x300] sm:$0xff]
    %v3267 = vld [vmem:[%s232 + $0x308] sm:$0xff]
    %v3268 = vld [vmem:[%s232 + $0x310] sm:$0xff]
    %v3269 = vld [vmem:[%s232 + $0x318] sm:$0xff]
    %v3270 = vld [vmem:[%s232 + $0x320] sm:$0xff]
    %v3271 = vld [vmem:[%s232 + $0x328] sm:$0xff]
    %v3272 = vld [vmem:[%s232 + $0x330] sm:$0xff]
    %v3273 = vld [vmem:[%s232 + $0x338] sm:$0xff]
    %v3274 = vld [vmem:[%s232 + $0x340] sm:$0xff]
    %v3275 = vld [vmem:[%s232 + $0x348] sm:$0xff]
    %v3276 = vld [vmem:[%s232 + $0x350] sm:$0xff]
    %v3277 = vld [vmem:[%s232 + $0x358] sm:$0xff]
    %v3278 = vld [vmem:[%s232 + $0x360] sm:$0xff]
    %v3279 = vld [vmem:[%s232 + $0x368] sm:$0xff]
    %v3280 = vld [vmem:[%s232 + $0x370] sm:$0xff]
    %v3281 = vld [vmem:[%s232 + $0x378] sm:$0xff]
    %v3282 = vld [vmem:[%s232 + $0x380] sm:$0xff]
    %v3283 = vld [vmem:[%s232 + $0x388] sm:$0xff]
    %v3284 = vld [vmem:[%s232 + $0x390] sm:$0xff]
    %v3285 = vld [vmem:[%s232 + $0x398] sm:$0xff]
    %v3286 = vld [vmem:[%s232 + $0x3a0] sm:$0xff]
    %v3287 = vld [vmem:[%s232 + $0x3a8] sm:$0xff]
    %v3288 = vld [vmem:[%s232 + $0x3b0] sm:$0xff]
    %v3289 = vld [vmem:[%s232 + $0x3b8] sm:$0xff]
    %v3290 = vld [vmem:[%s232 + $0x3c0] sm:$0xff]
    %v3291 = vld [vmem:[%s232 + $0x3c8] sm:$0xff]
    %v3292 = vld [vmem:[%s232 + $0x3d0] sm:$0xff]
    %v3293 = vld [vmem:[%s232 + $0x3d8] sm:$0xff]
    %v3294 = vld [vmem:[%s232 + $0x3e0] sm:$0xff]
    %v3295 = vld [vmem:[%s232 + $0x3e8] sm:$0xff]
    %v3296 = vld [vmem:[%s232 + $0x3f0] sm:$0xff]
    %v3297 = vld [vmem:[%s232 + $0x3f8] sm:$0xff]
    %v3298 = vld [vmem:[%s49] sm:$0xf]
    %v3300 = vlaneseq
    %v3301 = vshrl.u32 %v3300, 7
    %v3302 = vsub.s32 0, %v3301
    %v3303 = vrot.slane %v3298, %v3302
    %v3304 = vlaneseq
    %v3305 = vshrl.u32 %v3304, 7
    %v3306 = vsub.s32 1, %v3305
    %v3307 = vrot.slane %v3298, %v3306
    %v3308 = vlaneseq
    %v3309 = vshrl.u32 %v3308, 7
    %v3310 = vsub.s32 2, %v3309
    %v3311 = vrot.slane %v3298, %v3310
    %v3312 = vlaneseq
    %v3313 = vshrl.u32 %v3312, 7
    %v3314 = vsub.s32 3, %v3313
    %v3315 = vrot.slane %v3298, %v3314
    %3320 = vmatprep.subr.bf16.mxu0 %v3171
    %3321 = vmatpush1.bf16.msra.mxu0 %v3170
    %3322 = vmatprep.subr.bf16.mxu0 %v3175
    %3323 = vmatpush1.bf16.msra.mxu0 %v3174
    %3324 = vmatprep.subr.bf16.mxu0 %v3179
    %3325 = vmatpush1.bf16.msra.mxu0 %v3178
    %3326 = vmatprep.subr.bf16.mxu0 %v3183
    %3327 = vmatpush1.bf16.msra.mxu0 %v3182
    %3328 = vmatprep.subr.bf16.mxu0 %v3187
    %3329 = vmatpush1.bf16.msra.mxu0 %v3186
    %3330 = vmatprep.subr.bf16.mxu0 %v3191
    %3331 = vmatpush1.bf16.msra.mxu0 %v3190
    %3332 = vmatprep.subr.bf16.mxu0 %v3195
    %3333 = vmatpush1.bf16.msra.mxu0 %v3194
    %3334 = vmatprep.subr.bf16.mxu0 %v3199
    %3335 = vmatpush1.bf16.msra.mxu0 %v3198
    %3336 = vmatprep.subr.bf16.mxu0 %v3203
    %3337 = vmatpush1.bf16.msra.mxu0 %v3202
    %3338 = vmatprep.subr.bf16.mxu0 %v3207
    %3339 = vmatpush1.bf16.msra.mxu0 %v3206
    %3340 = vmatprep.subr.bf16.mxu0 %v3211
    %3341 = vmatpush1.bf16.msra.mxu0 %v3210
    %3342 = vmatprep.subr.bf16.mxu0 %v3215
    %3343 = vmatpush1.bf16.msra.mxu0 %v3214
    %3344 = vmatprep.subr.bf16.mxu0 %v3219
    %3345 = vmatpush1.bf16.msra.mxu0 %v3218
    %3346 = vmatprep.subr.bf16.mxu0 %v3223
    %3347 = vmatpush1.bf16.msra.mxu0 %v3222
    %3348 = vmatprep.subr.bf16.mxu0 %v3227
    %3349 = vmatpush1.bf16.msra.mxu0 %v3226
    %3350 = vmatprep.subr.bf16.mxu0 %v3231
    %3351 = vmatpush1.bf16.msra.mxu0 %v3230
    %3352 = vmatprep.mubr.bf16.mxu0 %v3163
    %3353 = vmatmul.mubr.bf16.gmra.mrb[0].mxu0 %v3162
    %v3354 = vpop.f32.mrb[0].mxu0
    %v3355 = vadd.f32 %v3303, %v3354
    %v3356 = vpop.f32.mrb[0].mxu0
    %v3357 = vadd.f32 %v3307, %v3356
    %v3358 = vpop.f32.mrb[0].mxu0
    %v3359 = vpop.f32.mrb[0].mxu0
    %3360 = vdwg.mxu0
    %3361 = vmatprep.subr.bf16.mxu0 %v3235
    %3362 = vmatpush1.bf16.msra.mxu0 %v3234
    %3363 = vmatprep.subr.bf16.mxu0 %v3239
    %3364 = vmatpush1.bf16.msra.mxu0 %v3238
    %3365 = vmatprep.subr.bf16.mxu0 %v3243
    %3366 = vmatpush1.bf16.msra.mxu0 %v3242
    %3367 = vmatprep.subr.bf16.mxu0 %v3247
    %3368 = vmatpush1.bf16.msra.mxu0 %v3246
    %3369 = vmatprep.subr.bf16.mxu0 %v3251
    %3370 = vmatpush1.bf16.msra.mxu0 %v3250
    %3371 = vmatprep.subr.bf16.mxu0 %v3255
    %3372 = vmatpush1.bf16.msra.mxu0 %v3254
    %3373 = vmatprep.subr.bf16.mxu0 %v3259
    %3374 = vmatpush1.bf16.msra.mxu0 %v3258
    %3375 = vmatprep.subr.bf16.mxu0 %v3263
    %3376 = vmatpush1.bf16.msra.mxu0 %v3262
    %3377 = vmatprep.subr.bf16.mxu0 %v3267
    %3378 = vmatpush1.bf16.msra.mxu0 %v3266
    %3379 = vmatprep.subr.bf16.mxu0 %v3271
    %3380 = vmatpush1.bf16.msra.mxu0 %v3270
    %3381 = vmatprep.subr.bf16.mxu0 %v3275
    %3382 = vmatpush1.bf16.msra.mxu0 %v3274
    %3383 = vmatprep.subr.bf16.mxu0 %v3279
    %3384 = vmatpush1.bf16.msra.mxu0 %v3278
    %3385 = vmatprep.subr.bf16.mxu0 %v3283
    %3386 = vmatpush1.bf16.msra.mxu0 %v3282
    %3387 = vmatprep.subr.bf16.mxu0 %v3287
    %3388 = vmatpush1.bf16.msra.mxu0 %v3286
    %3389 = vmatprep.subr.bf16.mxu0 %v3291
    %3390 = vmatpush1.bf16.msra.mxu0 %v3290
    %3391 = vmatprep.subr.bf16.mxu0 %v3295
    %3392 = vmatpush1.bf16.msra.mxu0 %v3294
    %3393 = vmatprep.mubr.bf16.mxu0 %v3165
    %3394 = vmatmul.mubr.bf16.gmra.mrb[0].mxu0 %v3164
    %v3395 = vpop.f32.mrb[0].mxu0
    %v3396 = vadd.f32 %v3355, %v3395
    %v3397 = vpop.f32.mrb[0].mxu0
    %v3398 = vadd.f32 %v3357, %v3397
    %v3399 = vpop.f32.mrb[0].mxu0
    %v3400 = vpop.f32.mrb[0].mxu0
    %3401 = vdwg.mxu0
    %3402 = vmatprep.subr.bf16.mxu0 %v3173
    %3403 = vmatpush1.bf16.msra.mxu0 %v3172
    %3404 = vmatprep.subr.bf16.mxu0 %v3177
    %3405 = vmatpush1.bf16.msra.mxu0 %v3176
    %3406 = vmatprep.subr.bf16.mxu0 %v3181
    %3407 = vmatpush1.bf16.msra.mxu0 %v3180
    %3408 = vmatprep.subr.bf16.mxu0 %v3185
    %3409 = vmatpush1.bf16.msra.mxu0 %v3184
    %3410 = vmatprep.subr.bf16.mxu0 %v3189
    %3411 = vmatpush1.bf16.msra.mxu0 %v3188
    %3412 = vmatprep.subr.bf16.mxu0 %v3193
    %3413 = vmatpush1.bf16.msra.mxu0 %v3192
    %3414 = vmatprep.subr.bf16.mxu0 %v3197
    %3415 = vmatpush1.bf16.msra.mxu0 %v3196
    %3416 = vmatprep.subr.bf16.mxu0 %v3201
    %3417 = vmatpush1.bf16.msra.mxu0 %v3200
    %3418 = vmatprep.subr.bf16.mxu0 %v3205
    %3419 = vmatpush1.bf16.msra.mxu0 %v3204
    %3420 = vmatprep.subr.bf16.mxu0 %v3209
    %3421 = vmatpush1.bf16.msra.mxu0 %v3208
    %3422 = vmatprep.subr.bf16.mxu0 %v3213
    %3423 = vmatpush1.bf16.msra.mxu0 %v3212
    %3424 = vmatprep.subr.bf16.mxu0 %v3217
    %3425 = vmatpush1.bf16.msra.mxu0 %v3216
    %3426 = vmatprep.subr.bf16.mxu0 %v3221
    %3427 = vmatpush1.bf16.msra.mxu0 %v3220
    %3428 = vmatprep.subr.bf16.mxu0 %v3225
    %3429 = vmatpush1.bf16.msra.mxu0 %v3224
    %3430 = vmatprep.subr.bf16.mxu0 %v3229
    %3431 = vmatpush1.bf16.msra.mxu0 %v3228
    %3432 = vmatprep.subr.bf16.mxu0 %v3233
    %3433 = vmatpush1.bf16.msra.mxu0 %v3232
    %3434 = vmatprep.mubr.bf16.mxu0 %v3163
    %3435 = vmatmul.mubr.bf16.gmra.mrb[0].mxu0 %v3162
    %v3436 = vpop.f32.mrb[0].mxu0
    %v3437 = vadd.f32 %v3311, %v3436
    %v3438 = vpop.f32.mrb[0].mxu0
    %v3439 = vadd.f32 %v3315, %v3438
    %v3440 = vpop.f32.mrb[0].mxu0
    %v3441 = vpop.f32.mrb[0].mxu0
    %3442 = vdwg.mxu0
    %3443 = vmatprep.subr.bf16.mxu0 %v3237
    %3444 = vmatpush1.bf16.msra.mxu0 %v3236
    %3445 = vmatprep.subr.bf16.mxu0 %v3241
    %3446 = vmatpush1.bf16.msra.mxu0 %v3240
    %3447 = vmatprep.subr.bf16.mxu0 %v3245
    %3448 = vmatpush1.bf16.msra.mxu0 %v3244
    %3449 = vmatprep.subr.bf16.mxu0 %v3249
    %3450 = vmatpush1.bf16.msra.mxu0 %v3248
    %3451 = vmatprep.subr.bf16.mxu0 %v3253
    %3452 = vmatpush1.bf16.msra.mxu0 %v3252
    %3453 = vmatprep.subr.bf16.mxu0 %v3257
    %3454 = vmatpush1.bf16.msra.mxu0 %v3256
    %3455 = vmatprep.subr.bf16.mxu0 %v3261
    %3456 = vmatpush1.bf16.msra.mxu0 %v3260
    %3457 = vmatprep.subr.bf16.mxu0 %v3265
    %3458 = vmatpush1.bf16.msra.mxu0 %v3264
    %3459 = vmatprep.subr.bf16.mxu0 %v3269
    %3460 = vmatpush1.bf16.msra.mxu0 %v3268
    %3461 = vmatprep.subr.bf16.mxu0 %v3273
    %3462 = vmatpush1.bf16.msra.mxu0 %v3272
    %3463 = vmatprep.subr.bf16.mxu0 %v3277
    %3464 = vmatpush1.bf16.msra.mxu0 %v3276
    %3465 = vmatprep.subr.bf16.mxu0 %v3281
    %3466 = vmatpush1.bf16.msra.mxu0 %v3280
    %3467 = vmatprep.subr.bf16.mxu0 %v3285
    %3468 = vmatpush1.bf16.msra.mxu0 %v3284
    %3469 = vmatprep.subr.bf16.mxu0 %v3289
    %3470 = vmatpush1.bf16.msra.mxu0 %v3288
    %3471 = vmatprep.subr.bf16.mxu0 %v3293
    %3472 = vmatpush1.bf16.msra.mxu0 %v3292
    %3473 = vmatprep.subr.bf16.mxu0 %v3297
    %3474 = vmatpush1.bf16.msra.mxu0 %v3296
    %3475 = vmatprep.mubr.bf16.mxu0 %v3165
    %3476 = vmatmul.mubr.bf16.gmra.mrb[0].mxu0 %v3164
    %v3477 = vpop.f32.mrb[0].mxu0
    %v3478 = vadd.f32 %v3437, %v3477
    %v3479 = vpop.f32.mrb[0].mxu0
    %v3480 = vadd.f32 %v3439, %v3479
    %v3481 = vpop.f32.mrb[0].mxu0
    %v3482 = vpop.f32.mrb[0].mxu0
    %3483 = vdwg.mxu0
    %v3484 = vld [vmem:[%s268] sm:$0xff]
    %v3485 = vld [vmem:[%s268 + $0x8] sm:$0xff]
    %v3486 = vld [vmem:[%s268 + $0x10] sm:$0xff]
    %v3487 = vld [vmem:[%s268 + $0x18] sm:$0xff]
    %v3488 = vld [vmem:[%s268 + $0x20] sm:$0xff]
    %v3489 = vld [vmem:[%s268 + $0x28] sm:$0xff]
    %v3490 = vld [vmem:[%s268 + $0x30] sm:$0xff]
    %v3491 = vld [vmem:[%s268 + $0x38] sm:$0xff]
    %v3492 = vld [vmem:[%s268 + $0x40] sm:$0xff]
    %v3493 = vld [vmem:[%s268 + $0x48] sm:$0xff]
    %v3494 = vld [vmem:[%s268 + $0x50] sm:$0xff]
    %v3495 = vld [vmem:[%s268 + $0x58] sm:$0xff]
    %v3496 = vld [vmem:[%s268 + $0x60] sm:$0xff]
    %v3497 = vld [vmem:[%s268 + $0x68] sm:$0xff]
    %v3498 = vld [vmem:[%s268 + $0x70] sm:$0xff]
    %v3499 = vld [vmem:[%s268 + $0x78] sm:$0xff]
    %v3500 = vld [vmem:[%s268 + $0x80] sm:$0xff]
    %v3501 = vld [vmem:[%s268 + $0x88] sm:$0xff]
    %v3502 = vld [vmem:[%s268 + $0x90] sm:$0xff]
    %v3503 = vld [vmem:[%s268 + $0x98] sm:$0xff]
    %v3504 = vld [vmem:[%s268 + $0xa0] sm:$0xff]
    %v3505 = vld [vmem:[%s268 + $0xa8] sm:$0xff]
    %v3506 = vld [vmem:[%s268 + $0xb0] sm:$0xff]
    %v3507 = vld [vmem:[%s268 + $0xb8] sm:$0xff]
    %v3508 = vld [vmem:[%s268 + $0xc0] sm:$0xff]
    %v3509 = vld [vmem:[%s268 + $0xc8] sm:$0xff]
    %v3510 = vld [vmem:[%s268 + $0xd0] sm:$0xff]
    %v3511 = vld [vmem:[%s268 + $0xd8] sm:$0xff]
    %v3512 = vld [vmem:[%s268 + $0xe0] sm:$0xff]
    %v3513 = vld [vmem:[%s268 + $0xe8] sm:$0xff]
    %v3514 = vld [vmem:[%s268 + $0xf0] sm:$0xff]
    %v3515 = vld [vmem:[%s268 + $0xf8] sm:$0xff]
    %v3516 = vld [vmem:[%s268 + $0x100] sm:$0xff]
    %v3517 = vld [vmem:[%s268 + $0x108] sm:$0xff]
    %v3518 = vld [vmem:[%s268 + $0x110] sm:$0xff]
    %v3519 = vld [vmem:[%s268 + $0x118] sm:$0xff]
    %v3520 = vld [vmem:[%s268 + $0x120] sm:$0xff]
    %v3521 = vld [vmem:[%s268 + $0x128] sm:$0xff]
    %v3522 = vld [vmem:[%s268 + $0x130] sm:$0xff]
    %v3523 = vld [vmem:[%s268 + $0x138] sm:$0xff]
    %v3524 = vld [vmem:[%s268 + $0x140] sm:$0xff]
    %v3525 = vld [vmem:[%s268 + $0x148] sm:$0xff]
    %v3526 = vld [vmem:[%s268 + $0x150] sm:$0xff]
    %v3527 = vld [vmem:[%s268 + $0x158] sm:$0xff]
    %v3528 = vld [vmem:[%s268 + $0x160] sm:$0xff]
    %v3529 = vld [vmem:[%s268 + $0x168] sm:$0xff]
    %v3530 = vld [vmem:[%s268 + $0x170] sm:$0xff]
    %v3531 = vld [vmem:[%s268 + $0x178] sm:$0xff]
    %v3532 = vld [vmem:[%s268 + $0x180] sm:$0xff]
    %v3533 = vld [vmem:[%s268 + $0x188] sm:$0xff]
    %v3534 = vld [vmem:[%s268 + $0x190] sm:$0xff]
    %v3535 = vld [vmem:[%s268 + $0x198] sm:$0xff]
    %v3536 = vld [vmem:[%s268 + $0x1a0] sm:$0xff]
    %v3537 = vld [vmem:[%s268 + $0x1a8] sm:$0xff]
    %v3538 = vld [vmem:[%s268 + $0x1b0] sm:$0xff]
    %v3539 = vld [vmem:[%s268 + $0x1b8] sm:$0xff]
    %v3540 = vld [vmem:[%s268 + $0x1c0] sm:$0xff]
    %v3541 = vld [vmem:[%s268 + $0x1c8] sm:$0xff]
    %v3542 = vld [vmem:[%s268 + $0x1d0] sm:$0xff]
    %v3543 = vld [vmem:[%s268 + $0x1d8] sm:$0xff]
    %v3544 = vld [vmem:[%s268 + $0x1e0] sm:$0xff]
    %v3545 = vld [vmem:[%s268 + $0x1e8] sm:$0xff]
    %v3546 = vld [vmem:[%s268 + $0x1f0] sm:$0xff]
    %v3547 = vld [vmem:[%s268 + $0x1f8] sm:$0xff]
    %v3548 = vld [vmem:[%s268 + $0x200] sm:$0xff]
    %v3549 = vld [vmem:[%s268 + $0x208] sm:$0xff]
    %v3550 = vld [vmem:[%s268 + $0x210] sm:$0xff]
    %v3551 = vld [vmem:[%s268 + $0x218] sm:$0xff]
    %v3552 = vld [vmem:[%s268 + $0x220] sm:$0xff]
    %v3553 = vld [vmem:[%s268 + $0x228] sm:$0xff]
    %v3554 = vld [vmem:[%s268 + $0x230] sm:$0xff]
    %v3555 = vld [vmem:[%s268 + $0x238] sm:$0xff]
    %v3556 = vld [vmem:[%s268 + $0x240] sm:$0xff]
    %v3557 = vld [vmem:[%s268 + $0x248] sm:$0xff]
    %v3558 = vld [vmem:[%s268 + $0x250] sm:$0xff]
    %v3559 = vld [vmem:[%s268 + $0x258] sm:$0xff]
    %v3560 = vld [vmem:[%s268 + $0x260] sm:$0xff]
    %v3561 = vld [vmem:[%s268 + $0x268] sm:$0xff]
    %v3562 = vld [vmem:[%s268 + $0x270] sm:$0xff]
    %v3563 = vld [vmem:[%s268 + $0x278] sm:$0xff]
    %v3564 = vld [vmem:[%s268 + $0x280] sm:$0xff]
    %v3565 = vld [vmem:[%s268 + $0x288] sm:$0xff]
    %v3566 = vld [vmem:[%s268 + $0x290] sm:$0xff]
    %v3567 = vld [vmem:[%s268 + $0x298] sm:$0xff]
    %v3568 = vld [vmem:[%s268 + $0x2a0] sm:$0xff]
    %v3569 = vld [vmem:[%s268 + $0x2a8] sm:$0xff]
    %v3570 = vld [vmem:[%s268 + $0x2b0] sm:$0xff]
    %v3571 = vld [vmem:[%s268 + $0x2b8] sm:$0xff]
    %v3572 = vld [vmem:[%s268 + $0x2c0] sm:$0xff]
    %v3573 = vld [vmem:[%s268 + $0x2c8] sm:$0xff]
    %v3574 = vld [vmem:[%s268 + $0x2d0] sm:$0xff]
    %v3575 = vld [vmem:[%s268 + $0x2d8] sm:$0xff]
    %v3576 = vld [vmem:[%s268 + $0x2e0] sm:$0xff]
    %v3577 = vld [vmem:[%s268 + $0x2e8] sm:$0xff]
    %v3578 = vld [vmem:[%s268 + $0x2f0] sm:$0xff]
    %v3579 = vld [vmem:[%s268 + $0x2f8] sm:$0xff]
    %v3580 = vld [vmem:[%s268 + $0x300] sm:$0xff]
    %v3581 = vld [vmem:[%s268 + $0x308] sm:$0xff]
    %v3582 = vld [vmem:[%s268 + $0x310] sm:$0xff]
    %v3583 = vld [vmem:[%s268 + $0x318] sm:$0xff]
    %v3584 = vld [vmem:[%s268 + $0x320] sm:$0xff]
    %v3585 = vld [vmem:[%s268 + $0x328] sm:$0xff]
    %v3586 = vld [vmem:[%s268 + $0x330] sm:$0xff]
    %v3587 = vld [vmem:[%s268 + $0x338] sm:$0xff]
    %v3588 = vld [vmem:[%s268 + $0x340] sm:$0xff]
    %v3589 = vld [vmem:[%s268 + $0x348] sm:$0xff]
    %v3590 = vld [vmem:[%s268 + $0x350] sm:$0xff]
    %v3591 = vld [vmem:[%s268 + $0x358] sm:$0xff]
    %v3592 = vld [vmem:[%s268 + $0x360] sm:$0xff]
    %v3593 = vld [vmem:[%s268 + $0x368] sm:$0xff]
    %v3594 = vld [vmem:[%s268 + $0x370] sm:$0xff]
    %v3595 = vld [vmem:[%s268 + $0x378] sm:$0xff]
    %v3596 = vld [vmem:[%s268 + $0x380] sm:$0xff]
    %v3597 = vld [vmem:[%s268 + $0x388] sm:$0xff]
    %v3598 = vld [vmem:[%s268 + $0x390] sm:$0xff]
    %v3599 = vld [vmem:[%s268 + $0x398] sm:$0xff]
    %v3600 = vld [vmem:[%s268 + $0x3a0] sm:$0xff]
    %v3601 = vld [vmem:[%s268 + $0x3a8] sm:$0xff]
    %v3602 = vld [vmem:[%s268 + $0x3b0] sm:$0xff]
    %v3603 = vld [vmem:[%s268 + $0x3b8] sm:$0xff]
    %v3604 = vld [vmem:[%s268 + $0x3c0] sm:$0xff]
    %v3605 = vld [vmem:[%s268 + $0x3c8] sm:$0xff]
    %v3606 = vld [vmem:[%s268 + $0x3d0] sm:$0xff]
    %v3607 = vld [vmem:[%s268 + $0x3d8] sm:$0xff]
    %v3608 = vld [vmem:[%s268 + $0x3e0] sm:$0xff]
    %v3609 = vld [vmem:[%s268 + $0x3e8] sm:$0xff]
    %v3610 = vld [vmem:[%s268 + $0x3f0] sm:$0xff]
    %v3611 = vld [vmem:[%s268 + $0x3f8] sm:$0xff]
    %v3612 = vld [vmem:[%s51] sm:$0xf]
    %v3614 = vlaneseq
    %v3615 = vshrl.u32 %v3614, 7
    %v3616 = vsub.s32 0, %v3615
    %v3617 = vrot.slane %v3612, %v3616
    %v3618 = vlaneseq
    %v3619 = vshrl.u32 %v3618, 7
    %v3620 = vsub.s32 1, %v3619
    %v3621 = vrot.slane %v3612, %v3620
    %v3622 = vlaneseq
    %v3623 = vshrl.u32 %v3622, 7
    %v3624 = vsub.s32 2, %v3623
    %v3625 = vrot.slane %v3612, %v3624
    %v3626 = vlaneseq
    %v3627 = vshrl.u32 %v3626, 7
    %v3628 = vsub.s32 3, %v3627
    %v3629 = vrot.slane %v3612, %v3628
    %3634 = vmatprep.subr.bf16.mxu0 %v3485
    %3635 = vmatpush1.bf16.msra.mxu0 %v3484
    %3636 = vmatprep.subr.bf16.mxu0 %v3489
    %3637 = vmatpush1.bf16.msra.mxu0 %v3488
    %3638 = vmatprep.subr.bf16.mxu0 %v3493
    %3639 = vmatpush1.bf16.msra.mxu0 %v3492
    %3640 = vmatprep.subr.bf16.mxu0 %v3497
    %3641 = vmatpush1.bf16.msra.mxu0 %v3496
    %3642 = vmatprep.subr.bf16.mxu0 %v3501
    %3643 = vmatpush1.bf16.msra.mxu0 %v3500
    %3644 = vmatprep.subr.bf16.mxu0 %v3505
    %3645 = vmatpush1.bf16.msra.mxu0 %v3504
    %3646 = vmatprep.subr.bf16.mxu0 %v3509
    %3647 = vmatpush1.bf16.msra.mxu0 %v3508
    %3648 = vmatprep.subr.bf16.mxu0 %v3513
    %3649 = vmatpush1.bf16.msra.mxu0 %v3512
    %3650 = vmatprep.subr.bf16.mxu0 %v3517
    %3651 = vmatpush1.bf16.msra.mxu0 %v3516
    %3652 = vmatprep.subr.bf16.mxu0 %v3521
    %3653 = vmatpush1.bf16.msra.mxu0 %v3520
    %3654 = vmatprep.subr.bf16.mxu0 %v3525
    %3655 = vmatpush1.bf16.msra.mxu0 %v3524
    %3656 = vmatprep.subr.bf16.mxu0 %v3529
    %3657 = vmatpush1.bf16.msra.mxu0 %v3528
    %3658 = vmatprep.subr.bf16.mxu0 %v3533
    %3659 = vmatpush1.bf16.msra.mxu0 %v3532
    %3660 = vmatprep.subr.bf16.mxu0 %v3537
    %3661 = vmatpush1.bf16.msra.mxu0 %v3536
    %3662 = vmatprep.subr.bf16.mxu0 %v3541
    %3663 = vmatpush1.bf16.msra.mxu0 %v3540
    %3664 = vmatprep.subr.bf16.mxu0 %v3545
    %3665 = vmatpush1.bf16.msra.mxu0 %v3544
    %3666 = vmatprep.mubr.bf16.mxu0 %v3163
    %3667 = vmatmul.mubr.bf16.gmra.mrb[0].mxu0 %v3162
    %v3668 = vpop.f32.mrb[0].mxu0
    %v3669 = vadd.f32 %v3617, %v3668
    %v3670 = vpop.f32.mrb[0].mxu0
    %v3671 = vadd.f32 %v3621, %v3670
    %v3672 = vpop.f32.mrb[0].mxu0
    %v3673 = vpop.f32.mrb[0].mxu0
    %3674 = vdwg.mxu0
    %3675 = vmatprep.subr.bf16.mxu0 %v3549
    %3676 = vmatpush1.bf16.msra.mxu0 %v3548
    %3677 = vmatprep.subr.bf16.mxu0 %v3553
    %3678 = vmatpush1.bf16.msra.mxu0 %v3552
    %3679 = vmatprep.subr.bf16.mxu0 %v3557
    %3680 = vmatpush1.bf16.msra.mxu0 %v3556
    %3681 = vmatprep.subr.bf16.mxu0 %v3561
    %3682 = vmatpush1.bf16.msra.mxu0 %v3560
    %3683 = vmatprep.subr.bf16.mxu0 %v3565
    %3684 = vmatpush1.bf16.msra.mxu0 %v3564
    %3685 = vmatprep.subr.bf16.mxu0 %v3569
    %3686 = vmatpush1.bf16.msra.mxu0 %v3568
    %3687 = vmatprep.subr.bf16.mxu0 %v3573
    %3688 = vmatpush1.bf16.msra.mxu0 %v3572
    %3689 = vmatprep.subr.bf16.mxu0 %v3577
    %3690 = vmatpush1.bf16.msra.mxu0 %v3576
    %3691 = vmatprep.subr.bf16.mxu0 %v3581
    %3692 = vmatpush1.bf16.msra.mxu0 %v3580
    %3693 = vmatprep.subr.bf16.mxu0 %v3585
    %3694 = vmatpush1.bf16.msra.mxu0 %v3584
    %3695 = vmatprep.subr.bf16.mxu0 %v3589
    %3696 = vmatpush1.bf16.msra.mxu0 %v3588
    %3697 = vmatprep.subr.bf16.mxu0 %v3593
    %3698 = vmatpush1.bf16.msra.mxu0 %v3592
    %3699 = vmatprep.subr.bf16.mxu0 %v3597
    %3700 = vmatpush1.bf16.msra.mxu0 %v3596
    %3701 = vmatprep.subr.bf16.mxu0 %v3601
    %3702 = vmatpush1.bf16.msra.mxu0 %v3600
    %3703 = vmatprep.subr.bf16.mxu0 %v3605
    %3704 = vmatpush1.bf16.msra.mxu0 %v3604
    %3705 = vmatprep.subr.bf16.mxu0 %v3609
    %3706 = vmatpush1.bf16.msra.mxu0 %v3608
    %3707 = vmatprep.mubr.bf16.mxu0 %v3165
    %3708 = vmatmul.mubr.bf16.gmra.mrb[0].mxu0 %v3164
    %v3709 = vpop.f32.mrb[0].mxu0
    %v3710 = vadd.f32 %v3669, %v3709
    %v3711 = vpop.f32.mrb[0].mxu0
    %v3712 = vadd.f32 %v3671, %v3711
    %v3713 = vpop.f32.mrb[0].mxu0
    %v3714 = vpop.f32.mrb[0].mxu0
    %3715 = vdwg.mxu0
    %3716 = vmatprep.subr.bf16.mxu0 %v3487
    %3717 = vmatpush1.bf16.msra.mxu0 %v3486
    %3718 = vmatprep.subr.bf16.mxu0 %v3491
    %3719 = vmatpush1.bf16.msra.mxu0 %v3490
    %3720 = vmatprep.subr.bf16.mxu0 %v3495
    %3721 = vmatpush1.bf16.msra.mxu0 %v3494
    %3722 = vmatprep.subr.bf16.mxu0 %v3499
    %3723 = vmatpush1.bf16.msra.mxu0 %v3498
    %3724 = vmatprep.subr.bf16.mxu0 %v3503
    %3725 = vmatpush1.bf16.msra.mxu0 %v3502
    %3726 = vmatprep.subr.bf16.mxu0 %v3507
    %3727 = vmatpush1.bf16.msra.mxu0 %v3506
    %3728 = vmatprep.subr.bf16.mxu0 %v3511
    %3729 = vmatpush1.bf16.msra.mxu0 %v3510
    %3730 = vmatprep.subr.bf16.mxu0 %v3515
    %3731 = vmatpush1.bf16.msra.mxu0 %v3514
    %3732 = vmatprep.subr.bf16.mxu0 %v3519
    %3733 = vmatpush1.bf16.msra.mxu0 %v3518
    %3734 = vmatprep.subr.bf16.mxu0 %v3523
    %3735 = vmatpush1.bf16.msra.mxu0 %v3522
    %3736 = vmatprep.subr.bf16.mxu0 %v3527
    %3737 = vmatpush1.bf16.msra.mxu0 %v3526
    %3738 = vmatprep.subr.bf16.mxu0 %v3531
    %3739 = vmatpush1.bf16.msra.mxu0 %v3530
    %3740 = vmatprep.subr.bf16.mxu0 %v3535
    %3741 = vmatpush1.bf16.msra.mxu0 %v3534
    %3742 = vmatprep.subr.bf16.mxu0 %v3539
    %3743 = vmatpush1.bf16.msra.mxu0 %v3538
    %3744 = vmatprep.subr.bf16.mxu0 %v3543
    %3745 = vmatpush1.bf16.msra.mxu0 %v3542
    %3746 = vmatprep.subr.bf16.mxu0 %v3547
    %3747 = vmatpush1.bf16.msra.mxu0 %v3546
    %3748 = vmatprep.mubr.bf16.mxu0 %v3163
    %3749 = vmatmul.mubr.bf16.gmra.mrb[0].mxu0 %v3162
    %v3750 = vpop.f32.mrb[0].mxu0
    %v3751 = vadd.f32 %v3625, %v3750
    %v3752 = vpop.f32.mrb[0].mxu0
    %v3753 = vadd.f32 %v3629, %v3752
    %v3754 = vpop.f32.mrb[0].mxu0
    %v3755 = vpop.f32.mrb[0].mxu0
    %3756 = vdwg.mxu0
    %3757 = vmatprep.subr.bf16.mxu0 %v3551
    %3758 = vmatpush1.bf16.msra.mxu0 %v3550
    %3759 = vmatprep.subr.bf16.mxu0 %v3555
    %3760 = vmatpush1.bf16.msra.mxu0 %v3554
    %3761 = vmatprep.subr.bf16.mxu0 %v3559
    %3762 = vmatpush1.bf16.msra.mxu0 %v3558
    %3763 = vmatprep.subr.bf16.mxu0 %v3563
    %3764 = vmatpush1.bf16.msra.mxu0 %v3562
    %3765 = vmatprep.subr.bf16.mxu0 %v3567
    %3766 = vmatpush1.bf16.msra.mxu0 %v3566
    %3767 = vmatprep.subr.bf16.mxu0 %v3571
    %3768 = vmatpush1.bf16.msra.mxu0 %v3570
    %3769 = vmatprep.subr.bf16.mxu0 %v3575
    %3770 = vmatpush1.bf16.msra.mxu0 %v3574
    %3771 = vmatprep.subr.bf16.mxu0 %v3579
    %3772 = vmatpush1.bf16.msra.mxu0 %v3578
    %3773 = vmatprep.subr.bf16.mxu0 %v3583
    %3774 = vmatpush1.bf16.msra.mxu0 %v3582
    %3775 = vmatprep.subr.bf16.mxu0 %v3587
    %3776 = vmatpush1.bf16.msra.mxu0 %v3586
    %3777 = vmatprep.subr.bf16.mxu0 %v3591
    %3778 = vmatpush1.bf16.msra.mxu0 %v3590
    %3779 = vmatprep.subr.bf16.mxu0 %v3595
    %3780 = vmatpush1.bf16.msra.mxu0 %v3594
    %3781 = vmatprep.subr.bf16.mxu0 %v3599
    %3782 = vmatpush1.bf16.msra.mxu0 %v3598
    %3783 = vmatprep.subr.bf16.mxu0 %v3603
    %3784 = vmatpush1.bf16.msra.mxu0 %v3602
    %3785 = vmatprep.subr.bf16.mxu0 %v3607
    %3786 = vmatpush1.bf16.msra.mxu0 %v3606
    %3787 = vmatprep.subr.bf16.mxu0 %v3611
    %3788 = vmatpush1.bf16.msra.mxu0 %v3610
    %3789 = vmatprep.mubr.bf16.mxu0 %v3165
    %3790 = vmatmul.mubr.bf16.gmra.mrb[0].mxu0 %v3164
    %v3791 = vpop.f32.mrb[0].mxu0
    %v3792 = vadd.f32 %v3751, %v3791
    %v3793 = vpop.f32.mrb[0].mxu0
    %v3794 = vadd.f32 %v3753, %v3793
    %v3795 = vpop.f32.mrb[0].mxu0
    %v3796 = vpop.f32.mrb[0].mxu0
    %3797 = vdwg.mxu0
    %v3798 = vmul.f32 %v3710, 1.442695
    %v3799 = vpow.pop %v3798
    %v3800 = vmul.f32 %v3712, 1.442695
    %v3801 = vpow.pop %v3800
    %v3802 = vmul.f32 %v3792, 1.442695
    %v3803 = vpow.pop %v3802
    %v3804 = vmul.f32 %v3794, 1.442695
    %v3805 = vpow.pop %v3804
    %v3806 = vld [vmem:[%s5] sm:$0xff]
    %v3808 = vcombine.high %v3806, %v3806
    %v3810 = vunpack.c.l.s4 1983009808
    %v3811 = vunpack.c.0.s8 %v3810
    %v3812 = vlaneseq
    %v3813 = vshrl.u32 %v3812, 7
    %v3814 = vsub.s32 %v3811, %v3813
    %v3815 = vrot.slane %v3806, %v3814
    %v3817 = vunpack.c.l.s4 1983009808
    %v3818 = vunpack.c.0.s8 %v3817
    %v3819 = vlaneseq
    %v3820 = vshrl.u32 %v3819, 7
    %v3821 = vsub.s32 %v3818, %v3820
    %v3822 = vrot.slane %v3808, %v3821
    %v3823 = vcombine.high %v3815, %v3815
    %v3824 = vcombine.high %v3822, %v3822
    %v3829 = vmul.f32 %v3799, %v3815
    %v3830 = vmul.f32 %v3801, %v3823
    %v3831 = vmul.f32 %v3803, %v3822
    %v3832 = vmul.f32 %v3805, %v3824
    %v3833 = vadd.f32 %v3396, %v3829
    %v3834 = vadd.f32 %v3398, %v3830
    %v3835 = vadd.f32 %v3478, %v3831
    %v3836 = vadd.f32 %v3480, %v3832
    %v3841 = vcombine.low %v3833, %v3834
    %v3842 = vcombine.low %v3835, %v3836
    %v3844 = vunpack.c.l.s4 1983009808
    %v3845 = vunpack.c.0.s8 %v3844
    %v3846 = vlaneseq
    %v3847 = vshrl.u32 %v3846, 7
    %v3848 = vsub.s32 %v3845, %v3847
    %v3849 = vrot.slane %v3841, %v3848
    %v3851 = vunpack.c.l.s4 1983009808
    %v3852 = vunpack.c.0.s8 %v3851
    %v3853 = vlaneseq
    %v3854 = vshrl.u32 %v3853, 7
    %v3855 = vsub.s32 %v3852, %v3854
    %v3856 = vrot.slane %v3842, %v3855
    %v3857 = vcombine.low %v3849, %v3856
    %3859 = vst [vmem:[#allocation4] sm:$0xff] %v3857
    %v3860 = vmul.f32 %v3806, %v3806
    %v3861 = vmul.f32 %v3860, -0.5
    %v3866 = vcombine.low %v3710, %v3712
    %v3867 = vcombine.low %v3792, %v3794
    %v3869 = vunpack.c.l.s4 1983009808
    %v3870 = vunpack.c.0.s8 %v3869
    %v3871 = vlaneseq
    %v3872 = vshrl.u32 %v3871, 7
    %v3873 = vsub.s32 %v3870, %v3872
    %v3874 = vrot.slane %v3866, %v3873
    %v3876 = vunpack.c.l.s4 1983009808
    %v3877 = vunpack.c.0.s8 %v3876
    %v3878 = vlaneseq
    %v3879 = vshrl.u32 %v3878, 7
    %v3880 = vsub.s32 %v3877, %v3879
    %v3881 = vrot.slane %v3867, %v3880
    %v3882 = vcombine.low %v3874, %v3881
    %v3884 = vsub.f32 %v3861, %v3882
    %v3885 = vsub.f32 %v3884, 0.9189385
    %v3887 = vcombine.high %v3885, %v3885
    %v3889 = vunpack.c.l.s4 1983009808
    %v3890 = vunpack.c.0.s8 %v3889
    %v3891 = vlaneseq
    %v3892 = vshrl.u32 %v3891, 7
    %v3893 = vsub.s32 %v3890, %v3892
    %v3894 = vrot.slane %v3885, %v3893
    %v3896 = vunpack.c.l.s4 1983009808
    %v3897 = vunpack.c.0.s8 %v3896
    %v3898 = vlaneseq
    %v3899 = vshrl.u32 %v3898, 7
    %v3900 = vsub.s32 %v3897, %v3899
    %v3901 = vrot.slane %v3887, %v3900
    %v3902 = vcombine.high %v3894, %v3894
    %v3903 = vcombine.high %v3901, %v3901
    %v3908 = vsel %vm2700, %v3894, 0.0
    %v3909 = vsel %vm2700, %v3902, 0.0
    %v3910 = vadd.f32 %v3908, %v3909
    %v3911 = vsel %vm2700, %v3901, 0.0
    %v3912 = vadd.f32 %v3910, %v3911
    %v3913 = vsel %vm2700, %v3903, 0.0
    %v3914 = vadd.f32 %v3912, %v3913
    %3915 = vadd.xlane.f32.xlu0 %v3914
    %v3916 = vpop.xlane.xlu0 %3915
    %vm3917 = vcmask 1024
    %3918 = vst.msk [vmem:[%s65] sm:$0x3] %vm3917, %v3916
    // Predicated region
    $region106: #{qz_forward.1} parent=1 // pred_check
      _
    $region107: #{qz_forward.1} parent=1 // pred_check_branch
      %3920 = sbr.rel (0) target = $region109
    $region108: #{qz_forward.1} parent=1 // pred_region
      %s3922 = ssub.s32 128, 128
      %3923 = vsyncadd [#allocation5], %s3922
      %s3925 = sshll.u32 [#allocation4], 4
      %s3926 = int_to_ptr.vmem [resolvable:$true] %s3925
      %3928 = dma.vmem_to_hbm [thread:$0]  %s3926, 128, %s63, [#allocation5]
    $region109: #{qz_forward.1} parent=1 // pred_fallthru
      _
    // Predicated region
    $region110: #{qz_forward.1} parent=1 // pred_check
      _
    $region111: #{qz_forward.1} parent=1 // pred_check_branch
      %3930 = sbr.rel (0) target = $region113
    $region112: #{qz_forward.1} parent=1 // pred_region
      _
    $region113: #{qz_forward.1} parent=1 // pred_fallthru
      _
    // Predicated region
    $region114: #{qz_forward.1} parent=1 // pred_check
      _
    $region115: #{qz_forward.1} parent=1 // pred_check_branch
      %3932 = sbr.rel (0) target = $region117
    $region116: #{qz_forward.1} parent=1 // pred_region
      %3933 = dma.done [#allocation5], 128
    $region117: #{qz_forward.1} parent=1 // pred_fallthru
      _
    // Predicated region
    $region118: #{qz_forward.1} parent=1 // pred_check
      _
    $region119: #{qz_forward.1} parent=1 // pred_check_branch
      %3935 = sbr.rel (0) target = $region121
    $region120: #{qz_forward.1} parent=1 // pred_region
      _
    $region121: #{qz_forward.1} parent=1 // pred_fallthru
      _
    %3936 = vsyncpa [#allocation5], 1
  %3937 = vsyncmov [#allocation3]
  %s3938 = vpop.sfrf %3937
  %p3939 = scmp.eq.s32.totalorder %s3938, 0
  %p3940 = pneg %p3939
  %3942 = shalt.err (%p3940)
  %s3943 = scalar_lea.sflag [#allocation3], 1
  %3944 = vsyncmov %s3943
  %s3945 = vpop.sfrf %3944
  %p3946 = scmp.eq.s32.totalorder %s3945, 0
  %p3947 = pneg %p3946
  %3949 = shalt.err (%p3947)
  %s3950 = scalar_lea.sflag [#allocation3], 2
  %3951 = vsyncmov %s3950
  %s3952 = vpop.sfrf %3951
  %p3953 = scmp.eq.s32.totalorder %s3952, 0
  %p3954 = pneg %p3953
  %3956 = shalt.err (%p3954)
  %s3957 = scalar_lea.sflag [#allocation3], 3
  %3958 = vsyncmov %s3957
  %s3959 = vpop.sfrf %3958
  %p3960 = scmp.eq.s32.totalorder %s3959, 0
  %p3961 = pneg %p3960
  %3963 = shalt.err (%p3961)
  %s3964 = scalar_lea.sflag [#allocation3], 4
  %3965 = vsyncmov %s3964
  %s3966 = vpop.sfrf %3965
  %p3967 = scmp.eq.s32.totalorder %s3966, 0
  %p3968 = pneg %p3967
  %3970 = shalt.err (%p3968)

</llo_original>
